<compile_context>
chip_gen: v6e
topology: v6e:2x2x1
jax: 0.10.0
libtpu: 0.0.40
codegen_flags: <defaults>
</compile_context>

<pallas_src>
import math
from functools import partial

import jax
import jax.numpy as jnp
from jax import lax
from jax.experimental import pallas as pl
from jax.experimental.pallas import tpu as pltpu


# ----------------------------------------------------------------------------
# helpers
# ----------------------------------------------------------------------------
def _gelu_exact(x):
    # matches torch.nn.functional.gelu default (erf-based, exact)
    return 0.5 * x * (1.0 + lax.erf(x * (1.0 / math.sqrt(2.0))))


def _choose_tile(n, target=8192):
    """Lane-dense column tile (multiple of 128) and padded N (pad once at entry)."""
    n128 = 128 * ((n + 127) // 128)
    if n128 <= target:
        return n128, n128                      # single tile covering everything
    n_pad = target * ((n + target - 1) // target)
    return target, n_pad


# ----------------------------------------------------------------------------
# Pointwise Pallas kernels (channels-first: activations (C, N), N lane-dense)
# ----------------------------------------------------------------------------
def _linear_cf_kernel(x_ref, w_ref, b_ref, o_ref, *, apply_gelu):
    # y = w @ x + b   (w: (Cout, Cin), x: (Cin, tile), b: (Cout, 1))
    y = jnp.dot(w_ref[...], x_ref[...], preferred_element_type=jnp.float32)
    y = y + b_ref[...]
    if apply_gelu:
        y = _gelu_exact(y)
    o_ref[...] = y.astype(o_ref.dtype)


def linear_cf(x, w_t, b_col, *, tile, apply_gelu=False):
    """x: (Cin, N) with N % tile == 0, w_t: (Cout, Cin), b_col: (Cout, 1)."""
    cout, cin = w_t.shape
    n = x.shape[1]
    assert n % tile == 0
    return pl.pallas_call(
        partial(_linear_cf_kernel, apply_gelu=apply_gelu),
        out_shape=jax.ShapeDtypeStruct((cout, n), jnp.float32),
        grid=(n // tile,),
        in_specs=[
            pl.BlockSpec((cin, tile), lambda i: (0, i)),
            pl.BlockSpec((cout, cin), lambda i: (0, 0)),   # resident weight
            pl.BlockSpec((cout, 1), lambda i: (0, 0)),     # resident bias
        ],
        out_specs=pl.BlockSpec((cout, tile), lambda i: (0, i)),
        compiler_params=pltpu.CompilerParams(dimension_semantics=("parallel",)),
    )(x, w_t, b_col)


def _merge_cf_kernel(s_ref, x_ref, w_ref, b_ref, o_ref):
    # gelu(spectral + 1x1 conv) == gelu(s + w @ x + b)
    y = jnp.dot(w_ref[...], x_ref[...], preferred_element_type=jnp.float32)
    y = y + b_ref[...] + s_ref[...]
    o_ref[...] = _gelu_exact(y).astype(o_ref.dtype)


def merge_cf(spec, x, w_t, b_col, *, tile):
    """gelu(spec + w_t @ x + b); spec: (Cout, N), x: (Cin, N), N % tile == 0."""
    cout, cin = w_t.shape
    n = x.shape[1]
    assert n % tile == 0
    return pl.pallas_call(
        _merge_cf_kernel,
        out_shape=jax.ShapeDtypeStruct((cout, n), jnp.float32),
        grid=(n // tile,),
        in_specs=[
            pl.BlockSpec((cout, tile), lambda i: (0, i)),
            pl.BlockSpec((cin, tile), lambda i: (0, i)),
            pl.BlockSpec((cout, cin), lambda i: (0, 0)),
            pl.BlockSpec((cout, 1), lambda i: (0, 0)),
        ],
        out_specs=pl.BlockSpec((cout, tile), lambda i: (0, i)),
        compiler_params=pltpu.CompilerParams(dimension_semantics=("parallel",)),
    )(spec, x, w_t, b_col)


def _head_kernel(x_ref, w1_ref, b1_ref, w2_ref, b2_ref, o_ref):
    # fused fc1 + gelu + fc2: the (128, tile) hidden never leaves VMEM.
    h = jnp.dot(w1_ref[...], x_ref[...], preferred_element_type=jnp.float32)
    h = _gelu_exact(h + b1_ref[...])
    y = jnp.dot(w2_ref[...], h, preferred_element_type=jnp.float32) + b2_ref[...]
    o_ref[...] = y.astype(o_ref.dtype)


def head_cf(x, w1_t, b1_col, w2_t, b2_col, *, tile):
    """(gelu(fc1(x)) -> fc2) fused; x: (width, N) -> (1, N), N % tile == 0."""
    h_dim, cin = w1_t.shape
    cout = w2_t.shape[0]
    n = x.shape[1]
    assert n % tile == 0
    return pl.pallas_call(
        _head_kernel,
        out_shape=jax.ShapeDtypeStruct((cout, n), jnp.float32),
        grid=(n // tile,),
        in_specs=[
            pl.BlockSpec((cin, tile), lambda i: (0, i)),
            pl.BlockSpec((h_dim, cin), lambda i: (0, 0)),
            pl.BlockSpec((h_dim, 1), lambda i: (0, 0)),
            pl.BlockSpec((cout, h_dim), lambda i: (0, 0)),
            pl.BlockSpec((cout, 1), lambda i: (0, 0)),
        ],
        out_specs=pl.BlockSpec((cout, tile), lambda i: (0, i)),
        compiler_params=pltpu.CompilerParams(dimension_semantics=("parallel",)),
    )(x, w1_t, b1_col, w2_t, b2_col)


# ----------------------------------------------------------------------------
# Spectral-corner complex contraction (all 4 corners merged on the mode axis)
# ----------------------------------------------------------------------------
def _cmul_kernel(ar_ref, ai_ref, wr_ref, ws_ref, wd_ref, or_ref, oi_ref):
    """out[b,o,p] = sum_i a[b,i,p] * w[i,o,p]  (complex, Gauss 3-multiply).

    ws = wr + wi, wd = wi - wr (precomputed host-side):
      real = wr*(ar+ai) - ai*ws ;  imag = wr*(ar+ai) + ar*wd
    Layout: second-to-last dim is Ci / Co (>=8 sublanes), last dim is the
    128-lane mode tile.  Accumulators are (Co, Pt) -> 2 vregs each.
    """
    nb, ci, _ = ar_ref.shape
    co = wr_ref.shape[1]
    pt = wr_ref.shape[2]
    for b in range(nb):                     # tiny static batch, outer
        ar = ar_ref[b]                      # (Ci, Pt)
        ai = ai_ref[b]
        acc_r = jnp.zeros((co, pt), jnp.float32)
        acc_i = jnp.zeros((co, pt), jnp.float32)
        for i in range(ci):                 # small static channel count, inner
            a_r = ar[i:i + 1]               # (1, Pt) -> sublane broadcast
            a_i = ai[i:i + 1]
            t1 = wr_ref[i] * (a_r + a_i)    # (Co, Pt)
            acc_r = acc_r + (t1 - a_i * ws_ref[i])
            acc_i = acc_i + (t1 + a_r * wd_ref[i])
        or_ref[b] = acc_r
        oi_ref[b] = acc_i


def compl_mul_corners(ar, ai, wr, ws, wd):
    """ar/ai: (B, Ci, Pp) f32; wr/ws/wd: (Ci, Co, Pp) f32 -> 2x (B, Co, Pp) f32.

    Pp is the lane-padded concatenation of the 4 corners' mode positions.
    Grid tiles Pp in 128-lane blocks ("parallel": megacore-shardable, and
    bounds per-step weight VMEM at large mode counts).
    """
    b, ci, pp = ar.shape
    co = wr.shape[1]
    p_tile = 128 if pp > 128 else pp
    a_spec = pl.BlockSpec((b, ci, p_tile), lambda p: (0, 0, p))
    w_spec = pl.BlockSpec((ci, co, p_tile), lambda p: (0, 0, p))
    o_spec = pl.BlockSpec((b, co, p_tile), lambda p: (0, 0, p))
    out_r, out_i = pl.pallas_call(
        _cmul_kernel,
        out_shape=(jax.ShapeDtypeStruct((b, co, pp), jnp.float32),
                   jax.ShapeDtypeStruct((b, co, pp), jnp.float32)),
        grid=(pp // p_tile,),
        in_specs=[a_spec, a_spec, w_spec, w_spec, w_spec],
        out_specs=(o_spec, o_spec),
        compiler_params=pltpu.CompilerParams(dimension_semantics=("parallel",)),
    )(ar, ai, wr, ws, wd)
    return out_r, out_i


# ----------------------------------------------------------------------------
# Spectral conv (FFT glue in plain JAX, fused mode contraction in Pallas)
# ----------------------------------------------------------------------------
def spectral_conv3d_cf(h_pad, w_prep, dims, modes, n_pad):
    """h_pad: (Ci, n_pad); returns (Co, n_pad) (zero-padded columns are garbage
    but are never read back by the spectral path and are sliced off at the end)."""
    b, x, y, t = dims
    m1, m2, m3 = modes
    wr, ws, wd = w_prep                       # (Ci, Co, Pp) each, preprocessed
    ci = h_pad.shape[0]
    co = wr.shape[1]
    tr = t // 2 + 1
    p = m1 * m2 * m3
    p4 = 4 * p
    pp = wr.shape[2]
    n = b * x * y * t

    h_flat = h_pad[:, :n] if n_pad != n else h_pad
    hg = h_flat.reshape(ci, b, x, y, t)
    # TODO(synk): FFT / inverse FFT have no Pallas TPU equivalent; kept in jnp.fft.
    x_ft = jnp.fft.rfftn(hg, axes=(2, 3, 4))                 # (Ci, B, X, Y, Tr)

    # concatenate the 4 retained corners along one mode-position axis
    corners = jnp.concatenate(
        [x_ft[:, :, :m1, :m2, :m3].reshape(ci, b, p),
         x_ft[:, :, x - m1:, :m2, :m3].reshape(ci, b, p),
         x_ft[:, :, :m1, y - m2:, :m3].reshape(ci, b, p),
         x_ft[:, :, x - m1:, y - m2:, :m3].reshape(ci, b, p)], axis=2)  # (Ci,B,4P)

    ar = jnp.transpose(jnp.real(corners), (1, 0, 2)).astype(jnp.float32)  # (B,Ci,4P)
    ai = jnp.transpose(jnp.imag(corners), (1, 0, 2)).astype(jnp.float32)
    if pp != p4:
        pad = ((0, 0), (0, 0), (0, pp - p4))
        ar = jnp.pad(ar, pad)
        ai = jnp.pad(ai, pad)

    out_r, out_i = compl_mul_corners(ar, ai, wr, ws, wd)      # (B, Co, Pp) x2
    oc = lax.complex(out_r[..., :p4], out_i[..., :p4])        # (B, Co, 4P)
    oc = jnp.transpose(oc, (1, 0, 2)).reshape(co, b, 4, m1, m2, m3)

    out_ft = jnp.zeros((co, b, x, y, tr), dtype=jnp.complex64)
    out_ft = out_ft.at[:, :, :m1, :m2, :m3].set(oc[:, :, 0])
    out_ft = out_ft.at[:, :, x - m1:, :m2, :m3].set(oc[:, :, 1])
    out_ft = out_ft.at[:, :, :m1, y - m2:, :m3].set(oc[:, :, 2])
    out_ft = out_ft.at[:, :, x - m1:, y - m2:, :m3].set(oc[:, :, 3])

    out = jnp.fft.irfftn(out_ft, s=(x, y, t), axes=(2, 3, 4))
    out = out.reshape(co, n).astype(jnp.float32)
    if n_pad != n:
        out = jnp.pad(out, ((0, 0), (0, n_pad - n)))
    return out


# ----------------------------------------------------------------------------
# One-time parameter preprocessing (hoisted out of the forward pass)
# ----------------------------------------------------------------------------
def _prep_spectral_weights(weights, m1, m2, m3):
    """4x complex (Ci,Co,m1,m2,m3) -> (wr, ws, wd): (Ci, Co, Pp) f32 each."""
    ci, co = weights[0].shape[:2]
    p = m1 * m2 * m3
    w = jnp.concatenate([wk.reshape(ci, co, p) for wk in weights], axis=2)  # (Ci,Co,4P)
    wr = jnp.real(w).astype(jnp.float32)
    wi = jnp.imag(w).astype(jnp.float32)
    p4 = 4 * p
    pp = 128 * ((p4 + 127) // 128)
    pad = ((0, 0), (0, 0), (0, pp - p4))
    return (jnp.pad(wr, pad), jnp.pad(wr + wi, pad), jnp.pad(wi - wr, pad))


def preprocess_params(params, *, modes):
    m1, m2, m3 = modes
    prep = {
        "fc0_w": params["fc0_w"].T, "fc0_b": params["fc0_b"].reshape(-1, 1),
        "fc1_w": params["fc1_w"].T, "fc1_b": params["fc1_b"].reshape(-1, 1),
        "fc2_w": params["fc2_w"].T, "fc2_b": params["fc2_b"].reshape(-1, 1),
    }
    for k in range(3):
        prep[f"conv{k}"] = _prep_spectral_weights(params[f"conv{k}_w"], m1, m2, m3)
        prep[f"w{k}_w"] = params[f"w{k}_w"].T
        prep[f"w{k}_b"] = params[f"w{k}_b"].reshape(-1, 1)
    return prep


# ----------------------------------------------------------------------------
# Full FNO3d forward (channels-first pipeline, pad N once at entry)
# ----------------------------------------------------------------------------
def fno3d_forward(x, prep, *, modes, target_tile=8192):
    m1, m2, m3 = modes
    b, xs, ys, ts, cin = x.shape
    n = b * xs * ys * ts
    tile, n_pad = _choose_tile(n, target_tile)

    # one layout transpose + one pad at entry; everything stays (C, n_pad)
    x_cf = jnp.moveaxis(x, 4, 0).reshape(cin, n)
    if n_pad != n:
        x_cf = jnp.pad(x_cf, ((0, 0), (0, n_pad - n)))

    h = linear_cf(x_cf, prep["fc0_w"], prep["fc0_b"], tile=tile)             # fc0

    for k in range(3):
        spec = spectral_conv3d_cf(h, prep[f"conv{k}"],
                                  (b, xs, ys, ts), (m1, m2, m3), n_pad)
        h = merge_cf(spec, h, prep[f"w{k}_w"], prep[f"w{k}_b"], tile=tile)   # gelu(K + W)

    out = head_cf(h, prep["fc1_w"], prep["fc1_b"],
                  prep["fc2_w"], prep["fc2_b"], tile=tile)                   # fc1+gelu+fc2
    if n_pad != n:
        out = out[:, :n]
    return out.reshape(b, xs, ys, ts, 1)


# ----------------------------------------------------------------------------
# Deterministic parameter init (shapes from the PyTorch module __init__)
# ----------------------------------------------------------------------------
def init_params(key, *, c_in, width, m1, m2, m3):
    ks = iter(jax.random.split(key, 40))

    def lin_init(cin, cout):
        w = jax.random.normal(next(ks), (cin, cout), jnp.float32) / math.sqrt(cin)
        bb = jax.random.normal(next(ks), (cout,), jnp.float32) * 0.01
        return w, bb

    def spec_init(ci, co):
        scale = 1.0 / (ci * co)
        ws = []
        for _ in range(4):
            wr = jax.random.uniform(next(ks), (ci, co, m1, m2, m3), jnp.float32)
            wi = jax.random.uniform(next(ks), (ci, co, m1, m2, m3), jnp.float32)
            ws.append((scale * lax.complex(wr, wi)).astype(jnp.complex64))
        return tuple(ws)

    params = {}
    params["fc0_w"], params["fc0_b"] = lin_init(c_in, width)
    for k in range(3):
        params[f"conv{k}_w"] = spec_init(width, width)
        params[f"w{k}_w"], params[f"w{k}_b"] = lin_init(width, width)
    params["fc1_w"], params["fc1_b"] = lin_init(width, 128)
    params["fc2_w"], params["fc2_b"] = lin_init(128, 1)
    return params


# ----------------------------------------------------------------------------
# Pure-JAX reference (mirrors the PyTorch forward exactly)
# ----------------------------------------------------------------------------
def ref_forward(x, params, modes):
    m1, m2, m3 = modes
    gelu = lambda v: jax.nn.gelu(v, approximate=False)

    def spec_conv(xg, ws):
        b, ci, xs, ys, ts = xg.shape
        co = ws[0].shape[1]
        x_ft = jnp.fft.rfftn(xg, axes=(-3, -2, -1))
        out_ft = jnp.zeros((b, co, xs, ys, ts // 2 + 1), jnp.complex64)
        cm = lambda a, w: jnp.einsum('bixyz,ioxyz->boxyz', a, w)
        out_ft = out_ft.at[:, :, :m1, :m2, :m3].set(cm(x_ft[:, :, :m1, :m2, :m3], ws[0]))
        out_ft = out_ft.at[:, :, xs - m1:, :m2, :m3].set(cm(x_ft[:, :, xs - m1:, :m2, :m3], ws[1]))
        out_ft = out_ft.at[:, :, :m1, ys - m2:, :m3].set(cm(x_ft[:, :, :m1, ys - m2:, :m3], ws[2]))
        out_ft = out_ft.at[:, :, xs - m1:, ys - m2:, :m3].set(cm(x_ft[:, :, xs - m1:, ys - m2:, :m3], ws[3]))
        return jnp.fft.irfftn(out_ft, s=(xs, ys, ts), axes=(-3, -2, -1))

    h = x @ params["fc0_w"] + params["fc0_b"]
    h = jnp.transpose(h, (0, 4, 1, 2, 3))
    for k in range(3):
        x1 = spec_conv(h, params[f"conv{k}_w"])
        hc = jnp.transpose(h, (0, 2, 3, 4, 1))
        x2 = hc @ params[f"w{k}_w"] + params[f"w{k}_b"]
        x2 = jnp.transpose(x2, (0, 4, 1, 2, 3))
        h = gelu(x1 + x2)
    h = jnp.transpose(h, (0, 2, 3, 4, 1))
    h = gelu(h @ params["fc1_w"] + params["fc1_b"])
    return h @ params["fc2_w"] + params["fc2_b"]


# ----------------------------------------------------------------------------
if __name__ == "__main__":
    # small shapes consistent with the module: input (B, x, y, t, T_in + 3)
    B, X, Y, T = 2, 8, 8, 6
    T_IN = 10
    C_IN = T_IN + 3          # 13
    WIDTH = 16               # matches configuration['Width']
    M1, M2, M3 = 4, 4, 3     # modes3 <= T//2 + 1

    key = jax.random.PRNGKey(0)
    kx, kp = jax.random.split(key)
    x = jax.random.uniform(kx, (B, X, Y, T, C_IN), jnp.float32)
    params = init_params(kp, c_in=C_IN, width=WIDTH, m1=M1, m2=M2, m3=M3)

    # one-time weight preprocessing (transposes, Gauss combos, corner concat + pad)
    prep = jax.block_until_ready(preprocess_params(params, modes=(M1, M2, M3)))

    fwd = jax.jit(partial(fno3d_forward, modes=(M1, M2, M3)))
    out = jax.block_until_ready(fwd(x, prep))

    assert out.shape == (B, X, Y, T, 1)
    assert bool(jnp.all(jnp.isfinite(out)))

    ref = ref_forward(x, params, (M1, M2, M3))
    max_err = float(jnp.max(jnp.abs(out - ref)))
    assert max_err < 5e-2, f"mismatch vs reference: max abs err = {max_err}"

    print("KERNEL_OK")
</pallas_src>

<mosaic_0001>
module attributes {stable_mosaic.version = 11 : i64} {
  func.func @_linear_cf_kernel(%arg0: i32, %arg1: memref<13x768xf32, #tpu.memory_space<vmem>>, %arg2: memref<16x13xf32, #tpu.memory_space<vmem>>, %arg3: memref<16x1xf32, #tpu.memory_space<vmem>>, %arg4: memref<16x768xf32, #tpu.memory_space<vmem>>) attributes {dimension_semantics = [#tpu.dimension_semantics<parallel>], iteration_bounds = array<i64: 1>, scalar_prefetch = 0 : i64, scratch_operands = 0 : i64, tpu.core_type = #tpu.core_type<tc>, window_params = [{transform_indices = @transform_0, window_bounds = array<i64: 13, 768>}, {pipeline_mode = #tpu.pipeline_mode<synchronous>, transform_indices = @transform_1, window_bounds = array<i64: 16, 13>}, {pipeline_mode = #tpu.pipeline_mode<synchronous>, transform_indices = @transform_2, window_bounds = array<i64: 16, 1>}, {transform_indices = @transform_3, window_bounds = array<i64: 16, 768>}]} {
    %c0 = arith.constant 0 : index
    %c0_0 = arith.constant 0 : index
    %0 = vector.load %arg2[%c0, %c0_0] : memref<16x13xf32, #tpu.memory_space<vmem>>, vector<16x13xf32>
    %c0_1 = arith.constant 0 : index
    %c0_2 = arith.constant 0 : index
    %1 = vector.load %arg1[%c0_1, %c0_2] : memref<13x768xf32, #tpu.memory_space<vmem>>, vector<13x768xf32>
    %cst = arith.constant dense<0.000000e+00> : vector<16x768xf32>
    %2 = tpu.matmul %0, %1, %cst {dimension_numbers = #tpu.dot_dimension_numbers<[1], [0], [0], [1], [0, 0, 1, 1], [], []>} : vector<16x13xf32>, vector<13x768xf32>, vector<16x768xf32> -> vector<16x768xf32>
    %c0_3 = arith.constant 0 : index
    %c0_4 = arith.constant 0 : index
    %3 = vector.load %arg3[%c0_3, %c0_4] : memref<16x1xf32, #tpu.memory_space<vmem>>, vector<16x1xf32>
    %4 = vector.broadcast %3 : vector<16x1xf32> to vector<16x768xf32>
    %5 = arith.addf %2, %4 : vector<16x768xf32>
    %c0_5 = arith.constant 0 : index
    %c0_6 = arith.constant 0 : index
    %6 = vector.load %arg4[%c0_5, %c0_6] : memref<16x768xf32, #tpu.memory_space<vmem>>, vector<16x768xf32>
    tpu.vector_store %arg4[%c0_5, %c0_6], %5 {strides = array<i32>} : memref<16x768xf32, #tpu.memory_space<vmem>>, vector<16x768xf32>,
    return
  }
  func.func @transform_0(%arg0: i32) -> (i32, i32) {
    %c0_i32 = arith.constant 0 : i32
    %c0_i32_0 = arith.constant 0 : i32
    return %c0_i32, %arg0 : i32, i32
  }
  func.func @transform_1(%arg0: i32) -> (i32, i32) {
    %c0_i32 = arith.constant 0 : i32
    %c0_i32_0 = arith.constant 0 : i32
    %c0_i32_1 = arith.constant 0 : i32
    return %c0_i32, %c0_i32_0 : i32, i32
  }
  func.func @transform_2(%arg0: i32) -> (i32, i32) {
    %c0_i32 = arith.constant 0 : i32
    %c0_i32_0 = arith.constant 0 : i32
    %c0_i32_1 = arith.constant 0 : i32
    return %c0_i32, %c0_i32_0 : i32, i32
  }
  func.func @transform_3(%arg0: i32) -> (i32, i32) {
    %c0_i32 = arith.constant 0 : i32
    %c0_i32_0 = arith.constant 0 : i32
    return %c0_i32, %arg0 : i32, i32
  }
}

module attributes {stable_mosaic.version = 11 : i64} {
  func.func @_cmul_kernel(%arg0: i32, %arg1: memref<2x16x128xf32, #tpu.memory_space<vmem>>, %arg2: memref<2x16x128xf32, #tpu.memory_space<vmem>>, %arg3: memref<16x16x128xf32, #tpu.memory_space<vmem>>, %arg4: memref<16x16x128xf32, #tpu.memory_space<vmem>>, %arg5: memref<16x16x128xf32, #tpu.memory_space<vmem>>, %arg6: memref<2x16x128xf32, #tpu.memory_space<vmem>>, %arg7: memref<2x16x128xf32, #tpu.memory_space<vmem>>) attributes {dimension_semantics = [#tpu.dimension_semantics<parallel>], iteration_bounds = array<i64: 2>, scalar_prefetch = 0 : i64, scratch_operands = 0 : i64, tpu.core_type = #tpu.core_type<tc>, window_params = [{transform_indices = @transform_0, window_bounds = array<i64: 2, 16, 128>}, {transform_indices = @transform_1, window_bounds = array<i64: 2, 16, 128>}, {transform_indices = @transform_2, window_bounds = array<i64: 16, 16, 128>}, {transform_indices = @transform_3, window_bounds = array<i64: 16, 16, 128>}, {transform_indices = @transform_4, window_bounds = array<i64: 16, 16, 128>}, {transform_indices = @transform_5, window_bounds = array<i64: 2, 16, 128>}, {transform_indices = @transform_6, window_bounds = array<i64: 2, 16, 128>}]} {
    %c0 = arith.constant 0 : index
    %c0_0 = arith.constant 0 : index
    %c0_1 = arith.constant 0 : index
    %0 = vector.load %arg1[%c0, %c0_0, %c0_1] : memref<2x16x128xf32, #tpu.memory_space<vmem>>, vector<1x16x128xf32>
    %1 = vector.shape_cast %0 : vector<1x16x128xf32> to vector<16x128xf32>
    %c0_2 = arith.constant 0 : index
    %c0_3 = arith.constant 0 : index
    %c0_4 = arith.constant 0 : index
    %2 = vector.load %arg2[%c0_2, %c0_3, %c0_4] : memref<2x16x128xf32, #tpu.memory_space<vmem>>, vector<1x16x128xf32>
    %3 = vector.shape_cast %2 : vector<1x16x128xf32> to vector<16x128xf32>
    %cst = arith.constant 0.000000e+00 : f32
    %4 = vector.broadcast %cst : f32 to vector<16x128xf32>
    %cst_5 = arith.constant 0.000000e+00 : f32
    %5 = vector.broadcast %cst_5 : f32 to vector<16x128xf32>
    %6 = vector.extract_strided_slice %1 {offsets = [0, 0], sizes = [1, 128], strides = [1, 1]} : vector<16x128xf32> to vector<1x128xf32>
    %7 = vector.extract_strided_slice %3 {offsets = [0, 0], sizes = [1, 128], strides = [1, 1]} : vector<16x128xf32> to vector<1x128xf32>
    %c0_6 = arith.constant 0 : index
    %c0_7 = arith.constant 0 : index
    %c0_8 = arith.constant 0 : index
    %8 = vector.load %arg3[%c0_6, %c0_7, %c0_8] : memref<16x16x128xf32, #tpu.memory_space<vmem>>, vector<1x16x128xf32>
    %9 = vector.shape_cast %8 : vector<1x16x128xf32> to vector<16x128xf32>
    %10 = arith.addf %6, %7 : vector<1x128xf32>
    %11 = vector.broadcast %10 : vector<1x128xf32> to vector<16x128xf32>
    %12 = arith.mulf %9, %11 : vector<16x128xf32>
    %c0_9 = arith.constant 0 : index
    %c0_10 = arith.constant 0 : index
    %c0_11 = arith.constant 0 : index
    %13 = vector.load %arg4[%c0_9, %c0_10, %c0_11] : memref<16x16x128xf32, #tpu.memory_space<vmem>>, vector<1x16x128xf32>
    %14 = vector.shape_cast %13 : vector<1x16x128xf32> to vector<16x128xf32>
    %15 = vector.broadcast %7 : vector<1x128xf32> to vector<16x128xf32>
    %16 = arith.mulf %15, %14 : vector<16x128xf32>
    %17 = arith.subf %12, %16 : vector<16x128xf32>
    %18 = arith.addf %4, %17 : vector<16x128xf32>
    %c0_12 = arith.constant 0 : index
    %c0_13 = arith.constant 0 : index
    %c0_14 = arith.constant 0 : index
    %19 = vector.load %arg5[%c0_12, %c0_13, %c0_14] : memref<16x16x128xf32, #tpu.memory_space<vmem>>, vector<1x16x128xf32>
    %20 = vector.shape_cast %19 : vector<1x16x128xf32> to vector<16x128xf32>
    %21 = vector.broadcast %6 : vector<1x128xf32> to vector<16x128xf32>
    %22 = arith.mulf %21, %20 : vector<16x128xf32>
    %23 = arith.addf %12, %22 : vector<16x128xf32>
    %24 = arith.addf %5, %23 : vector<16x128xf32>
    %25 = vector.extract_strided_slice %1 {offsets = [1, 0], sizes = [1, 128], strides = [1, 1]} : vector<16x128xf32> to vector<1x128xf32>
    %26 = vector.extract_strided_slice %3 {offsets = [1, 0], sizes = [1, 128], strides = [1, 1]} : vector<16x128xf32> to vector<1x128xf32>
    %c1 = arith.constant 1 : index
    %c0_15 = arith.constant 0 : index
    %c0_16 = arith.constant 0 : index
    %27 = vector.load %arg3[%c1, %c0_15, %c0_16] : memref<16x16x128xf32, #tpu.memory_space<vmem>>, vector<1x16x128xf32>
    %28 = vector.shape_cast %27 : vector<1x16x128xf32> to vector<16x128xf32>
    %29 = arith.addf %25, %26 : vector<1x128xf32>
    %30 = vector.broadcast %29 : vector<1x128xf32> to vector<16x128xf32>
    %31 = arith.mulf %28, %30 : vector<16x128xf32>
    %c1_17 = arith.constant 1 : index
    %c0_18 = arith.constant 0 : index
    %c0_19 = arith.constant 0 : index
    %32 = vector.load %arg4[%c1_17, %c0_18, %c0_19] : memref<16x16x128xf32, #tpu.memory_space<vmem>>, vector<1x16x128xf32>
    %33 = vector.shape_cast %32 : vector<1x16x128xf32> to vector<16x128xf32>
    %34 = vector.broadcast %26 : vector<1x128xf32> to vector<16x128xf32>
    %35 = arith.mulf %34, %33 : vector<16x128xf32>
    %36 = arith.subf %31, %35 : vector<16x128xf32>
    %37 = arith.addf %18, %36 : vector<16x128xf32>
    %c1_20 = arith.constant 1 : index
    %c0_21 = arith.constant 0 : index
    %c0_22 = arith.constant 0 : index
    %38 = vector.load %arg5[%c1_20, %c0_21, %c0_22] : memref<16x16x128xf32, #tpu.memory_space<vmem>>, vector<1x16x128xf32>
    %39 = vector.shape_cast %38 : vector<1x16x128xf32> to vector<16x128xf32>
    %40 = vector.broadcast %25 : vector<1x128xf32> to vector<16x128xf32>
    %41 = arith.mulf %40, %39 : vector<16x128xf32>
    %42 = arith.addf %31, %41 : vector<16x128xf32>
    %43 = arith.addf %24, %42 : vector<16x128xf32>
    %44 = vector.extract_strided_slice %1 {offsets = [2, 0], sizes = [1, 128], strides = [1, 1]} : vector<16x128xf32> to vector<1x128xf32>
    %45 = vector.extract_strided_slice %3 {offsets = [2, 0], sizes = [1, 128], strides = [1, 1]} : vector<16x128xf32> to vector<1x128xf32>
    %c2 = arith.constant 2 : index
    %c0_23 = arith.constant 0 : index
    %c0_24 = arith.constant 0 : index
    %46 = vector.load %arg3[%c2, %c0_23, %c0_24] : memref<16x16x128xf32, #tpu.memory_space<vmem>>, vector<1x16x128xf32>
    %47 = vector.shape_cast %46 : vector<1x16x128xf32> to vector<16x128xf32>
    %48 = arith.addf %44, %45 : vector<1x128xf32>
    %49 = vector.broadcast %48 : vector<1x128xf32> to vector<16x128xf32>
    %50 = arith.mulf %47, %49 : vector<16x128xf32>
    %c2_25 = arith.constant 2 : index
    %c0_26 = arith.constant 0 : index
    %c0_27 = arith.constant 0 : index
    %51 = vector.load %arg4[%c2_25, %c0_26, %c0_27] : memref<16x16x128xf32, #tpu.memory_space<vmem>>, vector<1x16x128xf32>
    %52 = vector.shape_cast %51 : vector<1x16x128xf32> to vector<16x128xf32>
    %53 = vector.broadcast %45 : vector<1x128xf32> to vector<16x128xf32>
    %54 = arith.mulf %53, %52 : vector<16x128xf32>
    %55 = arith.subf %50, %54 : vector<16x128xf32>
    %56 = arith.addf %37, %55 : vector<16x128xf32>
    %c2_28 = arith.constant 2 : index
    %c0_29 = arith.constant 0 : index
    %c0_30 = arith.constant 0 : index
    %57 = vector.load %arg5[%c2_28, %c0_29, %c0_30] : memref<16x16x128xf32, #tpu.memory_space<vmem>>, vector<1x16x128xf32>
    %58 = vector.shape_cast %57 : vector<1x16x128xf32> to vector<16x128xf32>
    %59 = vector.broadcast %44 : vector<1x128xf32> to vector<16x128xf32>
    %60 = arith.mulf %59, %58 : vector<16x128xf32>
    %61 = arith.addf %50, %60 : vector<16x128xf32>
    %62 = arith.addf %43, %61 : vector<16x128xf32>
    %63 = vector.extract_strided_slice %1 {offsets = [3, 0], sizes = [1, 128], strides = [1, 1]} : vector<16x128xf32> to vector<1x128xf32>
    %64 = vector.extract_strided_slice %3 {offsets = [3, 0], sizes = [1, 128], strides = [1, 1]} : vector<16x128xf32> to vector<1x128xf32>
    %c3 = arith.constant 3 : index
    %c0_31 = arith.constant 0 : index
    %c0_32 = arith.constant 0 : index
    %65 = vector.load %arg3[%c3, %c0_31, %c0_32] : memref<16x16x128xf32, #tpu.memory_space<vmem>>, vector<1x16x128xf32>
    %66 = vector.shape_cast %65 : vector<1x16x128xf32> to vector<16x128xf32>
    %67 = arith.addf %63, %64 : vector<1x128xf32>
    %68 = vector.broadcast %67 : vector<1x128xf32> to vector<16x128xf32>
    %69 = arith.mulf %66, %68 : vector<16x128xf32>
    %c3_33 = arith.constant 3 : index
    %c0_34 = arith.constant 0 : index
    %c0_35 = arith.constant 0 : index
    %70 = vector.load %arg4[%c3_33, %c0_34, %c0_35] : memref<16x16x128xf32, #tpu.memory_space<vmem>>, vector<1x16x128xf32>
    %71 = vector.shape_cast %70 : vector<1x16x128xf32> to vector<16x128xf32>
    %72 = vector.broadcast %64 : vector<1x128xf32> to vector<16x128xf32>
    %73 = arith.mulf %72, %71 : vector<16x128xf32>
    %74 = arith.subf %69, %73 : vector<16x128xf32>
    %75 = arith.addf %56, %74 : vector<16x128xf32>
    %c3_36 = arith.constant 3 : index
    %c0_37 = arith.constant 0 : index
    %c0_38 = arith.constant 0 : index
    %76 = vector.load %arg5[%c3_36, %c0_37, %c0_38] : memref<16x16x128xf32, #tpu.memory_space<vmem>>, vector<1x16x128xf32>
    %77 = vector.shape_cast %76 : vector<1x16x128xf32> to vector<16x128xf32>
    %78 = vector.broadcast %63 : vector<1x128xf32> to vector<16x128xf32>
    %79 = arith.mulf %78, %77 : vector<16x128xf32>
    %80 = arith.addf %69, %79 : vector<16x128xf32>
    %81 = arith.addf %62, %80 : vector<16x128xf32>
    %82 = vector.extract_strided_slice %1 {offsets = [4, 0], sizes = [1, 128], strides = [1, 1]} : vector<16x128xf32> to vector<1x128xf32>
    %83 = vector.extract_strided_slice %3 {offsets = [4, 0], sizes = [1, 128], strides = [1, 1]} : vector<16x128xf32> to vector<1x128xf32>
    %c4 = arith.constant 4 : index
    %c0_39 = arith.constant 0 : index
    %c0_40 = arith.constant 0 : index
    %84 = vector.load %arg3[%c4, %c0_39, %c0_40] : memref<16x16x128xf32, #tpu.memory_space<vmem>>, vector<1x16x128xf32>
    %85 = vector.shape_cast %84 : vector<1x16x128xf32> to vector<16x128xf32>
    %86 = arith.addf %82, %83 : vector<1x128xf32>
    %87 = vector.broadcast %86 : vector<1x128xf32> to vector<16x128xf32>
    %88 = arith.mulf %85, %87 : vector<16x128xf32>
    %c4_41 = arith.constant 4 : index
    %c0_42 = arith.constant 0 : index
    %c0_43 = arith.constant 0 : index
    %89 = vector.load %arg4[%c4_41, %c0_42, %c0_43] : memref<16x16x128xf32, #tpu.memory_space<vmem>>, vector<1x16x128xf32>
    %90 = vector.shape_cast %89 : vector<1x16x128xf32> to vector<16x128xf32>
    %91 = vector.broadcast %83 : vector<1x128xf32> to vector<16x128xf32>
    %92 = arith.mulf %91, %90 : vector<16x128xf32>
    %93 = arith.subf %88, %92 : vector<16x128xf32>
    %94 = arith.addf %75, %93 : vector<16x128xf32>
    %c4_44 = arith.constant 4 : index
    %c0_45 = arith.constant 0 : index
    %c0_46 = arith.constant 0 : index
    %95 = vector.load %arg5[%c4_44, %c0_45, %c0_46] : memref<16x16x128xf32, #tpu.memory_space<vmem>>, vector<1x16x128xf32>
    %96 = vector.shape_cast %95 : vector<1x16x128xf32> to vector<16x128xf32>
    %97 = vector.broadcast %82 : vector<1x128xf32> to vector<16x128xf32>
    %98 = arith.mulf %97, %96 : vector<16x128xf32>
    %99 = arith.addf %88, %98 : vector<16x128xf32>
    %100 = arith.addf %81, %99 : vector<16x128xf32>
    %101 = vector.extract_strided_slice %1 {offsets = [5, 0], sizes = [1, 128], strides = [1, 1]} : vector<16x128xf32> to vector<1x128xf32>
    %102 = vector.extract_strided_slice %3 {offsets = [5, 0], sizes = [1, 128], strides = [1, 1]} : vector<16x128xf32> to vector<1x128xf32>
    %c5 = arith.constant 5 : index
    %c0_47 = arith.constant 0 : index
    %c0_48 = arith.constant 0 : index
    %103 = vector.load %arg3[%c5, %c0_47, %c0_48] : memref<16x16x128xf32, #tpu.memory_space<vmem>>, vector<1x16x128xf32>
    %104 = vector.shape_cast %103 : vector<1x16x128xf32> to vector<16x128xf32>
    %105 = arith.addf %101, %102 : vector<1x128xf32>
    %106 = vector.broadcast %105 : vector<1x128xf32> to vector<16x128xf32>
    %107 = arith.mulf %104, %106 : vector<16x128xf32>
    %c5_49 = arith.constant 5 : index
    %c0_50 = arith.constant 0 : index
    %c0_51 = arith.constant 0 : index
    %108 = vector.load %arg4[%c5_49, %c0_50, %c0_51] : memref<16x16x128xf32, #tpu.memory_space<vmem>>, vector<1x16x128xf32>
    %109 = vector.shape_cast %108 : vector<1x16x128xf32> to vector<16x128xf32>
    %110 = vector.broadcast %102 : vector<1x128xf32> to vector<16x128xf32>
    %111 = arith.mulf %110, %109 : vector<16x128xf32>
    %112 = arith.subf %107, %111 : vector<16x128xf32>
    %113 = arith.addf %94, %112 : vector<16x128xf32>
    %c5_52 = arith.constant 5 : index
    %c0_53 = arith.constant 0 : index
    %c0_54 = arith.constant 0 : index
    %114 = vector.load %arg5[%c5_52, %c0_53, %c0_54] : memref<16x16x128xf32, #tpu.memory_space<vmem>>, vector<1x16x128xf32>
    %115 = vector.shape_cast %114 : vector<1x16x128xf32> to vector<16x128xf32>
    %116 = vector.broadcast %101 : vector<1x128xf32> to vector<16x128xf32>
    %117 = arith.mulf %116, %115 : vector<16x128xf32>
    %118 = arith.addf %107, %117 : vector<16x128xf32>
    %119 = arith.addf %100, %118 : vector<16x128xf32>
    %120 = vector.extract_strided_slice %1 {offsets = [6, 0], sizes = [1, 128], strides = [1, 1]} : vector<16x128xf32> to vector<1x128xf32>
    %121 = vector.extract_strided_slice %3 {offsets = [6, 0], sizes = [1, 128], strides = [1, 1]} : vector<16x128xf32> to vector<1x128xf32>
    %c6 = arith.constant 6 : index
    %c0_55 = arith.constant 0 : index
    %c0_56 = arith.constant 0 : index
    %122 = vector.load %arg3[%c6, %c0_55, %c0_56] : memref<16x16x128xf32, #tpu.memory_space<vmem>>, vector<1x16x128xf32>
    %123 = vector.shape_cast %122 : vector<1x16x128xf32> to vector<16x128xf32>
    %124 = arith.addf %120, %121 : vector<1x128xf32>
    %125 = vector.broadcast %124 : vector<1x128xf32> to vector<16x128xf32>
    %126 = arith.mulf %123, %125 : vector<16x128xf32>
    %c6_57 = arith.constant 6 : index
    %c0_58 = arith.constant 0 : index
    %c0_59 = arith.constant 0 : index
    %127 = vector.load %arg4[%c6_57, %c0_58, %c0_59] : memref<16x16x128xf32, #tpu.memory_space<vmem>>, vector<1x16x128xf32>
    %128 = vector.shape_cast %127 : vector<1x16x128xf32> to vector<16x128xf32>
    %129 = vector.broadcast %121 : vector<1x128xf32> to vector<16x128xf32>
    %130 = arith.mulf %129, %128 : vector<16x128xf32>
    %131 = arith.subf %126, %130 : vector<16x128xf32>
    %132 = arith.addf %113, %131 : vector<16x128xf32>
    %c6_60 = arith.constant 6 : index
    %c0_61 = arith.constant 0 : index
    %c0_62 = arith.constant 0 : index
    %133 = vector.load %arg5[%c6_60, %c0_61, %c0_62] : memref<16x16x128xf32, #tpu.memory_space<vmem>>, vector<1x16x128xf32>
    %134 = vector.shape_cast %133 : vector<1x16x128xf32> to vector<16x128xf32>
    %135 = vector.broadcast %120 : vector<1x128xf32> to vector<16x128xf32>
    %136 = arith.mulf %135, %134 : vector<16x128xf32>
    %137 = arith.addf %126, %136 : vector<16x128xf32>
    %138 = arith.addf %119, %137 : vector<16x128xf32>
    %139 = vector.extract_strided_slice %1 {offsets = [7, 0], sizes = [1, 128], strides = [1, 1]} : vector<16x128xf32> to vector<1x128xf32>
    %140 = vector.extract_strided_slice %3 {offsets = [7, 0], sizes = [1, 128], strides = [1, 1]} : vector<16x128xf32> to vector<1x128xf32>
    %c7 = arith.constant 7 : index
    %c0_63 = arith.constant 0 : index
    %c0_64 = arith.constant 0 : index
    %141 = vector.load %arg3[%c7, %c0_63, %c0_64] : memref<16x16x128xf32, #tpu.memory_space<vmem>>, vector<1x16x128xf32>
    %142 = vector.shape_cast %141 : vector<1x16x128xf32> to vector<16x128xf32>
    %143 = arith.addf %139, %140 : vector<1x128xf32>
    %144 = vector.broadcast %143 : vector<1x128xf32> to vector<16x128xf32>
    %145 = arith.mulf %142, %144 : vector<16x128xf32>
    %c7_65 = arith.constant 7 : index
    %c0_66 = arith.constant 0 : index
    %c0_67 = arith.constant 0 : index
    %146 = vector.load %arg4[%c7_65, %c0_66, %c0_67] : memref<16x16x128xf32, #tpu.memory_space<vmem>>, vector<1x16x128xf32>
    %147 = vector.shape_cast %146 : vector<1x16x128xf32> to vector<16x128xf32>
    %148 = vector.broadcast %140 : vector<1x128xf32> to vector<16x128xf32>
    %149 = arith.mulf %148, %147 : vector<16x128xf32>
    %150 = arith.subf %145, %149 : vector<16x128xf32>
    %151 = arith.addf %132, %150 : vector<16x128xf32>
    %c7_68 = arith.constant 7 : index
    %c0_69 = arith.constant 0 : index
    %c0_70 = arith.constant 0 : index
    %152 = vector.load %arg5[%c7_68, %c0_69, %c0_70] : memref<16x16x128xf32, #tpu.memory_space<vmem>>, vector<1x16x128xf32>
    %153 = vector.shape_cast %152 : vector<1x16x128xf32> to vector<16x128xf32>
    %154 = vector.broadcast %139 : vector<1x128xf32> to vector<16x128xf32>
    %155 = arith.mulf %154, %153 : vector<16x128xf32>
    %156 = arith.addf %145, %155 : vector<16x128xf32>
    %157 = arith.addf %138, %156 : vector<16x128xf32>
    %158 = vector.extract_strided_slice %1 {offsets = [8, 0], sizes = [1, 128], strides = [1, 1]} : vector<16x128xf32> to vector<1x128xf32>
    %159 = vector.extract_strided_slice %3 {offsets = [8, 0], sizes = [1, 128], strides = [1, 1]} : vector<16x128xf32> to vector<1x128xf32>
    %c8 = arith.constant 8 : index
    %c0_71 = arith.constant 0 : index
    %c0_72 = arith.constant 0 : index
    %160 = vector.load %arg3[%c8, %c0_71, %c0_72] : memref<16x16x128xf32, #tpu.memory_space<vmem>>, vector<1x16x128xf32>
    %161 = vector.shape_cast %160 : vector<1x16x128xf32> to vector<16x128xf32>
    %162 = arith.addf %158, %159 : vector<1x128xf32>
    %163 = vector.broadcast %162 : vector<1x128xf32> to vector<16x128xf32>
    %164 = arith.mulf %161, %163 : vector<16x128xf32>
    %c8_73 = arith.constant 8 : index
    %c0_74 = arith.constant 0 : index
    %c0_75 = arith.constant 0 : index
    %165 = vector.load %arg4[%c8_73, %c0_74, %c0_75] : memref<16x16x128xf32, #tpu.memory_space<vmem>>, vector<1x16x128xf32>
    %166 = vector.shape_cast %165 : vector<1x16x128xf32> to vector<16x128xf32>
    %167 = vector.broadcast %159 : vector<1x128xf32> to vector<16x128xf32>
    %168 = arith.mulf %167, %166 : vector<16x128xf32>
    %169 = arith.subf %164, %168 : vector<16x128xf32>
    %170 = arith.addf %151, %169 : vector<16x128xf32>
    %c8_76 = arith.constant 8 : index
    %c0_77 = arith.constant 0 : index
    %c0_78 = arith.constant 0 : index
    %171 = vector.load %arg5[%c8_76, %c0_77, %c0_78] : memref<16x16x128xf32, #tpu.memory_space<vmem>>, vector<1x16x128xf32>
    %172 = vector.shape_cast %171 : vector<1x16x128xf32> to vector<16x128xf32>
    %173 = vector.broadcast %158 : vector<1x128xf32> to vector<16x128xf32>
    %174 = arith.mulf %173, %172 : vector<16x128xf32>
    %175 = arith.addf %164, %174 : vector<16x128xf32>
    %176 = arith.addf %157, %175 : vector<16x128xf32>
    %177 = vector.extract_strided_slice %1 {offsets = [9, 0], sizes = [1, 128], strides = [1, 1]} : vector<16x128xf32> to vector<1x128xf32>
    %178 = vector.extract_strided_slice %3 {offsets = [9, 0], sizes = [1, 128], strides = [1, 1]} : vector<16x128xf32> to vector<1x128xf32>
    %c9 = arith.constant 9 : index
    %c0_79 = arith.constant 0 : index
    %c0_80 = arith.constant 0 : index
    %179 = vector.load %arg3[%c9, %c0_79, %c0_80] : memref<16x16x128xf32, #tpu.memory_space<vmem>>, vector<1x16x128xf32>
    %180 = vector.shape_cast %179 : vector<1x16x128xf32> to vector<16x128xf32>
    %181 = arith.addf %177, %178 : vector<1x128xf32>
    %182 = vector.broadcast %181 : vector<1x128xf32> to vector<16x128xf32>
    %183 = arith.mulf %180, %182 : vector<16x128xf32>
    %c9_81 = arith.constant 9 : index
    %c0_82 = arith.constant 0 : index
    %c0_83 = arith.constant 0 : index
    %184 = vector.load %arg4[%c9_81, %c0_82, %c0_83] : memref<16x16x128xf32, #tpu.memory_space<vmem>>, vector<1x16x128xf32>
    %185 = vector.shape_cast %184 : vector<1x16x128xf32> to vector<16x128xf32>
    %186 = vector.broadcast %178 : vector<1x128xf32> to vector<16x128xf32>
    %187 = arith.mulf %186, %185 : vector<16x128xf32>
    %188 = arith.subf %183, %187 : vector<16x128xf32>
    %189 = arith.addf %170, %188 : vector<16x128xf32>
    %c9_84 = arith.constant 9 : index
    %c0_85 = arith.constant 0 : index
    %c0_86 = arith.constant 0 : index
    %190 = vector.load %arg5[%c9_84, %c0_85, %c0_86] : memref<16x16x128xf32, #tpu.memory_space<vmem>>, vector<1x16x128xf32>
    %191 = vector.shape_cast %190 : vector<1x16x128xf32> to vector<16x128xf32>
    %192 = vector.broadcast %177 : vector<1x128xf32> to vector<16x128xf32>
    %193 = arith.mulf %192, %191 : vector<16x128xf32>
    %194 = arith.addf %183, %193 : vector<16x128xf32>
    %195 = arith.addf %176, %194 : vector<16x128xf32>
    %196 = vector.extract_strided_slice %1 {offsets = [10, 0], sizes = [1, 128], strides = [1, 1]} : vector<16x128xf32> to vector<1x128xf32>
    %197 = vector.extract_strided_slice %3 {offsets = [10, 0], sizes = [1, 128], strides = [1, 1]} : vector<16x128xf32> to vector<1x128xf32>
    %c10 = arith.constant 10 : index
    %c0_87 = arith.constant 0 : index
    %c0_88 = arith.constant 0 : index
    %198 = vector.load %arg3[%c10, %c0_87, %c0_88] : memref<16x16x128xf32, #tpu.memory_space<vmem>>, vector<1x16x128xf32>
    %199 = vector.shape_cast %198 : vector<1x16x128xf32> to vector<16x128xf32>
    %200 = arith.addf %196, %197 : vector<1x128xf32>
    %201 = vector.broadcast %200 : vector<1x128xf32> to vector<16x128xf32>
    %202 = arith.mulf %199, %201 : vector<16x128xf32>
    %c10_89 = arith.constant 10 : index
    %c0_90 = arith.constant 0 : index
    %c0_91 = arith.constant 0 : index
    %203 = vector.load %arg4[%c10_89, %c0_90, %c0_91] : memref<16x16x128xf32, #tpu.memory_space<vmem>>, vector<1x16x128xf32>
    %204 = vector.shape_cast %203 : vector<1x16x128xf32> to vector<16x128xf32>
    %205 = vector.broadcast %197 : vector<1x128xf32> to vector<16x128xf32>
    %206 = arith.mulf %205, %204 : vector<16x128xf32>
    %207 = arith.subf %202, %206 : vector<16x128xf32>
    %208 = arith.addf %189, %207 : vector<16x128xf32>
    %c10_92 = arith.constant 10 : index
    %c0_93 = arith.constant 0 : index
    %c0_94 = arith.constant 0 : index
    %209 = vector.load %arg5[%c10_92, %c0_93, %c0_94] : memref<16x16x128xf32, #tpu.memory_space<vmem>>, vector<1x16x128xf32>
    %210 = vector.shape_cast %209 : vector<1x16x128xf32> to vector<16x128xf32>
    %211 = vector.broadcast %196 : vector<1x128xf32> to vector<16x128xf32>
    %212 = arith.mulf %211, %210 : vector<16x128xf32>
    %213 = arith.addf %202, %212 : vector<16x128xf32>
    %214 = arith.addf %195, %213 : vector<16x128xf32>
    %215 = vector.extract_strided_slice %1 {offsets = [11, 0], sizes = [1, 128], strides = [1, 1]} : vector<16x128xf32> to vector<1x128xf32>
    %216 = vector.extract_strided_slice %3 {offsets = [11, 0], sizes = [1, 128], strides = [1, 1]} : vector<16x128xf32> to vector<1x128xf32>
    %c11 = arith.constant 11 : index
    %c0_95 = arith.constant 0 : index
    %c0_96 = arith.constant 0 : index
    %217 = vector.load %arg3[%c11, %c0_95, %c0_96] : memref<16x16x128xf32, #tpu.memory_space<vmem>>, vector<1x16x128xf32>
    %218 = vector.shape_cast %217 : vector<1x16x128xf32> to vector<16x128xf32>
    %219 = arith.addf %215, %216 : vector<1x128xf32>
    %220 = vector.broadcast %219 : vector<1x128xf32> to vector<16x128xf32>
    %221 = arith.mulf %218, %220 : vector<16x128xf32>
    %c11_97 = arith.constant 11 : index
    %c0_98 = arith.constant 0 : index
    %c0_99 = arith.constant 0 : index
    %222 = vector.load %arg4[%c11_97, %c0_98, %c0_99] : memref<16x16x128xf32, #tpu.memory_space<vmem>>, vector<1x16x128xf32>
    %223 = vector.shape_cast %222 : vector<1x16x128xf32> to vector<16x128xf32>
    %224 = vector.broadcast %216 : vector<1x128xf32> to vector<16x128xf32>
    %225 = arith.mulf %224, %223 : vector<16x128xf32>
    %226 = arith.subf %221, %225 : vector<16x128xf32>
    %227 = arith.addf %208, %226 : vector<16x128xf32>
    %c11_100 = arith.constant 11 : index
    %c0_101 = arith.constant 0 : index
    %c0_102 = arith.constant 0 : index
    %228 = vector.load %arg5[%c11_100, %c0_101, %c0_102] : memref<16x16x128xf32, #tpu.memory_space<vmem>>, vector<1x16x128xf32>
    %229 = vector.shape_cast %228 : vector<1x16x128xf32> to vector<16x128xf32>
    %230 = vector.broadcast %215 : vector<1x128xf32> to vector<16x128xf32>
    %231 = arith.mulf %230, %229 : vector<16x128xf32>
    %232 = arith.addf %221, %231 : vector<16x128xf32>
    %233 = arith.addf %214, %232 : vector<16x128xf32>
    %234 = vector.extract_strided_slice %1 {offsets = [12, 0], sizes = [1, 128], strides = [1, 1]} : vector<16x128xf32> to vector<1x128xf32>
    %235 = vector.extract_strided_slice %3 {offsets = [12, 0], sizes = [1, 128], strides = [1, 1]} : vector<16x128xf32> to vector<1x128xf32>
    %c12 = arith.constant 12 : index
    %c0_103 = arith.constant 0 : index
    %c0_104 = arith.constant 0 : index
    %236 = vector.load %arg3[%c12, %c0_103, %c0_104] : memref<16x16x128xf32, #tpu.memory_space<vmem>>, vector<1x16x128xf32>
    %237 = vector.shape_cast %236 : vector<1x16x128xf32> to vector<16x128xf32>
    %238 = arith.addf %234, %235 : vector<1x128xf32>
    %239 = vector.broadcast %238 : vector<1x128xf32> to vector<16x128xf32>
    %240 = arith.mulf %237, %239 : vector<16x128xf32>
    %c12_105 = arith.constant 12 : index
    %c0_106 = arith.constant 0 : index
    %c0_107 = arith.constant 0 : index
    %241 = vector.load %arg4[%c12_105, %c0_106, %c0_107] : memref<16x16x128xf32, #tpu.memory_space<vmem>>, vector<1x16x128xf32>
    %242 = vector.shape_cast %241 : vector<1x16x128xf32> to vector<16x128xf32>
    %243 = vector.broadcast %235 : vector<1x128xf32> to vector<16x128xf32>
    %244 = arith.mulf %243, %242 : vector<16x128xf32>
    %245 = arith.subf %240, %244 : vector<16x128xf32>
    %246 = arith.addf %227, %245 : vector<16x128xf32>
    %c12_108 = arith.constant 12 : index
    %c0_109 = arith.constant 0 : index
    %c0_110 = arith.constant 0 : index
    %247 = vector.load %arg5[%c12_108, %c0_109, %c0_110] : memref<16x16x128xf32, #tpu.memory_space<vmem>>, vector<1x16x128xf32>
    %248 = vector.shape_cast %247 : vector<1x16x128xf32> to vector<16x128xf32>
    %249 = vector.broadcast %234 : vector<1x128xf32> to vector<16x128xf32>
    %250 = arith.mulf %249, %248 : vector<16x128xf32>
    %251 = arith.addf %240, %250 : vector<16x128xf32>
    %252 = arith.addf %233, %251 : vector<16x128xf32>
    %253 = vector.extract_strided_slice %1 {offsets = [13, 0], sizes = [1, 128], strides = [1, 1]} : vector<16x128xf32> to vector<1x128xf32>
    %254 = vector.extract_strided_slice %3 {offsets = [13, 0], sizes = [1, 128], strides = [1, 1]} : vector<16x128xf32> to vector<1x128xf32>
    %c13 = arith.constant 13 : index
    %c0_111 = arith.constant 0 : index
    %c0_112 = arith.constant 0 : index
    %255 = vector.load %arg3[%c13, %c0_111, %c0_112] : memref<16x16x128xf32, #tpu.memory_space<vmem>>, vector<1x16x128xf32>
    %256 = vector.shape_cast %255 : vector<1x16x128xf32> to vector<16x128xf32>
    %257 = arith.addf %253, %254 : vector<1x128xf32>
    %258 = vector.broadcast %257 : vector<1x128xf32> to vector<16x128xf32>
    %259 = arith.mulf %256, %258 : vector<16x128xf32>
    %c13_113 = arith.constant 13 : index
    %c0_114 = arith.constant 0 : index
    %c0_115 = arith.constant 0 : index
    %260 = vector.load %arg4[%c13_113, %c0_114, %c0_115] : memref<16x16x128xf32, #tpu.memory_space<vmem>>, vector<1x16x128xf32>
    %261 = vector.shape_cast %260 : vector<1x16x128xf32> to vector<16x128xf32>
    %262 = vector.broadcast %254 : vector<1x128xf32> to vector<16x128xf32>
    %263 = arith.mulf %262, %261 : vector<16x128xf32>
    %264 = arith.subf %259, %263 : vector<16x128xf32>
    %265 = arith.addf %246, %264 : vector<16x128xf32>
    %c13_116 = arith.constant 13 : index
    %c0_117 = arith.constant 0 : index
    %c0_118 = arith.constant 0 : index
    %266 = vector.load %arg5[%c13_116, %c0_117, %c0_118] : memref<16x16x128xf32, #tpu.memory_space<vmem>>, vector<1x16x128xf32>
    %267 = vector.shape_cast %266 : vector<1x16x128xf32> to vector<16x128xf32>
    %268 = vector.broadcast %253 : vector<1x128xf32> to vector<16x128xf32>
    %269 = arith.mulf %268, %267 : vector<16x128xf32>
    %270 = arith.addf %259, %269 : vector<16x128xf32>
    %271 = arith.addf %252, %270 : vector<16x128xf32>
    %272 = vector.extract_strided_slice %1 {offsets = [14, 0], sizes = [1, 128], strides = [1, 1]} : vector<16x128xf32> to vector<1x128xf32>
    %273 = vector.extract_strided_slice %3 {offsets = [14, 0], sizes = [1, 128], strides = [1, 1]} : vector<16x128xf32> to vector<1x128xf32>
    %c14 = arith.constant 14 : index
    %c0_119 = arith.constant 0 : index
    %c0_120 = arith.constant 0 : index
    %274 = vector.load %arg3[%c14, %c0_119, %c0_120] : memref<16x16x128xf32, #tpu.memory_space<vmem>>, vector<1x16x128xf32>
    %275 = vector.shape_cast %274 : vector<1x16x128xf32> to vector<16x128xf32>
    %276 = arith.addf %272, %273 : vector<1x128xf32>
    %277 = vector.broadcast %276 : vector<1x128xf32> to vector<16x128xf32>
    %278 = arith.mulf %275, %277 : vector<16x128xf32>
    %c14_121 = arith.constant 14 : index
    %c0_122 = arith.constant 0 : index
    %c0_123 = arith.constant 0 : index
    %279 = vector.load %arg4[%c14_121, %c0_122, %c0_123] : memref<16x16x128xf32, #tpu.memory_space<vmem>>, vector<1x16x128xf32>
    %280 = vector.shape_cast %279 : vector<1x16x128xf32> to vector<16x128xf32>
    %281 = vector.broadcast %273 : vector<1x128xf32> to vector<16x128xf32>
    %282 = arith.mulf %281, %280 : vector<16x128xf32>
    %283 = arith.subf %278, %282 : vector<16x128xf32>
    %284 = arith.addf %265, %283 : vector<16x128xf32>
    %c14_124 = arith.constant 14 : index
    %c0_125 = arith.constant 0 : index
    %c0_126 = arith.constant 0 : index
    %285 = vector.load %arg5[%c14_124, %c0_125, %c0_126] : memref<16x16x128xf32, #tpu.memory_space<vmem>>, vector<1x16x128xf32>
    %286 = vector.shape_cast %285 : vector<1x16x128xf32> to vector<16x128xf32>
    %287 = vector.broadcast %272 : vector<1x128xf32> to vector<16x128xf32>
    %288 = arith.mulf %287, %286 : vector<16x128xf32>
    %289 = arith.addf %278, %288 : vector<16x128xf32>
    %290 = arith.addf %271, %289 : vector<16x128xf32>
    %291 = vector.extract_strided_slice %1 {offsets = [15, 0], sizes = [1, 128], strides = [1, 1]} : vector<16x128xf32> to vector<1x128xf32>
    %292 = vector.extract_strided_slice %3 {offsets = [15, 0], sizes = [1, 128], strides = [1, 1]} : vector<16x128xf32> to vector<1x128xf32>
    %c15 = arith.constant 15 : index
    %c0_127 = arith.constant 0 : index
    %c0_128 = arith.constant 0 : index
    %293 = vector.load %arg3[%c15, %c0_127, %c0_128] : memref<16x16x128xf32, #tpu.memory_space<vmem>>, vector<1x16x128xf32>
    %294 = vector.shape_cast %293 : vector<1x16x128xf32> to vector<16x128xf32>
    %295 = arith.addf %291, %292 : vector<1x128xf32>
    %296 = vector.broadcast %295 : vector<1x128xf32> to vector<16x128xf32>
    %297 = arith.mulf %294, %296 : vector<16x128xf32>
    %c15_129 = arith.constant 15 : index
    %c0_130 = arith.constant 0 : index
    %c0_131 = arith.constant 0 : index
    %298 = vector.load %arg4[%c15_129, %c0_130, %c0_131] : memref<16x16x128xf32, #tpu.memory_space<vmem>>, vector<1x16x128xf32>
    %299 = vector.shape_cast %298 : vector<1x16x128xf32> to vector<16x128xf32>
    %300 = vector.broadcast %292 : vector<1x128xf32> to vector<16x128xf32>
    %301 = arith.mulf %300, %299 : vector<16x128xf32>
    %302 = arith.subf %297, %301 : vector<16x128xf32>
    %303 = arith.addf %284, %302 : vector<16x128xf32>
    %c15_132 = arith.constant 15 : index
    %c0_133 = arith.constant 0 : index
    %c0_134 = arith.constant 0 : index
    %304 = vector.load %arg5[%c15_132, %c0_133, %c0_134] : memref<16x16x128xf32, #tpu.memory_space<vmem>>, vector<1x16x128xf32>
    %305 = vector.shape_cast %304 : vector<1x16x128xf32> to vector<16x128xf32>
    %306 = vector.broadcast %291 : vector<1x128xf32> to vector<16x128xf32>
    %307 = arith.mulf %306, %305 : vector<16x128xf32>
    %308 = arith.addf %297, %307 : vector<16x128xf32>
    %309 = arith.addf %290, %308 : vector<16x128xf32>
    %c0_135 = arith.constant 0 : index
    %c0_136 = arith.constant 0 : index
    %c0_137 = arith.constant 0 : index
    %310 = vector.load %arg6[%c0_135, %c0_136, %c0_137] : memref<2x16x128xf32, #tpu.memory_space<vmem>>, vector<1x16x128xf32>
    %311 = vector.shape_cast %310 : vector<1x16x128xf32> to vector<16x128xf32>
    %312 = vector.shape_cast %303 : vector<16x128xf32> to vector<1x16x128xf32>
    tpu.vector_store %arg6[%c0_135, %c0_136, %c0_137], %312 {strides = array<i32>} : memref<2x16x128xf32, #tpu.memory_space<vmem>>, vector<1x16x128xf32>,
    %c0_138 = arith.constant 0 : index
    %c0_139 = arith.constant 0 : index
    %c0_140 = arith.constant 0 : index
    %313 = vector.load %arg7[%c0_138, %c0_139, %c0_140] : memref<2x16x128xf32, #tpu.memory_space<vmem>>, vector<1x16x128xf32>
    %314 = vector.shape_cast %313 : vector<1x16x128xf32> to vector<16x128xf32>
    %315 = vector.shape_cast %309 : vector<16x128xf32> to vector<1x16x128xf32>
    tpu.vector_store %arg7[%c0_138, %c0_139, %c0_140], %315 {strides = array<i32>} : memref<2x16x128xf32, #tpu.memory_space<vmem>>, vector<1x16x128xf32>,
    %c1_141 = arith.constant 1 : index
    %c0_142 = arith.constant 0 : index
    %c0_143 = arith.constant 0 : index
    %316 = vector.load %arg1[%c1_141, %c0_142, %c0_143] : memref<2x16x128xf32, #tpu.memory_space<vmem>>, vector<1x16x128xf32>
    %317 = vector.shape_cast %316 : vector<1x16x128xf32> to vector<16x128xf32>
    %c1_144 = arith.constant 1 : index
    %c0_145 = arith.constant 0 : index
    %c0_146 = arith.constant 0 : index
    %318 = vector.load %arg2[%c1_144, %c0_145, %c0_146] : memref<2x16x128xf32, #tpu.memory_space<vmem>>, vector<1x16x128xf32>
    %319 = vector.shape_cast %318 : vector<1x16x128xf32> to vector<16x128xf32>
    %cst_147 = arith.constant 0.000000e+00 : f32
    %320 = vector.broadcast %cst_147 : f32 to vector<16x128xf32>
    %cst_148 = arith.constant 0.000000e+00 : f32
    %321 = vector.broadcast %cst_148 : f32 to vector<16x128xf32>
    %322 = vector.extract_strided_slice %317 {offsets = [0, 0], sizes = [1, 128], strides = [1, 1]} : vector<16x128xf32> to vector<1x128xf32>
    %323 = vector.extract_strided_slice %319 {offsets = [0, 0], sizes = [1, 128], strides = [1, 1]} : vector<16x128xf32> to vector<1x128xf32>
    %c0_149 = arith.constant 0 : index
    %c0_150 = arith.constant 0 : index
    %c0_151 = arith.constant 0 : index
    %324 = vector.load %arg3[%c0_149, %c0_150, %c0_151] : memref<16x16x128xf32, #tpu.memory_space<vmem>>, vector<1x16x128xf32>
    %325 = vector.shape_cast %324 : vector<1x16x128xf32> to vector<16x128xf32>
    %326 = arith.addf %322, %323 : vector<1x128xf32>
    %327 = vector.broadcast %326 : vector<1x128xf32> to vector<16x128xf32>
    %328 = arith.mulf %325, %327 : vector<16x128xf32>
    %c0_152 = arith.constant 0 : index
    %c0_153 = arith.constant 0 : index
    %c0_154 = arith.constant 0 : index
    %329 = vector.load %arg4[%c0_152, %c0_153, %c0_154] : memref<16x16x128xf32, #tpu.memory_space<vmem>>, vector<1x16x128xf32>
    %330 = vector.shape_cast %329 : vector<1x16x128xf32> to vector<16x128xf32>
    %331 = vector.broadcast %323 : vector<1x128xf32> to vector<16x128xf32>
    %332 = arith.mulf %331, %330 : vector<16x128xf32>
    %333 = arith.subf %328, %332 : vector<16x128xf32>
    %334 = arith.addf %320, %333 : vector<16x128xf32>
    %c0_155 = arith.constant 0 : index
    %c0_156 = arith.constant 0 : index
    %c0_157 = arith.constant 0 : index
    %335 = vector.load %arg5[%c0_155, %c0_156, %c0_157] : memref<16x16x128xf32, #tpu.memory_space<vmem>>, vector<1x16x128xf32>
    %336 = vector.shape_cast %335 : vector<1x16x128xf32> to vector<16x128xf32>
    %337 = vector.broadcast %322 : vector<1x128xf32> to vector<16x128xf32>
    %338 = arith.mulf %337, %336 : vector<16x128xf32>
    %339 = arith.addf %328, %338 : vector<16x128xf32>
    %340 = arith.addf %321, %339 : vector<16x128xf32>
    %341 = vector.extract_strided_slice %317 {offsets = [1, 0], sizes = [1, 128], strides = [1, 1]} : vector<16x128xf32> to vector<1x128xf32>
    %342 = vector.extract_strided_slice %319 {offsets = [1, 0], sizes = [1, 128], strides = [1, 1]} : vector<16x128xf32> to vector<1x128xf32>
    %c1_158 = arith.constant 1 : index
    %c0_159 = arith.constant 0 : index
    %c0_160 = arith.constant 0 : index
    %343 = vector.load %arg3[%c1_158, %c0_159, %c0_160] : memref<16x16x128xf32, #tpu.memory_space<vmem>>, vector<1x16x128xf32>
    %344 = vector.shape_cast %343 : vector<1x16x128xf32> to vector<16x128xf32>
    %345 = arith.addf %341, %342 : vector<1x128xf32>
    %346 = vector.broadcast %345 : vector<1x128xf32> to vector<16x128xf32>
    %347 = arith.mulf %344, %346 : vector<16x128xf32>
    %c1_161 = arith.constant 1 : index
    %c0_162 = arith.constant 0 : index
    %c0_163 = arith.constant 0 : index
    %348 = vector.load %arg4[%c1_161, %c0_162, %c0_163] : memref<16x16x128xf32, #tpu.memory_space<vmem>>, vector<1x16x128xf32>
    %349 = vector.shape_cast %348 : vector<1x16x128xf32> to vector<16x128xf32>
    %350 = vector.broadcast %342 : vector<1x128xf32> to vector<16x128xf32>
    %351 = arith.mulf %350, %349 : vector<16x128xf32>
    %352 = arith.subf %347, %351 : vector<16x128xf32>
    %353 = arith.addf %334, %352 : vector<16x128xf32>
    %c1_164 = arith.constant 1 : index
    %c0_165 = arith.constant 0 : index
    %c0_166 = arith.constant 0 : index
    %354 = vector.load %arg5[%c1_164, %c0_165, %c0_166] : memref<16x16x128xf32, #tpu.memory_space<vmem>>, vector<1x16x128xf32>
    %355 = vector.shape_cast %354 : vector<1x16x128xf32> to vector<16x128xf32>
    %356 = vector.broadcast %341 : vector<1x128xf32> to vector<16x128xf32>
    %357 = arith.mulf %356, %355 : vector<16x128xf32>
    %358 = arith.addf %347, %357 : vector<16x128xf32>
    %359 = arith.addf %340, %358 : vector<16x128xf32>
    %360 = vector.extract_strided_slice %317 {offsets = [2, 0], sizes = [1, 128], strides = [1, 1]} : vector<16x128xf32> to vector<1x128xf32>
    %361 = vector.extract_strided_slice %319 {offsets = [2, 0], sizes = [1, 128], strides = [1, 1]} : vector<16x128xf32> to vector<1x128xf32>
    %c2_167 = arith.constant 2 : index
    %c0_168 = arith.constant 0 : index
    %c0_169 = arith.constant 0 : index
    %362 = vector.load %arg3[%c2_167, %c0_168, %c0_169] : memref<16x16x128xf32, #tpu.memory_space<vmem>>, vector<1x16x128xf32>
    %363 = vector.shape_cast %362 : vector<1x16x128xf32> to vector<16x128xf32>
    %364 = arith.addf %360, %361 : vector<1x128xf32>
    %365 = vector.broadcast %364 : vector<1x128xf32> to vector<16x128xf32>
    %366 = arith.mulf %363, %365 : vector<16x128xf32>
    %c2_170 = arith.constant 2 : index
    %c0_171 = arith.constant 0 : index
    %c0_172 = arith.constant 0 : index
    %367 = vector.load %arg4[%c2_170, %c0_171, %c0_172] : memref<16x16x128xf32, #tpu.memory_space<vmem>>, vector<1x16x128xf32>
    %368 = vector.shape_cast %367 : vector<1x16x128xf32> to vector<16x128xf32>
    %369 = vector.broadcast %361 : vector<1x128xf32> to vector<16x128xf32>
    %370 = arith.mulf %369, %368 : vector<16x128xf32>
    %371 = arith.subf %366, %370 : vector<16x128xf32>
    %372 = arith.addf %353, %371 : vector<16x128xf32>
    %c2_173 = arith.constant 2 : index
    %c0_174 = arith.constant 0 : index
    %c0_175 = arith.constant 0 : index
    %373 = vector.load %arg5[%c2_173, %c0_174, %c0_175] : memref<16x16x128xf32, #tpu.memory_space<vmem>>, vector<1x16x128xf32>
    %374 = vector.shape_cast %373 : vector<1x16x128xf32> to vector<16x128xf32>
    %375 = vector.broadcast %360 : vector<1x128xf32> to vector<16x128xf32>
    %376 = arith.mulf %375, %374 : vector<16x128xf32>
    %377 = arith.addf %366, %376 : vector<16x128xf32>
    %378 = arith.addf %359, %377 : vector<16x128xf32>
    %379 = vector.extract_strided_slice %317 {offsets = [3, 0], sizes = [1, 128], strides = [1, 1]} : vector<16x128xf32> to vector<1x128xf32>
    %380 = vector.extract_strided_slice %319 {offsets = [3, 0], sizes = [1, 128], strides = [1, 1]} : vector<16x128xf32> to vector<1x128xf32>
    %c3_176 = arith.constant 3 : index
    %c0_177 = arith.constant 0 : index
    %c0_178 = arith.constant 0 : index
    %381 = vector.load %arg3[%c3_176, %c0_177, %c0_178] : memref<16x16x128xf32, #tpu.memory_space<vmem>>, vector<1x16x128xf32>
    %382 = vector.shape_cast %381 : vector<1x16x128xf32> to vector<16x128xf32>
    %383 = arith.addf %379, %380 : vector<1x128xf32>
    %384 = vector.broadcast %383 : vector<1x128xf32> to vector<16x128xf32>
    %385 = arith.mulf %382, %384 : vector<16x128xf32>
    %c3_179 = arith.constant 3 : index
    %c0_180 = arith.constant 0 : index
    %c0_181 = arith.constant 0 : index
    %386 = vector.load %arg4[%c3_179, %c0_180, %c0_181] : memref<16x16x128xf32, #tpu.memory_space<vmem>>, vector<1x16x128xf32>
    %387 = vector.shape_cast %386 : vector<1x16x128xf32> to vector<16x128xf32>
    %388 = vector.broadcast %380 : vector<1x128xf32> to vector<16x128xf32>
    %389 = arith.mulf %388, %387 : vector<16x128xf32>
    %390 = arith.subf %385, %389 : vector<16x128xf32>
    %391 = arith.addf %372, %390 : vector<16x128xf32>
    %c3_182 = arith.constant 3 : index
    %c0_183 = arith.constant 0 : index
    %c0_184 = arith.constant 0 : index
    %392 = vector.load %arg5[%c3_182, %c0_183, %c0_184] : memref<16x16x128xf32, #tpu.memory_space<vmem>>, vector<1x16x128xf32>
    %393 = vector.shape_cast %392 : vector<1x16x128xf32> to vector<16x128xf32>
    %394 = vector.broadcast %379 : vector<1x128xf32> to vector<16x128xf32>
    %395 = arith.mulf %394, %393 : vector<16x128xf32>
    %396 = arith.addf %385, %395 : vector<16x128xf32>
    %397 = arith.addf %378, %396 : vector<16x128xf32>
    %398 = vector.extract_strided_slice %317 {offsets = [4, 0], sizes = [1, 128], strides = [1, 1]} : vector<16x128xf32> to vector<1x128xf32>
    %399 = vector.extract_strided_slice %319 {offsets = [4, 0], sizes = [1, 128], strides = [1, 1]} : vector<16x128xf32> to vector<1x128xf32>
    %c4_185 = arith.constant 4 : index
    %c0_186 = arith.constant 0 : index
    %c0_187 = arith.constant 0 : index
    %400 = vector.load %arg3[%c4_185, %c0_186, %c0_187] : memref<16x16x128xf32, #tpu.memory_space<vmem>>, vector<1x16x128xf32>
    %401 = vector.shape_cast %400 : vector<1x16x128xf32> to vector<16x128xf32>
    %402 = arith.addf %398, %399 : vector<1x128xf32>
    %403 = vector.broadcast %402 : vector<1x128xf32> to vector<16x128xf32>
    %404 = arith.mulf %401, %403 : vector<16x128xf32>
    %c4_188 = arith.constant 4 : index
    %c0_189 = arith.constant 0 : index
    %c0_190 = arith.constant 0 : index
    %405 = vector.load %arg4[%c4_188, %c0_189, %c0_190] : memref<16x16x128xf32, #tpu.memory_space<vmem>>, vector<1x16x128xf32>
    %406 = vector.shape_cast %405 : vector<1x16x128xf32> to vector<16x128xf32>
    %407 = vector.broadcast %399 : vector<1x128xf32> to vector<16x128xf32>
    %408 = arith.mulf %407, %406 : vector<16x128xf32>
    %409 = arith.subf %404, %408 : vector<16x128xf32>
    %410 = arith.addf %391, %409 : vector<16x128xf32>
    %c4_191 = arith.constant 4 : index
    %c0_192 = arith.constant 0 : index
    %c0_193 = arith.constant 0 : index
    %411 = vector.load %arg5[%c4_191, %c0_192, %c0_193] : memref<16x16x128xf32, #tpu.memory_space<vmem>>, vector<1x16x128xf32>
    %412 = vector.shape_cast %411 : vector<1x16x128xf32> to vector<16x128xf32>
    %413 = vector.broadcast %398 : vector<1x128xf32> to vector<16x128xf32>
    %414 = arith.mulf %413, %412 : vector<16x128xf32>
    %415 = arith.addf %404, %414 : vector<16x128xf32>
    %416 = arith.addf %397, %415 : vector<16x128xf32>
    %417 = vector.extract_strided_slice %317 {offsets = [5, 0], sizes = [1, 128], strides = [1, 1]} : vector<16x128xf32> to vector<1x128xf32>
    %418 = vector.extract_strided_slice %319 {offsets = [5, 0], sizes = [1, 128], strides = [1, 1]} : vector<16x128xf32> to vector<1x128xf32>
    %c5_194 = arith.constant 5 : index
    %c0_195 = arith.constant 0 : index
    %c0_196 = arith.constant 0 : index
    %419 = vector.load %arg3[%c5_194, %c0_195, %c0_196] : memref<16x16x128xf32, #tpu.memory_space<vmem>>, vector<1x16x128xf32>
    %420 = vector.shape_cast %419 : vector<1x16x128xf32> to vector<16x128xf32>
    %421 = arith.addf %417, %418 : vector<1x128xf32>
    %422 = vector.broadcast %421 : vector<1x128xf32> to vector<16x128xf32>
    %423 = arith.mulf %420, %422 : vector<16x128xf32>
    %c5_197 = arith.constant 5 : index
    %c0_198 = arith.constant 0 : index
    %c0_199 = arith.constant 0 : index
    %424 = vector.load %arg4[%c5_197, %c0_198, %c0_199] : memref<16x16x128xf32, #tpu.memory_space<vmem>>, vector<1x16x128xf32>
    %425 = vector.shape_cast %424 : vector<1x16x128xf32> to vector<16x128xf32>
    %426 = vector.broadcast %418 : vector<1x128xf32> to vector<16x128xf32>
    %427 = arith.mulf %426, %425 : vector<16x128xf32>
    %428 = arith.subf %423, %427 : vector<16x128xf32>
    %429 = arith.addf %410, %428 : vector<16x128xf32>
    %c5_200 = arith.constant 5 : index
    %c0_201 = arith.constant 0 : index
    %c0_202 = arith.constant 0 : index
    %430 = vector.load %arg5[%c5_200, %c0_201, %c0_202] : memref<16x16x128xf32, #tpu.memory_space<vmem>>, vector<1x16x128xf32>
    %431 = vector.shape_cast %430 : vector<1x16x128xf32> to vector<16x128xf32>
    %432 = vector.broadcast %417 : vector<1x128xf32> to vector<16x128xf32>
    %433 = arith.mulf %432, %431 : vector<16x128xf32>
    %434 = arith.addf %423, %433 : vector<16x128xf32>
    %435 = arith.addf %416, %434 : vector<16x128xf32>
    %436 = vector.extract_strided_slice %317 {offsets = [6, 0], sizes = [1, 128], strides = [1, 1]} : vector<16x128xf32> to vector<1x128xf32>
    %437 = vector.extract_strided_slice %319 {offsets = [6, 0], sizes = [1, 128], strides = [1, 1]} : vector<16x128xf32> to vector<1x128xf32>
    %c6_203 = arith.constant 6 : index
    %c0_204 = arith.constant 0 : index
    %c0_205 = arith.constant 0 : index
    %438 = vector.load %arg3[%c6_203, %c0_204, %c0_205] : memref<16x16x128xf32, #tpu.memory_space<vmem>>, vector<1x16x128xf32>
    %439 = vector.shape_cast %438 : vector<1x16x128xf32> to vector<16x128xf32>
    %440 = arith.addf %436, %437 : vector<1x128xf32>
    %441 = vector.broadcast %440 : vector<1x128xf32> to vector<16x128xf32>
    %442 = arith.mulf %439, %441 : vector<16x128xf32>
    %c6_206 = arith.constant 6 : index
    %c0_207 = arith.constant 0 : index
    %c0_208 = arith.constant 0 : index
    %443 = vector.load %arg4[%c6_206, %c0_207, %c0_208] : memref<16x16x128xf32, #tpu.memory_space<vmem>>, vector<1x16x128xf32>
    %444 = vector.shape_cast %443 : vector<1x16x128xf32> to vector<16x128xf32>
    %445 = vector.broadcast %437 : vector<1x128xf32> to vector<16x128xf32>
    %446 = arith.mulf %445, %444 : vector<16x128xf32>
    %447 = arith.subf %442, %446 : vector<16x128xf32>
    %448 = arith.addf %429, %447 : vector<16x128xf32>
    %c6_209 = arith.constant 6 : index
    %c0_210 = arith.constant 0 : index
    %c0_211 = arith.constant 0 : index
    %449 = vector.load %arg5[%c6_209, %c0_210, %c0_211] : memref<16x16x128xf32, #tpu.memory_space<vmem>>, vector<1x16x128xf32>
    %450 = vector.shape_cast %449 : vector<1x16x128xf32> to vector<16x128xf32>
    %451 = vector.broadcast %436 : vector<1x128xf32> to vector<16x128xf32>
    %452 = arith.mulf %451, %450 : vector<16x128xf32>
    %453 = arith.addf %442, %452 : vector<16x128xf32>
    %454 = arith.addf %435, %453 : vector<16x128xf32>
    %455 = vector.extract_strided_slice %317 {offsets = [7, 0], sizes = [1, 128], strides = [1, 1]} : vector<16x128xf32> to vector<1x128xf32>
    %456 = vector.extract_strided_slice %319 {offsets = [7, 0], sizes = [1, 128], strides = [1, 1]} : vector<16x128xf32> to vector<1x128xf32>
    %c7_212 = arith.constant 7 : index
    %c0_213 = arith.constant 0 : index
    %c0_214 = arith.constant 0 : index
    %457 = vector.load %arg3[%c7_212, %c0_213, %c0_214] : memref<16x16x128xf32, #tpu.memory_space<vmem>>, vector<1x16x128xf32>
    %458 = vector.shape_cast %457 : vector<1x16x128xf32> to vector<16x128xf32>
    %459 = arith.addf %455, %456 : vector<1x128xf32>
    %460 = vector.broadcast %459 : vector<1x128xf32> to vector<16x128xf32>
    %461 = arith.mulf %458, %460 : vector<16x128xf32>
    %c7_215 = arith.constant 7 : index
    %c0_216 = arith.constant 0 : index
    %c0_217 = arith.constant 0 : index
    %462 = vector.load %arg4[%c7_215, %c0_216, %c0_217] : memref<16x16x128xf32, #tpu.memory_space<vmem>>, vector<1x16x128xf32>
    %463 = vector.shape_cast %462 : vector<1x16x128xf32> to vector<16x128xf32>
    %464 = vector.broadcast %456 : vector<1x128xf32> to vector<16x128xf32>
    %465 = arith.mulf %464, %463 : vector<16x128xf32>
    %466 = arith.subf %461, %465 : vector<16x128xf32>
    %467 = arith.addf %448, %466 : vector<16x128xf32>
    %c7_218 = arith.constant 7 : index
    %c0_219 = arith.constant 0 : index
    %c0_220 = arith.constant 0 : index
    %468 = vector.load %arg5[%c7_218, %c0_219, %c0_220] : memref<16x16x128xf32, #tpu.memory_space<vmem>>, vector<1x16x128xf32>
    %469 = vector.shape_cast %468 : vector<1x16x128xf32> to vector<16x128xf32>
    %470 = vector.broadcast %455 : vector<1x128xf32> to vector<16x128xf32>
    %471 = arith.mulf %470, %469 : vector<16x128xf32>
    %472 = arith.addf %461, %471 : vector<16x128xf32>
    %473 = arith.addf %454, %472 : vector<16x128xf32>
    %474 = vector.extract_strided_slice %317 {offsets = [8, 0], sizes = [1, 128], strides = [1, 1]} : vector<16x128xf32> to vector<1x128xf32>
    %475 = vector.extract_strided_slice %319 {offsets = [8, 0], sizes = [1, 128], strides = [1, 1]} : vector<16x128xf32> to vector<1x128xf32>
    %c8_221 = arith.constant 8 : index
    %c0_222 = arith.constant 0 : index
    %c0_223 = arith.constant 0 : index
    %476 = vector.load %arg3[%c8_221, %c0_222, %c0_223] : memref<16x16x128xf32, #tpu.memory_space<vmem>>, vector<1x16x128xf32>
    %477 = vector.shape_cast %476 : vector<1x16x128xf32> to vector<16x128xf32>
    %478 = arith.addf %474, %475 : vector<1x128xf32>
    %479 = vector.broadcast %478 : vector<1x128xf32> to vector<16x128xf32>
    %480 = arith.mulf %477, %479 : vector<16x128xf32>
    %c8_224 = arith.constant 8 : index
    %c0_225 = arith.constant 0 : index
    %c0_226 = arith.constant 0 : index
    %481 = vector.load %arg4[%c8_224, %c0_225, %c0_226] : memref<16x16x128xf32, #tpu.memory_space<vmem>>, vector<1x16x128xf32>
    %482 = vector.shape_cast %481 : vector<1x16x128xf32> to vector<16x128xf32>
    %483 = vector.broadcast %475 : vector<1x128xf32> to vector<16x128xf32>
    %484 = arith.mulf %483, %482 : vector<16x128xf32>
    %485 = arith.subf %480, %484 : vector<16x128xf32>
    %486 = arith.addf %467, %485 : vector<16x128xf32>
    %c8_227 = arith.constant 8 : index
    %c0_228 = arith.constant 0 : index
    %c0_229 = arith.constant 0 : index
    %487 = vector.load %arg5[%c8_227, %c0_228, %c0_229] : memref<16x16x128xf32, #tpu.memory_space<vmem>>, vector<1x16x128xf32>
    %488 = vector.shape_cast %487 : vector<1x16x128xf32> to vector<16x128xf32>
    %489 = vector.broadcast %474 : vector<1x128xf32> to vector<16x128xf32>
    %490 = arith.mulf %489, %488 : vector<16x128xf32>
    %491 = arith.addf %480, %490 : vector<16x128xf32>
    %492 = arith.addf %473, %491 : vector<16x128xf32>
    %493 = vector.extract_strided_slice %317 {offsets = [9, 0], sizes = [1, 128], strides = [1, 1]} : vector<16x128xf32> to vector<1x128xf32>
    %494 = vector.extract_strided_slice %319 {offsets = [9, 0], sizes = [1, 128], strides = [1, 1]} : vector<16x128xf32> to vector<1x128xf32>
    %c9_230 = arith.constant 9 : index
    %c0_231 = arith.constant 0 : index
    %c0_232 = arith.constant 0 : index
    %495 = vector.load %arg3[%c9_230, %c0_231, %c0_232] : memref<16x16x128xf32, #tpu.memory_space<vmem>>, vector<1x16x128xf32>
    %496 = vector.shape_cast %495 : vector<1x16x128xf32> to vector<16x128xf32>
    %497 = arith.addf %493, %494 : vector<1x128xf32>
    %498 = vector.broadcast %497 : vector<1x128xf32> to vector<16x128xf32>
    %499 = arith.mulf %496, %498 : vector<16x128xf32>
    %c9_233 = arith.constant 9 : index
    %c0_234 = arith.constant 0 : index
    %c0_235 = arith.constant 0 : index
    %500 = vector.load %arg4[%c9_233, %c0_234, %c0_235] : memref<16x16x128xf32, #tpu.memory_space<vmem>>, vector<1x16x128xf32>
    %501 = vector.shape_cast %500 : vector<1x16x128xf32> to vector<16x128xf32>
    %502 = vector.broadcast %494 : vector<1x128xf32> to vector<16x128xf32>
    %503 = arith.mulf %502, %501 : vector<16x128xf32>
    %504 = arith.subf %499, %503 : vector<16x128xf32>
    %505 = arith.addf %486, %504 : vector<16x128xf32>
    %c9_236 = arith.constant 9 : index
    %c0_237 = arith.constant 0 : index
    %c0_238 = arith.constant 0 : index
    %506 = vector.load %arg5[%c9_236, %c0_237, %c0_238] : memref<16x16x128xf32, #tpu.memory_space<vmem>>, vector<1x16x128xf32>
    %507 = vector.shape_cast %506 : vector<1x16x128xf32> to vector<16x128xf32>
    %508 = vector.broadcast %493 : vector<1x128xf32> to vector<16x128xf32>
    %509 = arith.mulf %508, %507 : vector<16x128xf32>
    %510 = arith.addf %499, %509 : vector<16x128xf32>
    %511 = arith.addf %492, %510 : vector<16x128xf32>
    %512 = vector.extract_strided_slice %317 {offsets = [10, 0], sizes = [1, 128], strides = [1, 1]} : vector<16x128xf32> to vector<1x128xf32>
    %513 = vector.extract_strided_slice %319 {offsets = [10, 0], sizes = [1, 128], strides = [1, 1]} : vector<16x128xf32> to vector<1x128xf32>
    %c10_239 = arith.constant 10 : index
    %c0_240 = arith.constant 0 : index
    %c0_241 = arith.constant 0 : index
    %514 = vector.load %arg3[%c10_239, %c0_240, %c0_241] : memref<16x16x128xf32, #tpu.memory_space<vmem>>, vector<1x16x128xf32>
    %515 = vector.shape_cast %514 : vector<1x16x128xf32> to vector<16x128xf32>
    %516 = arith.addf %512, %513 : vector<1x128xf32>
    %517 = vector.broadcast %516 : vector<1x128xf32> to vector<16x128xf32>
    %518 = arith.mulf %515, %517 : vector<16x128xf32>
    %c10_242 = arith.constant 10 : index
    %c0_243 = arith.constant 0 : index
    %c0_244 = arith.constant 0 : index
    %519 = vector.load %arg4[%c10_242, %c0_243, %c0_244] : memref<16x16x128xf32, #tpu.memory_space<vmem>>, vector<1x16x128xf32>
    %520 = vector.shape_cast %519 : vector<1x16x128xf32> to vector<16x128xf32>
    %521 = vector.broadcast %513 : vector<1x128xf32> to vector<16x128xf32>
    %522 = arith.mulf %521, %520 : vector<16x128xf32>
    %523 = arith.subf %518, %522 : vector<16x128xf32>
    %524 = arith.addf %505, %523 : vector<16x128xf32>
    %c10_245 = arith.constant 10 : index
    %c0_246 = arith.constant 0 : index
    %c0_247 = arith.constant 0 : index
    %525 = vector.load %arg5[%c10_245, %c0_246, %c0_247] : memref<16x16x128xf32, #tpu.memory_space<vmem>>, vector<1x16x128xf32>
    %526 = vector.shape_cast %525 : vector<1x16x128xf32> to vector<16x128xf32>
    %527 = vector.broadcast %512 : vector<1x128xf32> to vector<16x128xf32>
    %528 = arith.mulf %527, %526 : vector<16x128xf32>
    %529 = arith.addf %518, %528 : vector<16x128xf32>
    %530 = arith.addf %511, %529 : vector<16x128xf32>
    %531 = vector.extract_strided_slice %317 {offsets = [11, 0], sizes = [1, 128], strides = [1, 1]} : vector<16x128xf32> to vector<1x128xf32>
    %532 = vector.extract_strided_slice %319 {offsets = [11, 0], sizes = [1, 128], strides = [1, 1]} : vector<16x128xf32> to vector<1x128xf32>
    %c11_248 = arith.constant 11 : index
    %c0_249 = arith.constant 0 : index
    %c0_250 = arith.constant 0 : index
    %533 = vector.load %arg3[%c11_248, %c0_249, %c0_250] : memref<16x16x128xf32, #tpu.memory_space<vmem>>, vector<1x16x128xf32>
    %534 = vector.shape_cast %533 : vector<1x16x128xf32> to vector<16x128xf32>
    %535 = arith.addf %531, %532 : vector<1x128xf32>
    %536 = vector.broadcast %535 : vector<1x128xf32> to vector<16x128xf32>
    %537 = arith.mulf %534, %536 : vector<16x128xf32>
    %c11_251 = arith.constant 11 : index
    %c0_252 = arith.constant 0 : index
    %c0_253 = arith.constant 0 : index
    %538 = vector.load %arg4[%c11_251, %c0_252, %c0_253] : memref<16x16x128xf32, #tpu.memory_space<vmem>>, vector<1x16x128xf32>
    %539 = vector.shape_cast %538 : vector<1x16x128xf32> to vector<16x128xf32>
    %540 = vector.broadcast %532 : vector<1x128xf32> to vector<16x128xf32>
    %541 = arith.mulf %540, %539 : vector<16x128xf32>
    %542 = arith.subf %537, %541 : vector<16x128xf32>
    %543 = arith.addf %524, %542 : vector<16x128xf32>
    %c11_254 = arith.constant 11 : index
    %c0_255 = arith.constant 0 : index
    %c0_256 = arith.constant 0 : index
    %544 = vector.load %arg5[%c11_254, %c0_255, %c0_256] : memref<16x16x128xf32, #tpu.memory_space<vmem>>, vector<1x16x128xf32>
    %545 = vector.shape_cast %544 : vector<1x16x128xf32> to vector<16x128xf32>
    %546 = vector.broadcast %531 : vector<1x128xf32> to vector<16x128xf32>
    %547 = arith.mulf %546, %545 : vector<16x128xf32>
    %548 = arith.addf %537, %547 : vector<16x128xf32>
    %549 = arith.addf %530, %548 : vector<16x128xf32>
    %550 = vector.extract_strided_slice %317 {offsets = [12, 0], sizes = [1, 128], strides = [1, 1]} : vector<16x128xf32> to vector<1x128xf32>
    %551 = vector.extract_strided_slice %319 {offsets = [12, 0], sizes = [1, 128], strides = [1, 1]} : vector<16x128xf32> to vector<1x128xf32>
    %c12_257 = arith.constant 12 : index
    %c0_258 = arith.constant 0 : index
    %c0_259 = arith.constant 0 : index
    %552 = vector.load %arg3[%c12_257, %c0_258, %c0_259] : memref<16x16x128xf32, #tpu.memory_space<vmem>>, vector<1x16x128xf32>
    %553 = vector.shape_cast %552 : vector<1x16x128xf32> to vector<16x128xf32>
    %554 = arith.addf %550, %551 : vector<1x128xf32>
    %555 = vector.broadcast %554 : vector<1x128xf32> to vector<16x128xf32>
    %556 = arith.mulf %553, %555 : vector<16x128xf32>
    %c12_260 = arith.constant 12 : index
    %c0_261 = arith.constant 0 : index
    %c0_262 = arith.constant 0 : index
    %557 = vector.load %arg4[%c12_260, %c0_261, %c0_262] : memref<16x16x128xf32, #tpu.memory_space<vmem>>, vector<1x16x128xf32>
    %558 = vector.shape_cast %557 : vector<1x16x128xf32> to vector<16x128xf32>
    %559 = vector.broadcast %551 : vector<1x128xf32> to vector<16x128xf32>
    %560 = arith.mulf %559, %558 : vector<16x128xf32>
    %561 = arith.subf %556, %560 : vector<16x128xf32>
    %562 = arith.addf %543, %561 : vector<16x128xf32>
    %c12_263 = arith.constant 12 : index
    %c0_264 = arith.constant 0 : index
    %c0_265 = arith.constant 0 : index
    %563 = vector.load %arg5[%c12_263, %c0_264, %c0_265] : memref<16x16x128xf32, #tpu.memory_space<vmem>>, vector<1x16x128xf32>
    %564 = vector.shape_cast %563 : vector<1x16x128xf32> to vector<16x128xf32>
    %565 = vector.broadcast %550 : vector<1x128xf32> to vector<16x128xf32>
    %566 = arith.mulf %565, %564 : vector<16x128xf32>
    %567 = arith.addf %556, %566 : vector<16x128xf32>
    %568 = arith.addf %549, %567 : vector<16x128xf32>
    %569 = vector.extract_strided_slice %317 {offsets = [13, 0], sizes = [1, 128], strides = [1, 1]} : vector<16x128xf32> to vector<1x128xf32>
    %570 = vector.extract_strided_slice %319 {offsets = [13, 0], sizes = [1, 128], strides = [1, 1]} : vector<16x128xf32> to vector<1x128xf32>
    %c13_266 = arith.constant 13 : index
    %c0_267 = arith.constant 0 : index
    %c0_268 = arith.constant 0 : index
    %571 = vector.load %arg3[%c13_266, %c0_267, %c0_268] : memref<16x16x128xf32, #tpu.memory_space<vmem>>, vector<1x16x128xf32>
    %572 = vector.shape_cast %571 : vector<1x16x128xf32> to vector<16x128xf32>
    %573 = arith.addf %569, %570 : vector<1x128xf32>
    %574 = vector.broadcast %573 : vector<1x128xf32> to vector<16x128xf32>
    %575 = arith.mulf %572, %574 : vector<16x128xf32>
    %c13_269 = arith.constant 13 : index
    %c0_270 = arith.constant 0 : index
    %c0_271 = arith.constant 0 : index
    %576 = vector.load %arg4[%c13_269, %c0_270, %c0_271] : memref<16x16x128xf32, #tpu.memory_space<vmem>>, vector<1x16x128xf32>
    %577 = vector.shape_cast %576 : vector<1x16x128xf32> to vector<16x128xf32>
    %578 = vector.broadcast %570 : vector<1x128xf32> to vector<16x128xf32>
    %579 = arith.mulf %578, %577 : vector<16x128xf32>
    %580 = arith.subf %575, %579 : vector<16x128xf32>
    %581 = arith.addf %562, %580 : vector<16x128xf32>
    %c13_272 = arith.constant 13 : index
    %c0_273 = arith.constant 0 : index
    %c0_274 = arith.constant 0 : index
    %582 = vector.load %arg5[%c13_272, %c0_273, %c0_274] : memref<16x16x128xf32, #tpu.memory_space<vmem>>, vector<1x16x128xf32>
    %583 = vector.shape_cast %582 : vector<1x16x128xf32> to vector<16x128xf32>
    %584 = vector.broadcast %569 : vector<1x128xf32> to vector<16x128xf32>
    %585 = arith.mulf %584, %583 : vector<16x128xf32>
    %586 = arith.addf %575, %585 : vector<16x128xf32>
    %587 = arith.addf %568, %586 : vector<16x128xf32>
    %588 = vector.extract_strided_slice %317 {offsets = [14, 0], sizes = [1, 128], strides = [1, 1]} : vector<16x128xf32> to vector<1x128xf32>
    %589 = vector.extract_strided_slice %319 {offsets = [14, 0], sizes = [1, 128], strides = [1, 1]} : vector<16x128xf32> to vector<1x128xf32>
    %c14_275 = arith.constant 14 : index
    %c0_276 = arith.constant 0 : index
    %c0_277 = arith.constant 0 : index
    %590 = vector.load %arg3[%c14_275, %c0_276, %c0_277] : memref<16x16x128xf32, #tpu.memory_space<vmem>>, vector<1x16x128xf32>
    %591 = vector.shape_cast %590 : vector<1x16x128xf32> to vector<16x128xf32>
    %592 = arith.addf %588, %589 : vector<1x128xf32>
    %593 = vector.broadcast %592 : vector<1x128xf32> to vector<16x128xf32>
    %594 = arith.mulf %591, %593 : vector<16x128xf32>
    %c14_278 = arith.constant 14 : index
    %c0_279 = arith.constant 0 : index
    %c0_280 = arith.constant 0 : index
    %595 = vector.load %arg4[%c14_278, %c0_279, %c0_280] : memref<16x16x128xf32, #tpu.memory_space<vmem>>, vector<1x16x128xf32>
    %596 = vector.shape_cast %595 : vector<1x16x128xf32> to vector<16x128xf32>
    %597 = vector.broadcast %589 : vector<1x128xf32> to vector<16x128xf32>
    %598 = arith.mulf %597, %596 : vector<16x128xf32>
    %599 = arith.subf %594, %598 : vector<16x128xf32>
    %600 = arith.addf %581, %599 : vector<16x128xf32>
    %c14_281 = arith.constant 14 : index
    %c0_282 = arith.constant 0 : index
    %c0_283 = arith.constant 0 : index
    %601 = vector.load %arg5[%c14_281, %c0_282, %c0_283] : memref<16x16x128xf32, #tpu.memory_space<vmem>>, vector<1x16x128xf32>
    %602 = vector.shape_cast %601 : vector<1x16x128xf32> to vector<16x128xf32>
    %603 = vector.broadcast %588 : vector<1x128xf32> to vector<16x128xf32>
    %604 = arith.mulf %603, %602 : vector<16x128xf32>
    %605 = arith.addf %594, %604 : vector<16x128xf32>
    %606 = arith.addf %587, %605 : vector<16x128xf32>
    %607 = vector.extract_strided_slice %317 {offsets = [15, 0], sizes = [1, 128], strides = [1, 1]} : vector<16x128xf32> to vector<1x128xf32>
    %608 = vector.extract_strided_slice %319 {offsets = [15, 0], sizes = [1, 128], strides = [1, 1]} : vector<16x128xf32> to vector<1x128xf32>
    %c15_284 = arith.constant 15 : index
    %c0_285 = arith.constant 0 : index
    %c0_286 = arith.constant 0 : index
    %609 = vector.load %arg3[%c15_284, %c0_285, %c0_286] : memref<16x16x128xf32, #tpu.memory_space<vmem>>, vector<1x16x128xf32>
    %610 = vector.shape_cast %609 : vector<1x16x128xf32> to vector<16x128xf32>
    %611 = arith.addf %607, %608 : vector<1x128xf32>
    %612 = vector.broadcast %611 : vector<1x128xf32> to vector<16x128xf32>
    %613 = arith.mulf %610, %612 : vector<16x128xf32>
    %c15_287 = arith.constant 15 : index
    %c0_288 = arith.constant 0 : index
    %c0_289 = arith.constant 0 : index
    %614 = vector.load %arg4[%c15_287, %c0_288, %c0_289] : memref<16x16x128xf32, #tpu.memory_space<vmem>>, vector<1x16x128xf32>
    %615 = vector.shape_cast %614 : vector<1x16x128xf32> to vector<16x128xf32>
    %616 = vector.broadcast %608 : vector<1x128xf32> to vector<16x128xf32>
    %617 = arith.mulf %616, %615 : vector<16x128xf32>
    %618 = arith.subf %613, %617 : vector<16x128xf32>
    %619 = arith.addf %600, %618 : vector<16x128xf32>
    %c15_290 = arith.constant 15 : index
    %c0_291 = arith.constant 0 : index
    %c0_292 = arith.constant 0 : index
    %620 = vector.load %arg5[%c15_290, %c0_291, %c0_292] : memref<16x16x128xf32, #tpu.memory_space<vmem>>, vector<1x16x128xf32>
    %621 = vector.shape_cast %620 : vector<1x16x128xf32> to vector<16x128xf32>
    %622 = vector.broadcast %607 : vector<1x128xf32> to vector<16x128xf32>
    %623 = arith.mulf %622, %621 : vector<16x128xf32>
    %624 = arith.addf %613, %623 : vector<16x128xf32>
    %625 = arith.addf %606, %624 : vector<16x128xf32>
    %c1_293 = arith.constant 1 : index
    %c0_294 = arith.constant 0 : index
    %c0_295 = arith.constant 0 : index
    %626 = vector.load %arg6[%c1_293, %c0_294, %c0_295] : memref<2x16x128xf32, #tpu.memory_space<vmem>>, vector<1x16x128xf32>
    %627 = vector.shape_cast %626 : vector<1x16x128xf32> to vector<16x128xf32>
    %628 = vector.shape_cast %619 : vector<16x128xf32> to vector<1x16x128xf32>
    tpu.vector_store %arg6[%c1_293, %c0_294, %c0_295], %628 {strides = array<i32>} : memref<2x16x128xf32, #tpu.memory_space<vmem>>, vector<1x16x128xf32>,
    %c1_296 = arith.constant 1 : index
    %c0_297 = arith.constant 0 : index
    %c0_298 = arith.constant 0 : index
    %629 = vector.load %arg7[%c1_296, %c0_297, %c0_298] : memref<2x16x128xf32, #tpu.memory_space<vmem>>, vector<1x16x128xf32>
    %630 = vector.shape_cast %629 : vector<1x16x128xf32> to vector<16x128xf32>
    %631 = vector.shape_cast %625 : vector<16x128xf32> to vector<1x16x128xf32>
    tpu.vector_store %arg7[%c1_296, %c0_297, %c0_298], %631 {strides = array<i32>} : memref<2x16x128xf32, #tpu.memory_space<vmem>>, vector<1x16x128xf32>,
    return
  }
  func.func @transform_0(%arg0: i32) -> (i32, i32, i32) {
    %c0_i32 = arith.constant 0 : i32
    %c0_i32_0 = arith.constant 0 : i32
    %c0_i32_1 = arith.constant 0 : i32
    return %c0_i32, %c0_i32_0, %arg0 : i32, i32, i32
  }
  func.func @transform_1(%arg0: i32) -> (i32, i32, i32) {
    %c0_i32 = arith.constant 0 : i32
    %c0_i32_0 = arith.constant 0 : i32
    %c0_i32_1 = arith.constant 0 : i32
    return %c0_i32, %c0_i32_0, %arg0 : i32, i32, i32
  }
  func.func @transform_2(%arg0: i32) -> (i32, i32, i32) {
    %c0_i32 = arith.constant 0 : i32
    %c0_i32_0 = arith.constant 0 : i32
    %c0_i32_1 = arith.constant 0 : i32
    return %c0_i32, %c0_i32_0, %arg0 : i32, i32, i32
  }
  func.func @transform_3(%arg0: i32) -> (i32, i32, i32) {
    %c0_i32 = arith.constant 0 : i32
    %c0_i32_0 = arith.constant 0 : i32
    %c0_i32_1 = arith.constant 0 : i32
    return %c0_i32, %c0_i32_0, %arg0 : i32, i32, i32
  }
  func.func @transform_4(%arg0: i32) -> (i32, i32, i32) {
    %c0_i32 = arith.constant 0 : i32
    %c0_i32_0 = arith.constant 0 : i32
    %c0_i32_1 = arith.constant 0 : i32
    return %c0_i32, %c0_i32_0, %arg0 : i32, i32, i32
  }
  func.func @transform_5(%arg0: i32) -> (i32, i32, i32) {
    %c0_i32 = arith.constant 0 : i32
    %c0_i32_0 = arith.constant 0 : i32
    %c0_i32_1 = arith.constant 0 : i32
    return %c0_i32, %c0_i32_0, %arg0 : i32, i32, i32
  }
  func.func @transform_6(%arg0: i32) -> (i32, i32, i32) {
    %c0_i32 = arith.constant 0 : i32
    %c0_i32_0 = arith.constant 0 : i32
    %c0_i32_1 = arith.constant 0 : i32
    return %c0_i32, %c0_i32_0, %arg0 : i32, i32, i32
  }
}

module attributes {stable_mosaic.version = 11 : i64} {
  func.func @_merge_cf_kernel(%arg0: i32, %arg1: memref<16x768xf32, #tpu.memory_space<vmem>>, %arg2: memref<16x768xf32, #tpu.memory_space<vmem>>, %arg3: memref<16x16xf32, #tpu.memory_space<vmem>>, %arg4: memref<16x1xf32, #tpu.memory_space<vmem>>, %arg5: memref<16x768xf32, #tpu.memory_space<vmem>>) attributes {dimension_semantics = [#tpu.dimension_semantics<parallel>], iteration_bounds = array<i64: 1>, scalar_prefetch = 0 : i64, scratch_operands = 0 : i64, tpu.core_type = #tpu.core_type<tc>, window_params = [{transform_indices = @transform_0, window_bounds = array<i64: 16, 768>}, {transform_indices = @transform_1, window_bounds = array<i64: 16, 768>}, {pipeline_mode = #tpu.pipeline_mode<synchronous>, transform_indices = @transform_2, window_bounds = array<i64: 16, 16>}, {pipeline_mode = #tpu.pipeline_mode<synchronous>, transform_indices = @transform_3, window_bounds = array<i64: 16, 1>}, {transform_indices = @transform_4, window_bounds = array<i64: 16, 768>}]} {
    %c0 = arith.constant 0 : index
    %c0_0 = arith.constant 0 : index
    %0 = vector.load %arg3[%c0, %c0_0] : memref<16x16xf32, #tpu.memory_space<vmem>>, vector<16x16xf32>
    %c0_1 = arith.constant 0 : index
    %c0_2 = arith.constant 0 : index
    %1 = vector.load %arg2[%c0_1, %c0_2] : memref<16x768xf32, #tpu.memory_space<vmem>>, vector<16x768xf32>
    %cst = arith.constant dense<0.000000e+00> : vector<16x768xf32>
    %2 = tpu.matmul %0, %1, %cst {dimension_numbers = #tpu.dot_dimension_numbers<[1], [0], [0], [1], [0, 0, 1, 1], [], []>} : vector<16x16xf32>, vector<16x768xf32>, vector<16x768xf32> -> vector<16x768xf32>
    %c0_3 = arith.constant 0 : index
    %c0_4 = arith.constant 0 : index
    %3 = vector.load %arg4[%c0_3, %c0_4] : memref<16x1xf32, #tpu.memory_space<vmem>>, vector<16x1xf32>
    %4 = vector.broadcast %3 : vector<16x1xf32> to vector<16x768xf32>
    %5 = arith.addf %2, %4 : vector<16x768xf32>
    %c0_5 = arith.constant 0 : index
    %c0_6 = arith.constant 0 : index
    %6 = vector.load %arg1[%c0_5, %c0_6] : memref<16x768xf32, #tpu.memory_space<vmem>>, vector<16x768xf32>
    %7 = arith.addf %5, %6 : vector<16x768xf32>
    %cst_7 = arith.constant 5.000000e-01 : f32
    %8 = vector.broadcast %cst_7 : f32 to vector<16x768xf32>
    %9 = arith.mulf %8, %7 : vector<16x768xf32>
    %cst_8 = arith.constant 0.707106769 : f32
    %10 = vector.broadcast %cst_8 : f32 to vector<16x768xf32>
    %11 = arith.mulf %7, %10 : vector<16x768xf32>
    %12 = math.erf %11 : vector<16x768xf32>
    %cst_9 = arith.constant 1.000000e+00 : f32
    %13 = vector.broadcast %cst_9 : f32 to vector<16x768xf32>
    %14 = arith.addf %13, %12 : vector<16x768xf32>
    %15 = arith.mulf %9, %14 : vector<16x768xf32>
    %c0_10 = arith.constant 0 : index
    %c0_11 = arith.constant 0 : index
    %16 = vector.load %arg5[%c0_10, %c0_11] : memref<16x768xf32, #tpu.memory_space<vmem>>, vector<16x768xf32>
    tpu.vector_store %arg5[%c0_10, %c0_11], %15 {strides = array<i32>} : memref<16x768xf32, #tpu.memory_space<vmem>>, vector<16x768xf32>,
    return
  }
  func.func @transform_0(%arg0: i32) -> (i32, i32) {
    %c0_i32 = arith.constant 0 : i32
    %c0_i32_0 = arith.constant 0 : i32
    return %c0_i32, %arg0 : i32, i32
  }
  func.func @transform_1(%arg0: i32) -> (i32, i32) {
    %c0_i32 = arith.constant 0 : i32
    %c0_i32_0 = arith.constant 0 : i32
    return %c0_i32, %arg0 : i32, i32
  }
  func.func @transform_2(%arg0: i32) -> (i32, i32) {
    %c0_i32 = arith.constant 0 : i32
    %c0_i32_0 = arith.constant 0 : i32
    %c0_i32_1 = arith.constant 0 : i32
    return %c0_i32, %c0_i32_0 : i32, i32
  }
  func.func @transform_3(%arg0: i32) -> (i32, i32) {
    %c0_i32 = arith.constant 0 : i32
    %c0_i32_0 = arith.constant 0 : i32
    %c0_i32_1 = arith.constant 0 : i32
    return %c0_i32, %c0_i32_0 : i32, i32
  }
  func.func @transform_4(%arg0: i32) -> (i32, i32) {
    %c0_i32 = arith.constant 0 : i32
    %c0_i32_0 = arith.constant 0 : i32
    return %c0_i32, %arg0 : i32, i32
  }
}

module attributes {stable_mosaic.version = 11 : i64} {
  func.func @_head_kernel(%arg0: i32, %arg1: memref<16x768xf32, #tpu.memory_space<vmem>>, %arg2: memref<128x16xf32, #tpu.memory_space<vmem>>, %arg3: memref<128x1xf32, #tpu.memory_space<vmem>>, %arg4: memref<1x128xf32, #tpu.memory_space<vmem>>, %arg5: memref<1x1xf32, #tpu.memory_space<vmem>>, %arg6: memref<1x768xf32, #tpu.memory_space<vmem>>) attributes {dimension_semantics = [#tpu.dimension_semantics<parallel>], iteration_bounds = array<i64: 1>, scalar_prefetch = 0 : i64, scratch_operands = 0 : i64, tpu.core_type = #tpu.core_type<tc>, window_params = [{transform_indices = @transform_0, window_bounds = array<i64: 16, 768>}, {pipeline_mode = #tpu.pipeline_mode<synchronous>, transform_indices = @transform_1, window_bounds = array<i64: 128, 16>}, {pipeline_mode = #tpu.pipeline_mode<synchronous>, transform_indices = @transform_2, window_bounds = array<i64: 128, 1>}, {pipeline_mode = #tpu.pipeline_mode<synchronous>, transform_indices = @transform_3, window_bounds = array<i64: 1, 128>}, {pipeline_mode = #tpu.pipeline_mode<synchronous>, transform_indices = @transform_4, window_bounds = array<i64: 1, 1>}, {transform_indices = @transform_5, window_bounds = array<i64: 1, 768>}]} {
    %c0 = arith.constant 0 : index
    %c0_0 = arith.constant 0 : index
    %0 = vector.load %arg2[%c0, %c0_0] : memref<128x16xf32, #tpu.memory_space<vmem>>, vector<128x16xf32>
    %c0_1 = arith.constant 0 : index
    %c0_2 = arith.constant 0 : index
    %1 = vector.load %arg1[%c0_1, %c0_2] : memref<16x768xf32, #tpu.memory_space<vmem>>, vector<16x768xf32>
    %cst = arith.constant dense<0.000000e+00> : vector<128x768xf32>
    %2 = tpu.matmul %0, %1, %cst {dimension_numbers = #tpu.dot_dimension_numbers<[1], [0], [0], [1], [0, 0, 1, 1], [], []>} : vector<128x16xf32>, vector<16x768xf32>, vector<128x768xf32> -> vector<128x768xf32>
    %c0_3 = arith.constant 0 : index
    %c0_4 = arith.constant 0 : index
    %3 = vector.load %arg3[%c0_3, %c0_4] : memref<128x1xf32, #tpu.memory_space<vmem>>, vector<128x1xf32>
    %4 = vector.broadcast %3 : vector<128x1xf32> to vector<128x768xf32>
    %5 = arith.addf %2, %4 : vector<128x768xf32>
    %cst_5 = arith.constant 5.000000e-01 : f32
    %6 = vector.broadcast %cst_5 : f32 to vector<128x768xf32>
    %7 = arith.mulf %6, %5 : vector<128x768xf32>
    %cst_6 = arith.constant 0.707106769 : f32
    %8 = vector.broadcast %cst_6 : f32 to vector<128x768xf32>
    %9 = arith.mulf %5, %8 : vector<128x768xf32>
    %10 = math.erf %9 : vector<128x768xf32>
    %cst_7 = arith.constant 1.000000e+00 : f32
    %11 = vector.broadcast %cst_7 : f32 to vector<128x768xf32>
    %12 = arith.addf %11, %10 : vector<128x768xf32>
    %13 = arith.mulf %7, %12 : vector<128x768xf32>
    %c0_8 = arith.constant 0 : index
    %c0_9 = arith.constant 0 : index
    %14 = vector.load %arg4[%c0_8, %c0_9] : memref<1x128xf32, #tpu.memory_space<vmem>>, vector<1x128xf32>
    %cst_10 = arith.constant dense<0.000000e+00> : vector<1x768xf32>
    %15 = tpu.matmul %14, %13, %cst_10 {dimension_numbers = #tpu.dot_dimension_numbers<[1], [0], [0], [1], [0, 0, 1, 1], [], []>} : vector<1x128xf32>, vector<128x768xf32>, vector<1x768xf32> -> vector<1x768xf32>
    %c0_11 = arith.constant 0 : index
    %c0_12 = arith.constant 0 : index
    %16 = vector.load %arg5[%c0_11, %c0_12] : memref<1x1xf32, #tpu.memory_space<vmem>>, vector<1x1xf32>
    %17 = vector.broadcast %16 : vector<1x1xf32> to vector<1x768xf32>
    %18 = arith.addf %15, %17 : vector<1x768xf32>
    %c0_13 = arith.constant 0 : index
    %c0_14 = arith.constant 0 : index
    %19 = vector.load %arg6[%c0_13, %c0_14] : memref<1x768xf32, #tpu.memory_space<vmem>>, vector<1x768xf32>
    tpu.vector_store %arg6[%c0_13, %c0_14], %18 {strides = array<i32>} : memref<1x768xf32, #tpu.memory_space<vmem>>, vector<1x768xf32>,
    return
  }
  func.func @transform_0(%arg0: i32) -> (i32, i32) {
    %c0_i32 = arith.constant 0 : i32
    %c0_i32_0 = arith.constant 0 : i32
    return %c0_i32, %arg0 : i32, i32
  }
  func.func @transform_1(%arg0: i32) -> (i32, i32) {
    %c0_i32 = arith.constant 0 : i32
    %c0_i32_0 = arith.constant 0 : i32
    %c0_i32_1 = arith.constant 0 : i32
    return %c0_i32, %c0_i32_0 : i32, i32
  }
  func.func @transform_2(%arg0: i32) -> (i32, i32) {
    %c0_i32 = arith.constant 0 : i32
    %c0_i32_0 = arith.constant 0 : i32
    %c0_i32_1 = arith.constant 0 : i32
    return %c0_i32, %c0_i32_0 : i32, i32
  }
  func.func @transform_3(%arg0: i32) -> (i32, i32) {
    %c0_i32 = arith.constant 0 : i32
    %c0_i32_0 = arith.constant 0 : i32
    %c0_i32_1 = arith.constant 0 : i32
    return %c0_i32, %c0_i32_0 : i32, i32
  }
  func.func @transform_4(%arg0: i32) -> (i32, i32) {
    %c0_i32 = arith.constant 0 : i32
    %c0_i32_0 = arith.constant 0 : i32
    %c0_i32_1 = arith.constant 0 : i32
    return %c0_i32, %c0_i32_0 : i32, i32
  }
  func.func @transform_5(%arg0: i32) -> (i32, i32) {
    %c0_i32 = arith.constant 0 : i32
    %c0_i32_0 = arith.constant 0 : i32
    return %c0_i32, %arg0 : i32, i32
  }
}

</mosaic_0001>

<llo_original>
// kernel: fno3d_forward.8
$region0: #{fno3d_forward.8}
  #allocation0 [shape = 'u32[]', space=smem, size = 0x4, offset = 0x4, fixed_abs, tag = 'smem constant byte address 0x4 - core index']
  #allocation1 [shape = 'u32[144,128]{1,0:T(1,128)}', space=vmem, size = 0x12000, scoped, tag = 'internal scratch']
  %s0 = inlined_call_operand.vmem [shape: f32[13,768], index: 0, kind: input, shape index: {}]
  %s1 = inlined_call_operand.vmem [shape: f32[16,13], index: 1, kind: input, shape index: {}]
  %s2 = inlined_call_operand.vmem [shape: f32[16,1], index: 2, kind: input, shape index: {}]
  %s3 = inlined_call_operand.vmem [shape: f32[16,768], index: 3, kind: output, shape index: {}]
  %s4 = sld [smem:[#allocation0]]
  $region22: #{fno3d_forward.8} parent=0
    _
  %s6 = ssub.s32 1, %s4
  %s7 = scalar_select 0, %s6, %s4
  // Predicated region
  $region2: #{fno3d_forward.8} parent=0 // pred_check
    _
  $region3: #{fno3d_forward.8} parent=0 // pred_check_branch
    %9 = sbr.rel (0) target = $region5
  $region4: #{fno3d_forward.8} parent=0 // pred_region
    _
  $region5: #{fno3d_forward.8} parent=0 // pred_fallthru
    _
  // Predicated region
  $region6: #{fno3d_forward.8} parent=0 // pred_check
    _
  $region7: #{fno3d_forward.8} parent=0 // pred_check_branch
    %11 = sbr.rel (0) target = $region9
  $region8: #{fno3d_forward.8} parent=0 // pred_region
    _
  $region9: #{fno3d_forward.8} parent=0 // pred_fallthru
    _
  // Predicated region
  $region10: #{fno3d_forward.8} parent=0 // pred_check
    _
  $region11: #{fno3d_forward.8} parent=0 // pred_check_branch
    %13 = sbr.rel (0) target = $region13
  $region12: #{fno3d_forward.8} parent=0 // pred_region
    _
  $region13: #{fno3d_forward.8} parent=0 // pred_fallthru
    _
  %v14 = vld [vmem:[%s1] sm:$0xff]
  %v15 = vld [vmem:[%s1 + $0x8] sm:$0xff]
  %v16 = vld [vmem:[%s0] sm:$0xff]
  %v17 = vld [vmem:[%s0 + $0x8] sm:$0xff]
  %v18 = vld [vmem:[%s0 + $0x10] sm:$0xff]
  %v19 = vld [vmem:[%s0 + $0x18] sm:$0xff]
  %v20 = vld [vmem:[%s0 + $0x20] sm:$0xff]
  %v21 = vld [vmem:[%s0 + $0x28] sm:$0xff]
  %v22 = vld [vmem:[%s0 + $0x30] sm:$0x1f]
  %v23 = vld [vmem:[%s0 + $0x38] sm:$0x1f]
  %v24 = vld [vmem:[%s0 + $0x40] sm:$0x1f]
  %v25 = vld [vmem:[%s0 + $0x48] sm:$0x1f]
  %v26 = vld [vmem:[%s0 + $0x50] sm:$0x1f]
  %v27 = vld [vmem:[%s0 + $0x58] sm:$0x1f]
  %v28 = vld [vmem:[%s2] sm:$0xff]
  %v29 = vld [vmem:[%s2 + $0x8] sm:$0xff]
  %31 = vset.pattern.permute.xlu0 0
  %32 = vperm.xlu0 %31, %v28
  %v33 = vpop.permute.xlu0 %32
  %36 = vset.pattern.permute.xlu0 0
  %37 = vperm.xlu0 %36, %v29
  %v38 = vpop.permute.xlu0 %37
  %vm40 = vcmask 105472
  %v42 = vsel %vm40, %v14, 0
  %v45 = vsel %vm40, %v15, 0
  %vm47 = vcmask 1044480
  %v49 = vsel %vm47, %v22, 0
  %v52 = vsel %vm47, %v23, 0
  %v55 = vsel %vm47, %v24, 0
  %v58 = vsel %vm47, %v25, 0
  %v61 = vsel %vm47, %v26, 0
  %v64 = vsel %vm47, %v27, 0
  %66 = vmatprep.subr.mxu0 0.0
  %67 = vmatpush1.msra.mxu0 0.0
  %68 = vmatprep.subr.mxu0 0.0
  %69 = vmatpush1.msra.mxu0 0.0
  %70 = vmatprep.subr.mxu0 0.0
  %71 = vmatpush1.msra.mxu0 0.0
  %72 = vmatprep.subr.mxu0 0.0
  %73 = vmatpush1.msra.mxu0 0.0
  %74 = vmatprep.subr.mxu0 0.0
  %75 = vmatpush1.msra.mxu0 0.0
  %76 = vmatprep.subr.mxu0 0.0
  %77 = vmatpush1.msra.mxu0 0.0
  %78 = vmatprep.subr.mxu0 0.0
  %79 = vmatpush1.msra.mxu0 0.0
  %80 = vmatprep.subr.mxu0 0.0
  %81 = vmatpush1.msra.mxu0 0.0
  %82 = vmatprep.subr.mxu0 0.0
  %83 = vmatpush1.msra.mxu0 0.0
  %84 = vmatprep.subr.mxu0 0.0
  %85 = vmatpush1.msra.mxu0 0.0
  %86 = vmatprep.subr.mxu0 0.0
  %87 = vmatpush1.msra.mxu0 0.0
  %88 = vmatprep.subr.mxu0 0.0
  %89 = vmatpush1.msra.mxu0 0.0
  %90 = vmatprep.subr.mxu0 0.0
  %91 = vmatpush1.msra.mxu0 0.0
  %92 = vmatprep.subr.mxu0 0.0
  %93 = vmatpush1.msra.mxu0 0.0
  %94 = vmatprep.subr.mxu0 %v52
  %95 = vmatpush1.msra.mxu0 %v49
  %96 = vmatprep.subr.mxu0 %v17
  %97 = vmatpush1.msra.mxu0 %v16
  %98 = vmatprep.subr.mxu0 0.0
  %99 = vmatpush2.msra.mxu0 0.0
  %100 = vmatprep.subr.mxu0 0.0
  %101 = vmatpush2.msra.mxu0 0.0
  %102 = vmatprep.subr.mxu0 0.0
  %103 = vmatpush2.msra.mxu0 0.0
  %104 = vmatprep.subr.mxu0 0.0
  %105 = vmatpush2.msra.mxu0 0.0
  %106 = vmatprep.subr.mxu0 0.0
  %107 = vmatpush2.msra.mxu0 0.0
  %108 = vmatprep.subr.mxu0 0.0
  %109 = vmatpush2.msra.mxu0 0.0
  %110 = vmatprep.subr.mxu0 0.0
  %111 = vmatpush2.msra.mxu0 0.0
  %112 = vmatprep.subr.mxu0 0.0
  %113 = vmatpush2.msra.mxu0 0.0
  %114 = vmatprep.subr.mxu0 0.0
  %115 = vmatpush2.msra.mxu0 0.0
  %116 = vmatprep.subr.mxu0 0.0
  %117 = vmatpush2.msra.mxu0 0.0
  %118 = vmatprep.subr.mxu0 0.0
  %119 = vmatpush2.msra.mxu0 0.0
  %120 = vmatprep.subr.mxu0 0.0
  %121 = vmatpush2.msra.mxu0 0.0
  %122 = vmatprep.subr.mxu0 0.0
  %123 = vmatpush2.msra.mxu0 0.0
  %124 = vmatprep.subr.mxu0 0.0
  %125 = vmatpush2.msra.mxu0 0.0
  %126 = vmatprep.subr.mxu0 0.0
  %127 = vmatpush2.msra.mxu0 0.0
  %128 = vmatprep.subr.mxu0 0.0
  %129 = vmatpush2.msra.mxu0 0.0
  %130 = vmatprep.mubr.f32.mxu0 0.0
  %131 = vmatmul.mubr.f32.gmra.mxu0 %v42
  %v132 = vpop.f32.mrf.mxu0
  %v133 = vadd.f32 %v33, %v132
  %v134 = vpop.f32.mrf.mxu0
  %v135 = vadd.f32 %v33, %v134
  %136 = vmatprep.mubr.f32.mxu0 0.0
  %137 = vmatmul.mubr.f32.gmra.mxu0 %v45
  %v138 = vpop.f32.mrf.mxu0
  %v139 = vadd.f32 %v38, %v138
  %v140 = vpop.f32.mrf.mxu0
  %v141 = vadd.f32 %v38, %v140
  %142 = vdwg.mxu0
  %143 = vmatprep.subr.mxu0 0.0
  %144 = vmatpush1.msra.mxu0 0.0
  %145 = vmatprep.subr.mxu0 0.0
  %146 = vmatpush1.msra.mxu0 0.0
  %147 = vmatprep.subr.mxu0 0.0
  %148 = vmatpush1.msra.mxu0 0.0
  %149 = vmatprep.subr.mxu0 0.0
  %150 = vmatpush1.msra.mxu0 0.0
  %151 = vmatprep.subr.mxu0 0.0
  %152 = vmatpush1.msra.mxu0 0.0
  %153 = vmatprep.subr.mxu0 0.0
  %154 = vmatpush1.msra.mxu0 0.0
  %155 = vmatprep.subr.mxu0 0.0
  %156 = vmatpush1.msra.mxu0 0.0
  %157 = vmatprep.subr.mxu0 0.0
  %158 = vmatpush1.msra.mxu0 0.0
  %159 = vmatprep.subr.mxu0 0.0
  %160 = vmatpush1.msra.mxu0 0.0
  %161 = vmatprep.subr.mxu0 0.0
  %162 = vmatpush1.msra.mxu0 0.0
  %163 = vmatprep.subr.mxu0 0.0
  %164 = vmatpush1.msra.mxu0 0.0
  %165 = vmatprep.subr.mxu0 0.0
  %166 = vmatpush1.msra.mxu0 0.0
  %167 = vmatprep.subr.mxu0 0.0
  %168 = vmatpush1.msra.mxu0 0.0
  %169 = vmatprep.subr.mxu0 0.0
  %170 = vmatpush1.msra.mxu0 0.0
  %171 = vmatprep.subr.mxu0 %v58
  %172 = vmatpush1.msra.mxu0 %v55
  %173 = vmatprep.subr.mxu0 %v19
  %174 = vmatpush1.msra.mxu0 %v18
  %175 = vmatprep.subr.mxu0 0.0
  %176 = vmatpush2.msra.mxu0 0.0
  %177 = vmatprep.subr.mxu0 0.0
  %178 = vmatpush2.msra.mxu0 0.0
  %179 = vmatprep.subr.mxu0 0.0
  %180 = vmatpush2.msra.mxu0 0.0
  %181 = vmatprep.subr.mxu0 0.0
  %182 = vmatpush2.msra.mxu0 0.0
  %183 = vmatprep.subr.mxu0 0.0
  %184 = vmatpush2.msra.mxu0 0.0
  %185 = vmatprep.subr.mxu0 0.0
  %186 = vmatpush2.msra.mxu0 0.0
  %187 = vmatprep.subr.mxu0 0.0
  %188 = vmatpush2.msra.mxu0 0.0
  %189 = vmatprep.subr.mxu0 0.0
  %190 = vmatpush2.msra.mxu0 0.0
  %191 = vmatprep.subr.mxu0 0.0
  %192 = vmatpush2.msra.mxu0 0.0
  %193 = vmatprep.subr.mxu0 0.0
  %194 = vmatpush2.msra.mxu0 0.0
  %195 = vmatprep.subr.mxu0 0.0
  %196 = vmatpush2.msra.mxu0 0.0
  %197 = vmatprep.subr.mxu0 0.0
  %198 = vmatpush2.msra.mxu0 0.0
  %199 = vmatprep.subr.mxu0 0.0
  %200 = vmatpush2.msra.mxu0 0.0
  %201 = vmatprep.subr.mxu0 0.0
  %202 = vmatpush2.msra.mxu0 0.0
  %203 = vmatprep.subr.mxu0 0.0
  %204 = vmatpush2.msra.mxu0 0.0
  %205 = vmatprep.subr.mxu0 0.0
  %206 = vmatpush2.msra.mxu0 0.0
  %207 = vmatprep.mubr.f32.mxu0 0.0
  %208 = vmatmul.mubr.f32.gmra.mxu0 %v42
  %v209 = vpop.f32.mrf.mxu0
  %v210 = vadd.f32 %v33, %v209
  %v211 = vpop.f32.mrf.mxu0
  %v212 = vadd.f32 %v33, %v211
  %213 = vmatprep.mubr.f32.mxu0 0.0
  %214 = vmatmul.mubr.f32.gmra.mxu0 %v45
  %v215 = vpop.f32.mrf.mxu0
  %v216 = vadd.f32 %v38, %v215
  %v217 = vpop.f32.mrf.mxu0
  %v218 = vadd.f32 %v38, %v217
  %219 = vdwg.mxu0
  %220 = vmatprep.subr.mxu0 0.0
  %221 = vmatpush1.msra.mxu0 0.0
  %222 = vmatprep.subr.mxu0 0.0
  %223 = vmatpush1.msra.mxu0 0.0
  %224 = vmatprep.subr.mxu0 0.0
  %225 = vmatpush1.msra.mxu0 0.0
  %226 = vmatprep.subr.mxu0 0.0
  %227 = vmatpush1.msra.mxu0 0.0
  %228 = vmatprep.subr.mxu0 0.0
  %229 = vmatpush1.msra.mxu0 0.0
  %230 = vmatprep.subr.mxu0 0.0
  %231 = vmatpush1.msra.mxu0 0.0
  %232 = vmatprep.subr.mxu0 0.0
  %233 = vmatpush1.msra.mxu0 0.0
  %234 = vmatprep.subr.mxu0 0.0
  %235 = vmatpush1.msra.mxu0 0.0
  %236 = vmatprep.subr.mxu0 0.0
  %237 = vmatpush1.msra.mxu0 0.0
  %238 = vmatprep.subr.mxu0 0.0
  %239 = vmatpush1.msra.mxu0 0.0
  %240 = vmatprep.subr.mxu0 0.0
  %241 = vmatpush1.msra.mxu0 0.0
  %242 = vmatprep.subr.mxu0 0.0
  %243 = vmatpush1.msra.mxu0 0.0
  %244 = vmatprep.subr.mxu0 0.0
  %245 = vmatpush1.msra.mxu0 0.0
  %246 = vmatprep.subr.mxu0 0.0
  %247 = vmatpush1.msra.mxu0 0.0
  %248 = vmatprep.subr.mxu0 %v64
  %249 = vmatpush1.msra.mxu0 %v61
  %250 = vmatprep.subr.mxu0 %v21
  %251 = vmatpush1.msra.mxu0 %v20
  %252 = vmatprep.subr.mxu0 0.0
  %253 = vmatpush2.msra.mxu0 0.0
  %254 = vmatprep.subr.mxu0 0.0
  %255 = vmatpush2.msra.mxu0 0.0
  %256 = vmatprep.subr.mxu0 0.0
  %257 = vmatpush2.msra.mxu0 0.0
  %258 = vmatprep.subr.mxu0 0.0
  %259 = vmatpush2.msra.mxu0 0.0
  %260 = vmatprep.subr.mxu0 0.0
  %261 = vmatpush2.msra.mxu0 0.0
  %262 = vmatprep.subr.mxu0 0.0
  %263 = vmatpush2.msra.mxu0 0.0
  %264 = vmatprep.subr.mxu0 0.0
  %265 = vmatpush2.msra.mxu0 0.0
  %266 = vmatprep.subr.mxu0 0.0
  %267 = vmatpush2.msra.mxu0 0.0
  %268 = vmatprep.subr.mxu0 0.0
  %269 = vmatpush2.msra.mxu0 0.0
  %270 = vmatprep.subr.mxu0 0.0
  %271 = vmatpush2.msra.mxu0 0.0
  %272 = vmatprep.subr.mxu0 0.0
  %273 = vmatpush2.msra.mxu0 0.0
  %274 = vmatprep.subr.mxu0 0.0
  %275 = vmatpush2.msra.mxu0 0.0
  %276 = vmatprep.subr.mxu0 0.0
  %277 = vmatpush2.msra.mxu0 0.0
  %278 = vmatprep.subr.mxu0 0.0
  %279 = vmatpush2.msra.mxu0 0.0
  %280 = vmatprep.subr.mxu0 0.0
  %281 = vmatpush2.msra.mxu0 0.0
  %282 = vmatprep.subr.mxu0 0.0
  %283 = vmatpush2.msra.mxu0 0.0
  %284 = vmatprep.mubr.f32.mxu0 0.0
  %285 = vmatmul.mubr.f32.gmra.mxu0 %v42
  %v286 = vpop.f32.mrf.mxu0
  %v287 = vadd.f32 %v33, %v286
  %v288 = vpop.f32.mrf.mxu0
  %v289 = vadd.f32 %v33, %v288
  %290 = vmatprep.mubr.f32.mxu0 0.0
  %291 = vmatmul.mubr.f32.gmra.mxu0 %v45
  %v292 = vpop.f32.mrf.mxu0
  %v293 = vadd.f32 %v38, %v292
  %v294 = vpop.f32.mrf.mxu0
  %v295 = vadd.f32 %v38, %v294
  %296 = vdwg.mxu0
  %297 = vst [vmem:[%s3] sm:$0xff] %v133
  %298 = vst [vmem:[%s3 + $0x8] sm:$0xff] %v135
  %299 = vst [vmem:[%s3 + $0x10] sm:$0xff] %v210
  %300 = vst [vmem:[%s3 + $0x18] sm:$0xff] %v212
  %301 = vst [vmem:[%s3 + $0x20] sm:$0xff] %v287
  %302 = vst [vmem:[%s3 + $0x28] sm:$0xff] %v289
  %303 = vst [vmem:[%s3 + $0x30] sm:$0xff] %v139
  %304 = vst [vmem:[%s3 + $0x38] sm:$0xff] %v141
  %305 = vst [vmem:[%s3 + $0x40] sm:$0xff] %v216
  %306 = vst [vmem:[%s3 + $0x48] sm:$0xff] %v218
  %307 = vst [vmem:[%s3 + $0x50] sm:$0xff] %v293
  %308 = vst [vmem:[%s3 + $0x58] sm:$0xff] %v295
  // Predicated region
  $region14: #{fno3d_forward.8} parent=0 // pred_check
    _
  $region15: #{fno3d_forward.8} parent=0 // pred_check_branch
    %310 = sbr.rel (0) target = $region17
  $region16: #{fno3d_forward.8} parent=0 // pred_region
    _
  $region17: #{fno3d_forward.8} parent=0 // pred_fallthru
    _
  // Predicated region
  $region18: #{fno3d_forward.8} parent=0 // pred_check
    _
  $region19: #{fno3d_forward.8} parent=0 // pred_check_branch
    %312 = sbr.rel (0) target = $region21
  $region20: #{fno3d_forward.8} parent=0 // pred_region
    _
  $region21: #{fno3d_forward.8} parent=0 // pred_fallthru
    _

// kernel: fno3d_forward.9
$region0: #{fno3d_forward.9}
  #allocation0 [shape = 'u32[]', space=smem, size = 0x4, offset = 0x4, fixed_abs, tag = 'smem constant byte address 0x4 - core index']
  #allocation1 [shape = 'u32[144,128]{1,0:T(1,128)}', space=vmem, size = 0x12000, scoped, tag = 'internal scratch']
  %s0 = inlined_call_operand.vmem [shape: f32[2,16,256], index: 0, kind: input, shape index: {}]
  %s1 = inlined_call_operand.vmem [shape: f32[2,16,256], index: 1, kind: input, shape index: {}]
  %s2 = inlined_call_operand.vmem [shape: f32[16,16,256], index: 2, kind: input, shape index: {}]
  %s3 = inlined_call_operand.vmem [shape: f32[16,16,256], index: 3, kind: input, shape index: {}]
  %s4 = inlined_call_operand.vmem [shape: f32[16,16,256], index: 4, kind: input, shape index: {}]
  %s5 = inlined_call_operand.vmem [shape: f32[2,16,256], index: 5, kind: output, shape index: {0}]
  %s6 = inlined_call_operand.vmem [shape: f32[2,16,256], index: 6, kind: output, shape index: {1}]
  %7 = xla_tuple %s5, %s6
  %s8 = sld [smem:[#allocation0]]
  $region319: #{fno3d_forward.9} parent=0
    _
  %s10 = ssub.s32 1, %s8
  %s11 = scalar_select 0, %s10, %s8
  $region1: #{fno3d_forward.9} parent=0
    #allocation2 [shape = 'u8[32768]{0}', space=vmem, size = 0x8000, scoped, tag = 'input window, operand 0']
    #allocation3 [shape = 'u8[32768]{0}', space=vmem, size = 0x8000, scoped, tag = 'input window, operand 1']
    #allocation4 [shape = 'u8[262144]{0}', space=vmem, size = 0x40000, scoped, tag = 'input window, operand 2']
    #allocation5 [shape = 'u8[262144]{0}', space=vmem, size = 0x40000, scoped, tag = 'input window, operand 3']
    #allocation6 [shape = 'u8[262144]{0}', space=vmem, size = 0x40000, scoped, tag = 'input window, operand 4']
    #allocation7 [shape = 'u8[32768]{0}', space=vmem, size = 0x8000, scoped, tag = 'output window, operand 0']
    #allocation8 [shape = 'u8[32768]{0}', space=vmem, size = 0x8000, scoped, tag = 'output window, operand 1']
    loop: start=0, step=1, limit=4
    $region2: #{fno3d_forward.9} parent=1 // loop_pre_header
      _
    $region3: #{fno3d_forward.9} parent=1 // loop_header
      %s13 = sphi 0, %s17
      %p14 = scmp.ge.s32.totalorder %s13, 4
      %s23 = sphi 0, %s25
      %s26 = sphi 0, %s23
      %s27 = sphi 0, %s26
      %s43 = sphi 0, %s27
      %s49 = sphi 0, %s51
      %s52 = sphi 0, %s49
      %s53 = sphi 0, %s52
      %s69 = sphi 0, %s53
      %s75 = sphi 0, %s77
      %s78 = sphi 0, %s75
      %s79 = sphi 0, %s78
      %s95 = sphi 0, %s79
      %s101 = sphi 0, %s103
      %s104 = sphi 0, %s101
      %s105 = sphi 0, %s104
      %s121 = sphi 0, %s105
      %s127 = sphi 0, %s129
      %s130 = sphi 0, %s127
      %s131 = sphi 0, %s130
      %s147 = sphi 0, %s131
      %s153 = sphi 0, %s155
      %s156 = sphi 0, %s153
      %s157 = sphi 0, %s156
      %s173 = sphi 0, %s157
      %s179 = sphi 0, %s181
      %s182 = sphi 0, %s179
      %s183 = sphi 0, %s182
      %s199 = sphi 0, %s183
    $region4: #{fno3d_forward.9} parent=1 // loop_header_branch
      %16 = sbr.rel (%p14) target = $region8
    $region5: #{fno3d_forward.9} parent=1 // loop_body
      %s18 = ssub.s32 %s13, 1
      %s19 = ssub.s32 %s13, 2
      %s20 = sadd.s32 %s13, 1
      %s21 = ssub.s32 %s13, %s20
      %p22 = scmp.eq.s32.totalorder %s21, 0
      %s24 = sadd.s32 %s23, 1
      %s25 = scalar_select %p22, %s23, %s24
      %p28 = pneg %p22
      %p29 = scmp.eq.s32.totalorder %s13, 1
      %p30 = por %p28, %p29
      %p31 = scmp.ne.s32.totalorder %s23, %s26
      %p32 = scmp.eq.s32.totalorder %s13, 0
      %p33 = por %p31, %p32
      %p34 = scmp.ne.s32.totalorder %s23, %s26
      %p35 = scmp.eq.s32.totalorder %s18, 1
      %p36 = por %p34, %p35
      %p37 = scmp.ne.s32.totalorder %s26, %s27
      %p38 = scmp.eq.s32.totalorder %s18, 0
      %p39 = por %p37, %p38
      %p40 = scmp.ne.s32.totalorder %s26, %s27
      %p41 = scmp.eq.s32.totalorder %s19, 1
      %p42 = por %p40, %p41
      %p44 = scmp.ne.s32.totalorder %s27, %s43
      %p45 = scmp.eq.s32.totalorder %s19, 0
      %p46 = por %p44, %p45
      %s47 = ssub.s32 %s13, %s20
      %p48 = scmp.eq.s32.totalorder %s47, 0
      %s50 = sadd.s32 %s49, 1
      %s51 = scalar_select %p48, %s49, %s50
      %p54 = pneg %p48
      %p55 = scmp.eq.s32.totalorder %s13, 1
      %p56 = por %p54, %p55
      %p57 = scmp.ne.s32.totalorder %s49, %s52
      %p58 = scmp.eq.s32.totalorder %s13, 0
      %p59 = por %p57, %p58
      %p60 = scmp.ne.s32.totalorder %s49, %s52
      %p61 = scmp.eq.s32.totalorder %s18, 1
      %p62 = por %p60, %p61
      %p63 = scmp.ne.s32.totalorder %s52, %s53
      %p64 = scmp.eq.s32.totalorder %s18, 0
      %p65 = por %p63, %p64
      %p66 = scmp.ne.s32.totalorder %s52, %s53
      %p67 = scmp.eq.s32.totalorder %s19, 1
      %p68 = por %p66, %p67
      %p70 = scmp.ne.s32.totalorder %s53, %s69
      %p71 = scmp.eq.s32.totalorder %s19, 0
      %p72 = por %p70, %p71
      %s73 = ssub.s32 %s13, %s20
      %p74 = scmp.eq.s32.totalorder %s73, 0
      %s76 = sadd.s32 %s75, 1
      %s77 = scalar_select %p74, %s75, %s76
      %p80 = pneg %p74
      %p81 = scmp.eq.s32.totalorder %s13, 1
      %p82 = por %p80, %p81
      %p83 = scmp.ne.s32.totalorder %s75, %s78
      %p84 = scmp.eq.s32.totalorder %s13, 0
      %p85 = por %p83, %p84
      %p86 = scmp.ne.s32.totalorder %s75, %s78
      %p87 = scmp.eq.s32.totalorder %s18, 1
      %p88 = por %p86, %p87
      %p89 = scmp.ne.s32.totalorder %s78, %s79
      %p90 = scmp.eq.s32.totalorder %s18, 0
      %p91 = por %p89, %p90
      %p92 = scmp.ne.s32.totalorder %s78, %s79
      %p93 = scmp.eq.s32.totalorder %s19, 1
      %p94 = por %p92, %p93
      %p96 = scmp.ne.s32.totalorder %s79, %s95
      %p97 = scmp.eq.s32.totalorder %s19, 0
      %p98 = por %p96, %p97
      %s99 = ssub.s32 %s13, %s20
      %p100 = scmp.eq.s32.totalorder %s99, 0
      %s102 = sadd.s32 %s101, 1
      %s103 = scalar_select %p100, %s101, %s102
      %p106 = pneg %p100
      %p107 = scmp.eq.s32.totalorder %s13, 1
      %p108 = por %p106, %p107
      %p109 = scmp.ne.s32.totalorder %s101, %s104
      %p110 = scmp.eq.s32.totalorder %s13, 0
      %p111 = por %p109, %p110
      %p112 = scmp.ne.s32.totalorder %s101, %s104
      %p113 = scmp.eq.s32.totalorder %s18, 1
      %p114 = por %p112, %p113
      %p115 = scmp.ne.s32.totalorder %s104, %s105
      %p116 = scmp.eq.s32.totalorder %s18, 0
      %p117 = por %p115, %p116
      %p118 = scmp.ne.s32.totalorder %s104, %s105
      %p119 = scmp.eq.s32.totalorder %s19, 1
      %p120 = por %p118, %p119
      %p122 = scmp.ne.s32.totalorder %s105, %s121
      %p123 = scmp.eq.s32.totalorder %s19, 0
      %p124 = por %p122, %p123
      %s125 = ssub.s32 %s13, %s20
      %p126 = scmp.eq.s32.totalorder %s125, 0
      %s128 = sadd.s32 %s127, 1
      %s129 = scalar_select %p126, %s127, %s128
      %p132 = pneg %p126
      %p133 = scmp.eq.s32.totalorder %s13, 1
      %p134 = por %p132, %p133
      %p135 = scmp.ne.s32.totalorder %s127, %s130
      %p136 = scmp.eq.s32.totalorder %s13, 0
      %p137 = por %p135, %p136
      %p138 = scmp.ne.s32.totalorder %s127, %s130
      %p139 = scmp.eq.s32.totalorder %s18, 1
      %p140 = por %p138, %p139
      %p141 = scmp.ne.s32.totalorder %s130, %s131
      %p142 = scmp.eq.s32.totalorder %s18, 0
      %p143 = por %p141, %p142
      %p144 = scmp.ne.s32.totalorder %s130, %s131
      %p145 = scmp.eq.s32.totalorder %s19, 1
      %p146 = por %p144, %p145
      %p148 = scmp.ne.s32.totalorder %s131, %s147
      %p149 = scmp.eq.s32.totalorder %s19, 0
      %p150 = por %p148, %p149
      %s151 = ssub.s32 %s13, %s20
      %p152 = scmp.eq.s32.totalorder %s151, 0
      %s154 = sadd.s32 %s153, 1
      %s155 = scalar_select %p152, %s153, %s154
      %p158 = pneg %p152
      %p159 = scmp.eq.s32.totalorder %s13, 1
      %p160 = por %p158, %p159
      %p161 = scmp.ne.s32.totalorder %s153, %s156
      %p162 = scmp.eq.s32.totalorder %s13, 0
      %p163 = por %p161, %p162
      %p164 = scmp.ne.s32.totalorder %s153, %s156
      %p165 = scmp.eq.s32.totalorder %s18, 1
      %p166 = por %p164, %p165
      %p167 = scmp.ne.s32.totalorder %s156, %s157
      %p168 = scmp.eq.s32.totalorder %s18, 0
      %p169 = por %p167, %p168
      %p170 = scmp.ne.s32.totalorder %s156, %s157
      %p171 = scmp.eq.s32.totalorder %s19, 1
      %p172 = por %p170, %p171
      %p174 = scmp.ne.s32.totalorder %s157, %s173
      %p175 = scmp.eq.s32.totalorder %s19, 0
      %p176 = por %p174, %p175
      %s177 = ssub.s32 %s13, %s20
      %p178 = scmp.eq.s32.totalorder %s177, 0
      %s180 = sadd.s32 %s179, 1
      %s181 = scalar_select %p178, %s179, %s180
      %p184 = pneg %p178
      %p185 = scmp.eq.s32.totalorder %s13, 1
      %p186 = por %p184, %p185
      %p187 = scmp.ne.s32.totalorder %s179, %s182
      %p188 = scmp.eq.s32.totalorder %s13, 0
      %p189 = por %p187, %p188
      %p190 = scmp.ne.s32.totalorder %s179, %s182
      %p191 = scmp.eq.s32.totalorder %s18, 1
      %p192 = por %p190, %p191
      %p193 = scmp.ne.s32.totalorder %s182, %s183
      %p194 = scmp.eq.s32.totalorder %s18, 0
      %p195 = por %p193, %p194
      %p196 = scmp.ne.s32.totalorder %s182, %s183
      %p197 = scmp.eq.s32.totalorder %s19, 1
      %p198 = por %p196, %p197
      %p200 = scmp.ne.s32.totalorder %s183, %s199
      %p201 = scmp.eq.s32.totalorder %s19, 0
      %p202 = por %p200, %p201
      %p203 = scmp.le.s32.totalorder 1, %s13
      %p204 = scmp.lt.s32.totalorder %s13, 3
      %p205 = pnand %p203, %p204
      %p206 = pneg %p205
      // Predicated region
      $region9: #{fno3d_forward.9} parent=5 // pred_check
        _
      $region10: #{fno3d_forward.9} parent=5 // pred_check_branch
        %208 = sbr.rel (%p205) target = $region12
      $region11: #{fno3d_forward.9} parent=5 // pred_region
        %s209 = ssub.s32 %s13, 1
      $region12: #{fno3d_forward.9} parent=5 // pred_fallthru
        _
      %p210 = scmp.lt.s32.totalorder %s13, 2
      // Predicated region
      $region13: #{fno3d_forward.9} parent=5 // pred_check
        %p211 = pneg %p210
      $region14: #{fno3d_forward.9} parent=5 // pred_check_branch
        %213 = sbr.rel (%p211) target = $region16
      $region15: #{fno3d_forward.9} parent=5 // pred_region
        // Predicated region
        $region17: #{fno3d_forward.9} parent=15 // pred_check
          %p214 = pneg %p33
        $region18: #{fno3d_forward.9} parent=15 // pred_check_branch
          %216 = sbr.rel (%p214) target = $region20
        $region19: #{fno3d_forward.9} parent=15 // pred_region
          %s217 = sand.u32 %s23, 1
          %s218 = sand.u32 %s23, 1
          %s219 = smul.addr %s218, 32
          %s220 = scalar_lea.vmem [#allocation2], %s219
          %s221 = smul.addr %s13, 8
          %s222 = scalar_lea.vmem %s0, %s221
          // Predicated region
          $region21: #{fno3d_forward.9} parent=19 // pred_check
            _
          $region22: #{fno3d_forward.9} parent=19 // pred_check_branch
            %224 = sbr.rel (0) target = $region24
          $region23: #{fno3d_forward.9} parent=19 // pred_region
            // Predicated region
            $region25: #{fno3d_forward.9} parent=23 // pred_check
              _
            $region26: #{fno3d_forward.9} parent=23 // pred_check_branch
              %226 = sbr.rel (0) target = $region28
            $region27: #{fno3d_forward.9} parent=23 // pred_region
              // Predicated region
              $region40: #{fno3d_forward.9} parent=27 // pred_check
                _
              $region41: #{fno3d_forward.9} parent=27 // pred_check_branch
                %248 = sbr.rel (0) target = $region43
              $region42: #{fno3d_forward.9} parent=27 // pred_region
                loop: start=0, step=1, limit=1
                $region44: #{fno3d_forward.9} parent=42 // loop_pre_header
                  _
                $region45: #{fno3d_forward.9} parent=42 // loop_header
                  %s250 = sphi 0, %s254
                  %p251 = scmp.ge.s32.totalorder %s250, 1
                  %s255 = sphi %s222, %s222
                  %s256 = sphi %s220, %s220
                $region46: #{fno3d_forward.9} parent=42 // loop_header_branch
                  %253 = sbr.rel (%p251) target = $region50
                $region47: #{fno3d_forward.9} parent=42 // loop_body
                  %v257 = vld [vmem:[%s255] sm:$0xff]
                  %258 = vst [vmem:[%s256] sm:$0xff] %v257
                  %v259 = vld [vmem:[%s255 + $0x10] sm:$0xff]
                  %260 = vst [vmem:[%s256 + $0x8] sm:$0xff] %v259
                  %v261 = vld [vmem:[%s255 + $0x20] sm:$0xff]
                  %262 = vst [vmem:[%s256 + $0x10] sm:$0xff] %v261
                  %v263 = vld [vmem:[%s255 + $0x30] sm:$0xff]
                  %264 = vst [vmem:[%s256 + $0x18] sm:$0xff] %v263
                $region48: #{fno3d_forward.9} parent=42 // loop_footer
                  %s254 = sadd.s32 1, %s250
                $region49: #{fno3d_forward.9} parent=42 // loop_footer_branch
                  %249 = sbr.rel target = $region45
                $region50: #{fno3d_forward.9} parent=42 // loop_exit
                  _
              $region43: #{fno3d_forward.9} parent=27 // pred_fallthru
                _
              // Predicated region
              $region51: #{fno3d_forward.9} parent=27 // pred_check
                _
              $region52: #{fno3d_forward.9} parent=27 // pred_check_branch
                %266 = sbr.rel target = $region54
              $region53: #{fno3d_forward.9} parent=27 // pred_region
                _
              $region54: #{fno3d_forward.9} parent=27 // pred_fallthru
                _
            $region28: #{fno3d_forward.9} parent=23 // pred_fallthru
              _
            // Predicated region
            $region29: #{fno3d_forward.9} parent=23 // pred_check
              _
            $region30: #{fno3d_forward.9} parent=23 // pred_check_branch
              %228 = sbr.rel target = $region32
            $region31: #{fno3d_forward.9} parent=23 // pred_region
              %s230 = ssub.s32 256, 1
              loop: start=0, step=1, limit=1
              $region33: #{fno3d_forward.9} parent=31 // loop_pre_header
                _
              $region34: #{fno3d_forward.9} parent=31 // loop_header
                %s232 = sphi 0, %s236
                %p233 = scmp.ge.s32.totalorder %s232, 1
                %s237 = sphi %s222, %s222
                %s238 = sphi %s220, %s220
              $region35: #{fno3d_forward.9} parent=31 // loop_header_branch
                %235 = sbr.rel (%p233) target = $region39
              $region36: #{fno3d_forward.9} parent=31 // loop_body
                %v239 = vld [vmem:[%s237] sm:%s230]
                %240 = vst [vmem:[%s238] sm:%s230] %v239
                %v241 = vld [vmem:[%s237 + $0x10] sm:%s230]
                %242 = vst [vmem:[%s238 + $0x8] sm:%s230] %v241
                %v243 = vld [vmem:[%s237 + $0x20] sm:%s230]
                %244 = vst [vmem:[%s238 + $0x10] sm:%s230] %v243
                %v245 = vld [vmem:[%s237 + $0x30] sm:%s230]
                %246 = vst [vmem:[%s238 + $0x18] sm:%s230] %v245
              $region37: #{fno3d_forward.9} parent=31 // loop_footer
                %s236 = sadd.s32 1, %s232
              $region38: #{fno3d_forward.9} parent=31 // loop_footer_branch
                %231 = sbr.rel target = $region34
              $region39: #{fno3d_forward.9} parent=31 // loop_exit
                _
            $region32: #{fno3d_forward.9} parent=23 // pred_fallthru
              _
          $region24: #{fno3d_forward.9} parent=19 // pred_fallthru
            _
          %267 = vnop
        $region20: #{fno3d_forward.9} parent=15 // pred_fallthru
          _
        // Predicated region
        $region55: #{fno3d_forward.9} parent=15 // pred_check
          %p268 = pneg %p59
        $region56: #{fno3d_forward.9} parent=15 // pred_check_branch
          %270 = sbr.rel (%p268) target = $region58
        $region57: #{fno3d_forward.9} parent=15 // pred_region
          %s271 = sand.u32 %s49, 1
          %s272 = sand.u32 %s49, 1
          %s273 = smul.addr %s272, 32
          %s274 = scalar_lea.vmem [#allocation3], %s273
          %s275 = smul.addr %s13, 8
          %s276 = scalar_lea.vmem %s1, %s275
          // Predicated region
          $region59: #{fno3d_forward.9} parent=57 // pred_check
            _
          $region60: #{fno3d_forward.9} parent=57 // pred_check_branch
            %278 = sbr.rel (0) target = $region62
          $region61: #{fno3d_forward.9} parent=57 // pred_region
            // Predicated region
            $region63: #{fno3d_forward.9} parent=61 // pred_check
              _
            $region64: #{fno3d_forward.9} parent=61 // pred_check_branch
              %280 = sbr.rel (0) target = $region66
            $region65: #{fno3d_forward.9} parent=61 // pred_region
              // Predicated region
              $region78: #{fno3d_forward.9} parent=65 // pred_check
                _
              $region79: #{fno3d_forward.9} parent=65 // pred_check_branch
                %302 = sbr.rel (0) target = $region81
              $region80: #{fno3d_forward.9} parent=65 // pred_region
                loop: start=0, step=1, limit=1
                $region82: #{fno3d_forward.9} parent=80 // loop_pre_header
                  _
                $region83: #{fno3d_forward.9} parent=80 // loop_header
                  %s304 = sphi 0, %s308
                  %p305 = scmp.ge.s32.totalorder %s304, 1
                  %s309 = sphi %s276, %s276
                  %s310 = sphi %s274, %s274
                $region84: #{fno3d_forward.9} parent=80 // loop_header_branch
                  %307 = sbr.rel (%p305) target = $region88
                $region85: #{fno3d_forward.9} parent=80 // loop_body
                  %v311 = vld [vmem:[%s309] sm:$0xff]
                  %312 = vst [vmem:[%s310] sm:$0xff] %v311
                  %v313 = vld [vmem:[%s309 + $0x10] sm:$0xff]
                  %314 = vst [vmem:[%s310 + $0x8] sm:$0xff] %v313
                  %v315 = vld [vmem:[%s309 + $0x20] sm:$0xff]
                  %316 = vst [vmem:[%s310 + $0x10] sm:$0xff] %v315
                  %v317 = vld [vmem:[%s309 + $0x30] sm:$0xff]
                  %318 = vst [vmem:[%s310 + $0x18] sm:$0xff] %v317
                $region86: #{fno3d_forward.9} parent=80 // loop_footer
                  %s308 = sadd.s32 1, %s304
                $region87: #{fno3d_forward.9} parent=80 // loop_footer_branch
                  %303 = sbr.rel target = $region83
                $region88: #{fno3d_forward.9} parent=80 // loop_exit
                  _
              $region81: #{fno3d_forward.9} parent=65 // pred_fallthru
                _
              // Predicated region
              $region89: #{fno3d_forward.9} parent=65 // pred_check
                _
              $region90: #{fno3d_forward.9} parent=65 // pred_check_branch
                %320 = sbr.rel target = $region92
              $region91: #{fno3d_forward.9} parent=65 // pred_region
                _
              $region92: #{fno3d_forward.9} parent=65 // pred_fallthru
                _
            $region66: #{fno3d_forward.9} parent=61 // pred_fallthru
              _
            // Predicated region
            $region67: #{fno3d_forward.9} parent=61 // pred_check
              _
            $region68: #{fno3d_forward.9} parent=61 // pred_check_branch
              %282 = sbr.rel target = $region70
            $region69: #{fno3d_forward.9} parent=61 // pred_region
              %s284 = ssub.s32 256, 1
              loop: start=0, step=1, limit=1
              $region71: #{fno3d_forward.9} parent=69 // loop_pre_header
                _
              $region72: #{fno3d_forward.9} parent=69 // loop_header
                %s286 = sphi 0, %s290
                %p287 = scmp.ge.s32.totalorder %s286, 1
                %s291 = sphi %s276, %s276
                %s292 = sphi %s274, %s274
              $region73: #{fno3d_forward.9} parent=69 // loop_header_branch
                %289 = sbr.rel (%p287) target = $region77
              $region74: #{fno3d_forward.9} parent=69 // loop_body
                %v293 = vld [vmem:[%s291] sm:%s284]
                %294 = vst [vmem:[%s292] sm:%s284] %v293
                %v295 = vld [vmem:[%s291 + $0x10] sm:%s284]
                %296 = vst [vmem:[%s292 + $0x8] sm:%s284] %v295
                %v297 = vld [vmem:[%s291 + $0x20] sm:%s284]
                %298 = vst [vmem:[%s292 + $0x10] sm:%s284] %v297
                %v299 = vld [vmem:[%s291 + $0x30] sm:%s284]
                %300 = vst [vmem:[%s292 + $0x18] sm:%s284] %v299
              $region75: #{fno3d_forward.9} parent=69 // loop_footer
                %s290 = sadd.s32 1, %s286
              $region76: #{fno3d_forward.9} parent=69 // loop_footer_branch
                %285 = sbr.rel target = $region72
              $region77: #{fno3d_forward.9} parent=69 // loop_exit
                _
            $region70: #{fno3d_forward.9} parent=61 // pred_fallthru
              _
          $region62: #{fno3d_forward.9} parent=57 // pred_fallthru
            _
          %321 = vnop
        $region58: #{fno3d_forward.9} parent=15 // pred_fallthru
          _
        // Predicated region
        $region93: #{fno3d_forward.9} parent=15 // pred_check
          %p322 = pneg %p85
        $region94: #{fno3d_forward.9} parent=15 // pred_check_branch
          %324 = sbr.rel (%p322) target = $region96
        $region95: #{fno3d_forward.9} parent=15 // pred_region
          %s325 = sand.u32 %s75, 1
          %s326 = sand.u32 %s75, 1
          %s327 = smul.addr %s326, 256
          %s328 = scalar_lea.vmem [#allocation4], %s327
          %s329 = smul.addr %s13, 8
          %s330 = scalar_lea.vmem %s2, %s329
          // Predicated region
          $region97: #{fno3d_forward.9} parent=95 // pred_check
            _
          $region98: #{fno3d_forward.9} parent=95 // pred_check_branch
            %332 = sbr.rel (0) target = $region100
          $region99: #{fno3d_forward.9} parent=95 // pred_region
            // Predicated region
            $region101: #{fno3d_forward.9} parent=99 // pred_check
              _
            $region102: #{fno3d_forward.9} parent=99 // pred_check_branch
              %334 = sbr.rel (0) target = $region104
            $region103: #{fno3d_forward.9} parent=99 // pred_region
              // Predicated region
              $region116: #{fno3d_forward.9} parent=103 // pred_check
                _
              $region117: #{fno3d_forward.9} parent=103 // pred_check_branch
                %412 = sbr.rel (0) target = $region119
              $region118: #{fno3d_forward.9} parent=103 // pred_region
                loop: start=0, step=1, limit=1
                $region120: #{fno3d_forward.9} parent=118 // loop_pre_header
                  _
                $region121: #{fno3d_forward.9} parent=118 // loop_header
                  %s414 = sphi 0, %s418
                  %p415 = scmp.ge.s32.totalorder %s414, 1
                  %s419 = sphi %s330, %s330
                  %s420 = sphi %s328, %s328
                $region122: #{fno3d_forward.9} parent=118 // loop_header_branch
                  %417 = sbr.rel (%p415) target = $region126
                $region123: #{fno3d_forward.9} parent=118 // loop_body
                  %v421 = vld [vmem:[%s419] sm:$0xff]
                  %422 = vst [vmem:[%s420] sm:$0xff] %v421
                  %v423 = vld [vmem:[%s419 + $0x10] sm:$0xff]
                  %424 = vst [vmem:[%s420 + $0x8] sm:$0xff] %v423
                  %v425 = vld [vmem:[%s419 + $0x20] sm:$0xff]
                  %426 = vst [vmem:[%s420 + $0x10] sm:$0xff] %v425
                  %v427 = vld [vmem:[%s419 + $0x30] sm:$0xff]
                  %428 = vst [vmem:[%s420 + $0x18] sm:$0xff] %v427
                  %v429 = vld [vmem:[%s419 + $0x40] sm:$0xff]
                  %430 = vst [vmem:[%s420 + $0x20] sm:$0xff] %v429
                  %v431 = vld [vmem:[%s419 + $0x50] sm:$0xff]
                  %432 = vst [vmem:[%s420 + $0x28] sm:$0xff] %v431
                  %v433 = vld [vmem:[%s419 + $0x60] sm:$0xff]
                  %434 = vst [vmem:[%s420 + $0x30] sm:$0xff] %v433
                  %v435 = vld [vmem:[%s419 + $0x70] sm:$0xff]
                  %436 = vst [vmem:[%s420 + $0x38] sm:$0xff] %v435
                  %v437 = vld [vmem:[%s419 + $0x80] sm:$0xff]
                  %438 = vst [vmem:[%s420 + $0x40] sm:$0xff] %v437
                  %v439 = vld [vmem:[%s419 + $0x90] sm:$0xff]
                  %440 = vst [vmem:[%s420 + $0x48] sm:$0xff] %v439
                  %v441 = vld [vmem:[%s419 + $0xa0] sm:$0xff]
                  %442 = vst [vmem:[%s420 + $0x50] sm:$0xff] %v441
                  %v443 = vld [vmem:[%s419 + $0xb0] sm:$0xff]
                  %444 = vst [vmem:[%s420 + $0x58] sm:$0xff] %v443
                  %v445 = vld [vmem:[%s419 + $0xc0] sm:$0xff]
                  %446 = vst [vmem:[%s420 + $0x60] sm:$0xff] %v445
                  %v447 = vld [vmem:[%s419 + $0xd0] sm:$0xff]
                  %448 = vst [vmem:[%s420 + $0x68] sm:$0xff] %v447
                  %v449 = vld [vmem:[%s419 + $0xe0] sm:$0xff]
                  %450 = vst [vmem:[%s420 + $0x70] sm:$0xff] %v449
                  %v451 = vld [vmem:[%s419 + $0xf0] sm:$0xff]
                  %452 = vst [vmem:[%s420 + $0x78] sm:$0xff] %v451
                  %v453 = vld [vmem:[%s419 + $0x100] sm:$0xff]
                  %454 = vst [vmem:[%s420 + $0x80] sm:$0xff] %v453
                  %v455 = vld [vmem:[%s419 + $0x110] sm:$0xff]
                  %456 = vst [vmem:[%s420 + $0x88] sm:$0xff] %v455
                  %v457 = vld [vmem:[%s419 + $0x120] sm:$0xff]
                  %458 = vst [vmem:[%s420 + $0x90] sm:$0xff] %v457
                  %v459 = vld [vmem:[%s419 + $0x130] sm:$0xff]
                  %460 = vst [vmem:[%s420 + $0x98] sm:$0xff] %v459
                  %v461 = vld [vmem:[%s419 + $0x140] sm:$0xff]
                  %462 = vst [vmem:[%s420 + $0xa0] sm:$0xff] %v461
                  %v463 = vld [vmem:[%s419 + $0x150] sm:$0xff]
                  %464 = vst [vmem:[%s420 + $0xa8] sm:$0xff] %v463
                  %v465 = vld [vmem:[%s419 + $0x160] sm:$0xff]
                  %466 = vst [vmem:[%s420 + $0xb0] sm:$0xff] %v465
                  %v467 = vld [vmem:[%s419 + $0x170] sm:$0xff]
                  %468 = vst [vmem:[%s420 + $0xb8] sm:$0xff] %v467
                  %v469 = vld [vmem:[%s419 + $0x180] sm:$0xff]
                  %470 = vst [vmem:[%s420 + $0xc0] sm:$0xff] %v469
                  %v471 = vld [vmem:[%s419 + $0x190] sm:$0xff]
                  %472 = vst [vmem:[%s420 + $0xc8] sm:$0xff] %v471
                  %v473 = vld [vmem:[%s419 + $0x1a0] sm:$0xff]
                  %474 = vst [vmem:[%s420 + $0xd0] sm:$0xff] %v473
                  %v475 = vld [vmem:[%s419 + $0x1b0] sm:$0xff]
                  %476 = vst [vmem:[%s420 + $0xd8] sm:$0xff] %v475
                  %v477 = vld [vmem:[%s419 + $0x1c0] sm:$0xff]
                  %478 = vst [vmem:[%s420 + $0xe0] sm:$0xff] %v477
                  %v479 = vld [vmem:[%s419 + $0x1d0] sm:$0xff]
                  %480 = vst [vmem:[%s420 + $0xe8] sm:$0xff] %v479
                  %v481 = vld [vmem:[%s419 + $0x1e0] sm:$0xff]
                  %482 = vst [vmem:[%s420 + $0xf0] sm:$0xff] %v481
                  %v483 = vld [vmem:[%s419 + $0x1f0] sm:$0xff]
                  %484 = vst [vmem:[%s420 + $0xf8] sm:$0xff] %v483
                $region124: #{fno3d_forward.9} parent=118 // loop_footer
                  %s418 = sadd.s32 1, %s414
                $region125: #{fno3d_forward.9} parent=118 // loop_footer_branch
                  %413 = sbr.rel target = $region121
                $region126: #{fno3d_forward.9} parent=118 // loop_exit
                  _
              $region119: #{fno3d_forward.9} parent=103 // pred_fallthru
                _
              // Predicated region
              $region127: #{fno3d_forward.9} parent=103 // pred_check
                _
              $region128: #{fno3d_forward.9} parent=103 // pred_check_branch
                %486 = sbr.rel target = $region130
              $region129: #{fno3d_forward.9} parent=103 // pred_region
                _
              $region130: #{fno3d_forward.9} parent=103 // pred_fallthru
                _
            $region104: #{fno3d_forward.9} parent=99 // pred_fallthru
              _
            // Predicated region
            $region105: #{fno3d_forward.9} parent=99 // pred_check
              _
            $region106: #{fno3d_forward.9} parent=99 // pred_check_branch
              %336 = sbr.rel target = $region108
            $region107: #{fno3d_forward.9} parent=99 // pred_region
              %s338 = ssub.s32 256, 1
              loop: start=0, step=1, limit=1
              $region109: #{fno3d_forward.9} parent=107 // loop_pre_header
                _
              $region110: #{fno3d_forward.9} parent=107 // loop_header
                %s340 = sphi 0, %s344
                %p341 = scmp.ge.s32.totalorder %s340, 1
                %s345 = sphi %s330, %s330
                %s346 = sphi %s328, %s328
              $region111: #{fno3d_forward.9} parent=107 // loop_header_branch
                %343 = sbr.rel (%p341) target = $region115
              $region112: #{fno3d_forward.9} parent=107 // loop_body
                %v347 = vld [vmem:[%s345] sm:%s338]
                %348 = vst [vmem:[%s346] sm:%s338] %v347
                %v349 = vld [vmem:[%s345 + $0x10] sm:%s338]
                %350 = vst [vmem:[%s346 + $0x8] sm:%s338] %v349
                %v351 = vld [vmem:[%s345 + $0x20] sm:%s338]
                %352 = vst [vmem:[%s346 + $0x10] sm:%s338] %v351
                %v353 = vld [vmem:[%s345 + $0x30] sm:%s338]
                %354 = vst [vmem:[%s346 + $0x18] sm:%s338] %v353
                %v355 = vld [vmem:[%s345 + $0x40] sm:%s338]
                %356 = vst [vmem:[%s346 + $0x20] sm:%s338] %v355
                %v357 = vld [vmem:[%s345 + $0x50] sm:%s338]
                %358 = vst [vmem:[%s346 + $0x28] sm:%s338] %v357
                %v359 = vld [vmem:[%s345 + $0x60] sm:%s338]
                %360 = vst [vmem:[%s346 + $0x30] sm:%s338] %v359
                %v361 = vld [vmem:[%s345 + $0x70] sm:%s338]
                %362 = vst [vmem:[%s346 + $0x38] sm:%s338] %v361
                %v363 = vld [vmem:[%s345 + $0x80] sm:%s338]
                %364 = vst [vmem:[%s346 + $0x40] sm:%s338] %v363
                %v365 = vld [vmem:[%s345 + $0x90] sm:%s338]
                %366 = vst [vmem:[%s346 + $0x48] sm:%s338] %v365
                %v367 = vld [vmem:[%s345 + $0xa0] sm:%s338]
                %368 = vst [vmem:[%s346 + $0x50] sm:%s338] %v367
                %v369 = vld [vmem:[%s345 + $0xb0] sm:%s338]
                %370 = vst [vmem:[%s346 + $0x58] sm:%s338] %v369
                %v371 = vld [vmem:[%s345 + $0xc0] sm:%s338]
                %372 = vst [vmem:[%s346 + $0x60] sm:%s338] %v371
                %v373 = vld [vmem:[%s345 + $0xd0] sm:%s338]
                %374 = vst [vmem:[%s346 + $0x68] sm:%s338] %v373
                %v375 = vld [vmem:[%s345 + $0xe0] sm:%s338]
                %376 = vst [vmem:[%s346 + $0x70] sm:%s338] %v375
                %v377 = vld [vmem:[%s345 + $0xf0] sm:%s338]
                %378 = vst [vmem:[%s346 + $0x78] sm:%s338] %v377
                %v379 = vld [vmem:[%s345 + $0x100] sm:%s338]
                %380 = vst [vmem:[%s346 + $0x80] sm:%s338] %v379
                %v381 = vld [vmem:[%s345 + $0x110] sm:%s338]
                %382 = vst [vmem:[%s346 + $0x88] sm:%s338] %v381
                %v383 = vld [vmem:[%s345 + $0x120] sm:%s338]
                %384 = vst [vmem:[%s346 + $0x90] sm:%s338] %v383
                %v385 = vld [vmem:[%s345 + $0x130] sm:%s338]
                %386 = vst [vmem:[%s346 + $0x98] sm:%s338] %v385
                %v387 = vld [vmem:[%s345 + $0x140] sm:%s338]
                %388 = vst [vmem:[%s346 + $0xa0] sm:%s338] %v387
                %v389 = vld [vmem:[%s345 + $0x150] sm:%s338]
                %390 = vst [vmem:[%s346 + $0xa8] sm:%s338] %v389
                %v391 = vld [vmem:[%s345 + $0x160] sm:%s338]
                %392 = vst [vmem:[%s346 + $0xb0] sm:%s338] %v391
                %v393 = vld [vmem:[%s345 + $0x170] sm:%s338]
                %394 = vst [vmem:[%s346 + $0xb8] sm:%s338] %v393
                %v395 = vld [vmem:[%s345 + $0x180] sm:%s338]
                %396 = vst [vmem:[%s346 + $0xc0] sm:%s338] %v395
                %v397 = vld [vmem:[%s345 + $0x190] sm:%s338]
                %398 = vst [vmem:[%s346 + $0xc8] sm:%s338] %v397
                %v399 = vld [vmem:[%s345 + $0x1a0] sm:%s338]
                %400 = vst [vmem:[%s346 + $0xd0] sm:%s338] %v399
                %v401 = vld [vmem:[%s345 + $0x1b0] sm:%s338]
                %402 = vst [vmem:[%s346 + $0xd8] sm:%s338] %v401
                %v403 = vld [vmem:[%s345 + $0x1c0] sm:%s338]
                %404 = vst [vmem:[%s346 + $0xe0] sm:%s338] %v403
                %v405 = vld [vmem:[%s345 + $0x1d0] sm:%s338]
                %406 = vst [vmem:[%s346 + $0xe8] sm:%s338] %v405
                %v407 = vld [vmem:[%s345 + $0x1e0] sm:%s338]
                %408 = vst [vmem:[%s346 + $0xf0] sm:%s338] %v407
                %v409 = vld [vmem:[%s345 + $0x1f0] sm:%s338]
                %410 = vst [vmem:[%s346 + $0xf8] sm:%s338] %v409
              $region113: #{fno3d_forward.9} parent=107 // loop_footer
                %s344 = sadd.s32 1, %s340
              $region114: #{fno3d_forward.9} parent=107 // loop_footer_branch
                %339 = sbr.rel target = $region110
              $region115: #{fno3d_forward.9} parent=107 // loop_exit
                _
            $region108: #{fno3d_forward.9} parent=99 // pred_fallthru
              _
          $region100: #{fno3d_forward.9} parent=95 // pred_fallthru
            _
          %487 = vnop
        $region96: #{fno3d_forward.9} parent=15 // pred_fallthru
          _
        // Predicated region
        $region131: #{fno3d_forward.9} parent=15 // pred_check
          %p488 = pneg %p111
        $region132: #{fno3d_forward.9} parent=15 // pred_check_branch
          %490 = sbr.rel (%p488) target = $region134
        $region133: #{fno3d_forward.9} parent=15 // pred_region
          %s491 = sand.u32 %s101, 1
          %s492 = sand.u32 %s101, 1
          %s493 = smul.addr %s492, 256
          %s494 = scalar_lea.vmem [#allocation5], %s493
          %s495 = smul.addr %s13, 8
          %s496 = scalar_lea.vmem %s3, %s495
          // Predicated region
          $region135: #{fno3d_forward.9} parent=133 // pred_check
            _
          $region136: #{fno3d_forward.9} parent=133 // pred_check_branch
            %498 = sbr.rel (0) target = $region138
          $region137: #{fno3d_forward.9} parent=133 // pred_region
            // Predicated region
            $region139: #{fno3d_forward.9} parent=137 // pred_check
              _
            $region140: #{fno3d_forward.9} parent=137 // pred_check_branch
              %500 = sbr.rel (0) target = $region142
            $region141: #{fno3d_forward.9} parent=137 // pred_region
              // Predicated region
              $region154: #{fno3d_forward.9} parent=141 // pred_check
                _
              $region155: #{fno3d_forward.9} parent=141 // pred_check_branch
                %578 = sbr.rel (0) target = $region157
              $region156: #{fno3d_forward.9} parent=141 // pred_region
                loop: start=0, step=1, limit=1
                $region158: #{fno3d_forward.9} parent=156 // loop_pre_header
                  _
                $region159: #{fno3d_forward.9} parent=156 // loop_header
                  %s580 = sphi 0, %s584
                  %p581 = scmp.ge.s32.totalorder %s580, 1
                  %s585 = sphi %s496, %s496
                  %s586 = sphi %s494, %s494
                $region160: #{fno3d_forward.9} parent=156 // loop_header_branch
                  %583 = sbr.rel (%p581) target = $region164
                $region161: #{fno3d_forward.9} parent=156 // loop_body
                  %v587 = vld [vmem:[%s585] sm:$0xff]
                  %588 = vst [vmem:[%s586] sm:$0xff] %v587
                  %v589 = vld [vmem:[%s585 + $0x10] sm:$0xff]
                  %590 = vst [vmem:[%s586 + $0x8] sm:$0xff] %v589
                  %v591 = vld [vmem:[%s585 + $0x20] sm:$0xff]
                  %592 = vst [vmem:[%s586 + $0x10] sm:$0xff] %v591
                  %v593 = vld [vmem:[%s585 + $0x30] sm:$0xff]
                  %594 = vst [vmem:[%s586 + $0x18] sm:$0xff] %v593
                  %v595 = vld [vmem:[%s585 + $0x40] sm:$0xff]
                  %596 = vst [vmem:[%s586 + $0x20] sm:$0xff] %v595
                  %v597 = vld [vmem:[%s585 + $0x50] sm:$0xff]
                  %598 = vst [vmem:[%s586 + $0x28] sm:$0xff] %v597
                  %v599 = vld [vmem:[%s585 + $0x60] sm:$0xff]
                  %600 = vst [vmem:[%s586 + $0x30] sm:$0xff] %v599
                  %v601 = vld [vmem:[%s585 + $0x70] sm:$0xff]
                  %602 = vst [vmem:[%s586 + $0x38] sm:$0xff] %v601
                  %v603 = vld [vmem:[%s585 + $0x80] sm:$0xff]
                  %604 = vst [vmem:[%s586 + $0x40] sm:$0xff] %v603
                  %v605 = vld [vmem:[%s585 + $0x90] sm:$0xff]
                  %606 = vst [vmem:[%s586 + $0x48] sm:$0xff] %v605
                  %v607 = vld [vmem:[%s585 + $0xa0] sm:$0xff]
                  %608 = vst [vmem:[%s586 + $0x50] sm:$0xff] %v607
                  %v609 = vld [vmem:[%s585 + $0xb0] sm:$0xff]
                  %610 = vst [vmem:[%s586 + $0x58] sm:$0xff] %v609
                  %v611 = vld [vmem:[%s585 + $0xc0] sm:$0xff]
                  %612 = vst [vmem:[%s586 + $0x60] sm:$0xff] %v611
                  %v613 = vld [vmem:[%s585 + $0xd0] sm:$0xff]
                  %614 = vst [vmem:[%s586 + $0x68] sm:$0xff] %v613
                  %v615 = vld [vmem:[%s585 + $0xe0] sm:$0xff]
                  %616 = vst [vmem:[%s586 + $0x70] sm:$0xff] %v615
                  %v617 = vld [vmem:[%s585 + $0xf0] sm:$0xff]
                  %618 = vst [vmem:[%s586 + $0x78] sm:$0xff] %v617
                  %v619 = vld [vmem:[%s585 + $0x100] sm:$0xff]
                  %620 = vst [vmem:[%s586 + $0x80] sm:$0xff] %v619
                  %v621 = vld [vmem:[%s585 + $0x110] sm:$0xff]
                  %622 = vst [vmem:[%s586 + $0x88] sm:$0xff] %v621
                  %v623 = vld [vmem:[%s585 + $0x120] sm:$0xff]
                  %624 = vst [vmem:[%s586 + $0x90] sm:$0xff] %v623
                  %v625 = vld [vmem:[%s585 + $0x130] sm:$0xff]
                  %626 = vst [vmem:[%s586 + $0x98] sm:$0xff] %v625
                  %v627 = vld [vmem:[%s585 + $0x140] sm:$0xff]
                  %628 = vst [vmem:[%s586 + $0xa0] sm:$0xff] %v627
                  %v629 = vld [vmem:[%s585 + $0x150] sm:$0xff]
                  %630 = vst [vmem:[%s586 + $0xa8] sm:$0xff] %v629
                  %v631 = vld [vmem:[%s585 + $0x160] sm:$0xff]
                  %632 = vst [vmem:[%s586 + $0xb0] sm:$0xff] %v631
                  %v633 = vld [vmem:[%s585 + $0x170] sm:$0xff]
                  %634 = vst [vmem:[%s586 + $0xb8] sm:$0xff] %v633
                  %v635 = vld [vmem:[%s585 + $0x180] sm:$0xff]
                  %636 = vst [vmem:[%s586 + $0xc0] sm:$0xff] %v635
                  %v637 = vld [vmem:[%s585 + $0x190] sm:$0xff]
                  %638 = vst [vmem:[%s586 + $0xc8] sm:$0xff] %v637
                  %v639 = vld [vmem:[%s585 + $0x1a0] sm:$0xff]
                  %640 = vst [vmem:[%s586 + $0xd0] sm:$0xff] %v639
                  %v641 = vld [vmem:[%s585 + $0x1b0] sm:$0xff]
                  %642 = vst [vmem:[%s586 + $0xd8] sm:$0xff] %v641
                  %v643 = vld [vmem:[%s585 + $0x1c0] sm:$0xff]
                  %644 = vst [vmem:[%s586 + $0xe0] sm:$0xff] %v643
                  %v645 = vld [vmem:[%s585 + $0x1d0] sm:$0xff]
                  %646 = vst [vmem:[%s586 + $0xe8] sm:$0xff] %v645
                  %v647 = vld [vmem:[%s585 + $0x1e0] sm:$0xff]
                  %648 = vst [vmem:[%s586 + $0xf0] sm:$0xff] %v647
                  %v649 = vld [vmem:[%s585 + $0x1f0] sm:$0xff]
                  %650 = vst [vmem:[%s586 + $0xf8] sm:$0xff] %v649
                $region162: #{fno3d_forward.9} parent=156 // loop_footer
                  %s584 = sadd.s32 1, %s580
                $region163: #{fno3d_forward.9} parent=156 // loop_footer_branch
                  %579 = sbr.rel target = $region159
                $region164: #{fno3d_forward.9} parent=156 // loop_exit
                  _
              $region157: #{fno3d_forward.9} parent=141 // pred_fallthru
                _
              // Predicated region
              $region165: #{fno3d_forward.9} parent=141 // pred_check
                _
              $region166: #{fno3d_forward.9} parent=141 // pred_check_branch
                %652 = sbr.rel target = $region168
              $region167: #{fno3d_forward.9} parent=141 // pred_region
                _
              $region168: #{fno3d_forward.9} parent=141 // pred_fallthru
                _
            $region142: #{fno3d_forward.9} parent=137 // pred_fallthru
              _
            // Predicated region
            $region143: #{fno3d_forward.9} parent=137 // pred_check
              _
            $region144: #{fno3d_forward.9} parent=137 // pred_check_branch
              %502 = sbr.rel target = $region146
            $region145: #{fno3d_forward.9} parent=137 // pred_region
              %s504 = ssub.s32 256, 1
              loop: start=0, step=1, limit=1
              $region147: #{fno3d_forward.9} parent=145 // loop_pre_header
                _
              $region148: #{fno3d_forward.9} parent=145 // loop_header
                %s506 = sphi 0, %s510
                %p507 = scmp.ge.s32.totalorder %s506, 1
                %s511 = sphi %s496, %s496
                %s512 = sphi %s494, %s494
              $region149: #{fno3d_forward.9} parent=145 // loop_header_branch
                %509 = sbr.rel (%p507) target = $region153
              $region150: #{fno3d_forward.9} parent=145 // loop_body
                %v513 = vld [vmem:[%s511] sm:%s504]
                %514 = vst [vmem:[%s512] sm:%s504] %v513
                %v515 = vld [vmem:[%s511 + $0x10] sm:%s504]
                %516 = vst [vmem:[%s512 + $0x8] sm:%s504] %v515
                %v517 = vld [vmem:[%s511 + $0x20] sm:%s504]
                %518 = vst [vmem:[%s512 + $0x10] sm:%s504] %v517
                %v519 = vld [vmem:[%s511 + $0x30] sm:%s504]
                %520 = vst [vmem:[%s512 + $0x18] sm:%s504] %v519
                %v521 = vld [vmem:[%s511 + $0x40] sm:%s504]
                %522 = vst [vmem:[%s512 + $0x20] sm:%s504] %v521
                %v523 = vld [vmem:[%s511 + $0x50] sm:%s504]
                %524 = vst [vmem:[%s512 + $0x28] sm:%s504] %v523
                %v525 = vld [vmem:[%s511 + $0x60] sm:%s504]
                %526 = vst [vmem:[%s512 + $0x30] sm:%s504] %v525
                %v527 = vld [vmem:[%s511 + $0x70] sm:%s504]
                %528 = vst [vmem:[%s512 + $0x38] sm:%s504] %v527
                %v529 = vld [vmem:[%s511 + $0x80] sm:%s504]
                %530 = vst [vmem:[%s512 + $0x40] sm:%s504] %v529
                %v531 = vld [vmem:[%s511 + $0x90] sm:%s504]
                %532 = vst [vmem:[%s512 + $0x48] sm:%s504] %v531
                %v533 = vld [vmem:[%s511 + $0xa0] sm:%s504]
                %534 = vst [vmem:[%s512 + $0x50] sm:%s504] %v533
                %v535 = vld [vmem:[%s511 + $0xb0] sm:%s504]
                %536 = vst [vmem:[%s512 + $0x58] sm:%s504] %v535
                %v537 = vld [vmem:[%s511 + $0xc0] sm:%s504]
                %538 = vst [vmem:[%s512 + $0x60] sm:%s504] %v537
                %v539 = vld [vmem:[%s511 + $0xd0] sm:%s504]
                %540 = vst [vmem:[%s512 + $0x68] sm:%s504] %v539
                %v541 = vld [vmem:[%s511 + $0xe0] sm:%s504]
                %542 = vst [vmem:[%s512 + $0x70] sm:%s504] %v541
                %v543 = vld [vmem:[%s511 + $0xf0] sm:%s504]
                %544 = vst [vmem:[%s512 + $0x78] sm:%s504] %v543
                %v545 = vld [vmem:[%s511 + $0x100] sm:%s504]
                %546 = vst [vmem:[%s512 + $0x80] sm:%s504] %v545
                %v547 = vld [vmem:[%s511 + $0x110] sm:%s504]
                %548 = vst [vmem:[%s512 + $0x88] sm:%s504] %v547
                %v549 = vld [vmem:[%s511 + $0x120] sm:%s504]
                %550 = vst [vmem:[%s512 + $0x90] sm:%s504] %v549
                %v551 = vld [vmem:[%s511 + $0x130] sm:%s504]
                %552 = vst [vmem:[%s512 + $0x98] sm:%s504] %v551
                %v553 = vld [vmem:[%s511 + $0x140] sm:%s504]
                %554 = vst [vmem:[%s512 + $0xa0] sm:%s504] %v553
                %v555 = vld [vmem:[%s511 + $0x150] sm:%s504]
                %556 = vst [vmem:[%s512 + $0xa8] sm:%s504] %v555
                %v557 = vld [vmem:[%s511 + $0x160] sm:%s504]
                %558 = vst [vmem:[%s512 + $0xb0] sm:%s504] %v557
                %v559 = vld [vmem:[%s511 + $0x170] sm:%s504]
                %560 = vst [vmem:[%s512 + $0xb8] sm:%s504] %v559
                %v561 = vld [vmem:[%s511 + $0x180] sm:%s504]
                %562 = vst [vmem:[%s512 + $0xc0] sm:%s504] %v561
                %v563 = vld [vmem:[%s511 + $0x190] sm:%s504]
                %564 = vst [vmem:[%s512 + $0xc8] sm:%s504] %v563
                %v565 = vld [vmem:[%s511 + $0x1a0] sm:%s504]
                %566 = vst [vmem:[%s512 + $0xd0] sm:%s504] %v565
                %v567 = vld [vmem:[%s511 + $0x1b0] sm:%s504]
                %568 = vst [vmem:[%s512 + $0xd8] sm:%s504] %v567
                %v569 = vld [vmem:[%s511 + $0x1c0] sm:%s504]
                %570 = vst [vmem:[%s512 + $0xe0] sm:%s504] %v569
                %v571 = vld [vmem:[%s511 + $0x1d0] sm:%s504]
                %572 = vst [vmem:[%s512 + $0xe8] sm:%s504] %v571
                %v573 = vld [vmem:[%s511 + $0x1e0] sm:%s504]
                %574 = vst [vmem:[%s512 + $0xf0] sm:%s504] %v573
                %v575 = vld [vmem:[%s511 + $0x1f0] sm:%s504]
                %576 = vst [vmem:[%s512 + $0xf8] sm:%s504] %v575
              $region151: #{fno3d_forward.9} parent=145 // loop_footer
                %s510 = sadd.s32 1, %s506
              $region152: #{fno3d_forward.9} parent=145 // loop_footer_branch
                %505 = sbr.rel target = $region148
              $region153: #{fno3d_forward.9} parent=145 // loop_exit
                _
            $region146: #{fno3d_forward.9} parent=137 // pred_fallthru
              _
          $region138: #{fno3d_forward.9} parent=133 // pred_fallthru
            _
          %653 = vnop
        $region134: #{fno3d_forward.9} parent=15 // pred_fallthru
          _
        // Predicated region
        $region169: #{fno3d_forward.9} parent=15 // pred_check
          %p654 = pneg %p137
        $region170: #{fno3d_forward.9} parent=15 // pred_check_branch
          %656 = sbr.rel (%p654) target = $region172
        $region171: #{fno3d_forward.9} parent=15 // pred_region
          %s657 = sand.u32 %s127, 1
          %s658 = sand.u32 %s127, 1
          %s659 = smul.addr %s658, 256
          %s660 = scalar_lea.vmem [#allocation6], %s659
          %s661 = smul.addr %s13, 8
          %s662 = scalar_lea.vmem %s4, %s661
          // Predicated region
          $region173: #{fno3d_forward.9} parent=171 // pred_check
            _
          $region174: #{fno3d_forward.9} parent=171 // pred_check_branch
            %664 = sbr.rel (0) target = $region176
          $region175: #{fno3d_forward.9} parent=171 // pred_region
            // Predicated region
            $region177: #{fno3d_forward.9} parent=175 // pred_check
              _
            $region178: #{fno3d_forward.9} parent=175 // pred_check_branch
              %666 = sbr.rel (0) target = $region180
            $region179: #{fno3d_forward.9} parent=175 // pred_region
              // Predicated region
              $region192: #{fno3d_forward.9} parent=179 // pred_check
                _
              $region193: #{fno3d_forward.9} parent=179 // pred_check_branch
                %744 = sbr.rel (0) target = $region195
              $region194: #{fno3d_forward.9} parent=179 // pred_region
                loop: start=0, step=1, limit=1
                $region196: #{fno3d_forward.9} parent=194 // loop_pre_header
                  _
                $region197: #{fno3d_forward.9} parent=194 // loop_header
                  %s746 = sphi 0, %s750
                  %p747 = scmp.ge.s32.totalorder %s746, 1
                  %s751 = sphi %s662, %s662
                  %s752 = sphi %s660, %s660
                $region198: #{fno3d_forward.9} parent=194 // loop_header_branch
                  %749 = sbr.rel (%p747) target = $region202
                $region199: #{fno3d_forward.9} parent=194 // loop_body
                  %v753 = vld [vmem:[%s751] sm:$0xff]
                  %754 = vst [vmem:[%s752] sm:$0xff] %v753
                  %v755 = vld [vmem:[%s751 + $0x10] sm:$0xff]
                  %756 = vst [vmem:[%s752 + $0x8] sm:$0xff] %v755
                  %v757 = vld [vmem:[%s751 + $0x20] sm:$0xff]
                  %758 = vst [vmem:[%s752 + $0x10] sm:$0xff] %v757
                  %v759 = vld [vmem:[%s751 + $0x30] sm:$0xff]
                  %760 = vst [vmem:[%s752 + $0x18] sm:$0xff] %v759
                  %v761 = vld [vmem:[%s751 + $0x40] sm:$0xff]
                  %762 = vst [vmem:[%s752 + $0x20] sm:$0xff] %v761
                  %v763 = vld [vmem:[%s751 + $0x50] sm:$0xff]
                  %764 = vst [vmem:[%s752 + $0x28] sm:$0xff] %v763
                  %v765 = vld [vmem:[%s751 + $0x60] sm:$0xff]
                  %766 = vst [vmem:[%s752 + $0x30] sm:$0xff] %v765
                  %v767 = vld [vmem:[%s751 + $0x70] sm:$0xff]
                  %768 = vst [vmem:[%s752 + $0x38] sm:$0xff] %v767
                  %v769 = vld [vmem:[%s751 + $0x80] sm:$0xff]
                  %770 = vst [vmem:[%s752 + $0x40] sm:$0xff] %v769
                  %v771 = vld [vmem:[%s751 + $0x90] sm:$0xff]
                  %772 = vst [vmem:[%s752 + $0x48] sm:$0xff] %v771
                  %v773 = vld [vmem:[%s751 + $0xa0] sm:$0xff]
                  %774 = vst [vmem:[%s752 + $0x50] sm:$0xff] %v773
                  %v775 = vld [vmem:[%s751 + $0xb0] sm:$0xff]
                  %776 = vst [vmem:[%s752 + $0x58] sm:$0xff] %v775
                  %v777 = vld [vmem:[%s751 + $0xc0] sm:$0xff]
                  %778 = vst [vmem:[%s752 + $0x60] sm:$0xff] %v777
                  %v779 = vld [vmem:[%s751 + $0xd0] sm:$0xff]
                  %780 = vst [vmem:[%s752 + $0x68] sm:$0xff] %v779
                  %v781 = vld [vmem:[%s751 + $0xe0] sm:$0xff]
                  %782 = vst [vmem:[%s752 + $0x70] sm:$0xff] %v781
                  %v783 = vld [vmem:[%s751 + $0xf0] sm:$0xff]
                  %784 = vst [vmem:[%s752 + $0x78] sm:$0xff] %v783
                  %v785 = vld [vmem:[%s751 + $0x100] sm:$0xff]
                  %786 = vst [vmem:[%s752 + $0x80] sm:$0xff] %v785
                  %v787 = vld [vmem:[%s751 + $0x110] sm:$0xff]
                  %788 = vst [vmem:[%s752 + $0x88] sm:$0xff] %v787
                  %v789 = vld [vmem:[%s751 + $0x120] sm:$0xff]
                  %790 = vst [vmem:[%s752 + $0x90] sm:$0xff] %v789
                  %v791 = vld [vmem:[%s751 + $0x130] sm:$0xff]
                  %792 = vst [vmem:[%s752 + $0x98] sm:$0xff] %v791
                  %v793 = vld [vmem:[%s751 + $0x140] sm:$0xff]
                  %794 = vst [vmem:[%s752 + $0xa0] sm:$0xff] %v793
                  %v795 = vld [vmem:[%s751 + $0x150] sm:$0xff]
                  %796 = vst [vmem:[%s752 + $0xa8] sm:$0xff] %v795
                  %v797 = vld [vmem:[%s751 + $0x160] sm:$0xff]
                  %798 = vst [vmem:[%s752 + $0xb0] sm:$0xff] %v797
                  %v799 = vld [vmem:[%s751 + $0x170] sm:$0xff]
                  %800 = vst [vmem:[%s752 + $0xb8] sm:$0xff] %v799
                  %v801 = vld [vmem:[%s751 + $0x180] sm:$0xff]
                  %802 = vst [vmem:[%s752 + $0xc0] sm:$0xff] %v801
                  %v803 = vld [vmem:[%s751 + $0x190] sm:$0xff]
                  %804 = vst [vmem:[%s752 + $0xc8] sm:$0xff] %v803
                  %v805 = vld [vmem:[%s751 + $0x1a0] sm:$0xff]
                  %806 = vst [vmem:[%s752 + $0xd0] sm:$0xff] %v805
                  %v807 = vld [vmem:[%s751 + $0x1b0] sm:$0xff]
                  %808 = vst [vmem:[%s752 + $0xd8] sm:$0xff] %v807
                  %v809 = vld [vmem:[%s751 + $0x1c0] sm:$0xff]
                  %810 = vst [vmem:[%s752 + $0xe0] sm:$0xff] %v809
                  %v811 = vld [vmem:[%s751 + $0x1d0] sm:$0xff]
                  %812 = vst [vmem:[%s752 + $0xe8] sm:$0xff] %v811
                  %v813 = vld [vmem:[%s751 + $0x1e0] sm:$0xff]
                  %814 = vst [vmem:[%s752 + $0xf0] sm:$0xff] %v813
                  %v815 = vld [vmem:[%s751 + $0x1f0] sm:$0xff]
                  %816 = vst [vmem:[%s752 + $0xf8] sm:$0xff] %v815
                $region200: #{fno3d_forward.9} parent=194 // loop_footer
                  %s750 = sadd.s32 1, %s746
                $region201: #{fno3d_forward.9} parent=194 // loop_footer_branch
                  %745 = sbr.rel target = $region197
                $region202: #{fno3d_forward.9} parent=194 // loop_exit
                  _
              $region195: #{fno3d_forward.9} parent=179 // pred_fallthru
                _
              // Predicated region
              $region203: #{fno3d_forward.9} parent=179 // pred_check
                _
              $region204: #{fno3d_forward.9} parent=179 // pred_check_branch
                %818 = sbr.rel target = $region206
              $region205: #{fno3d_forward.9} parent=179 // pred_region
                _
              $region206: #{fno3d_forward.9} parent=179 // pred_fallthru
                _
            $region180: #{fno3d_forward.9} parent=175 // pred_fallthru
              _
            // Predicated region
            $region181: #{fno3d_forward.9} parent=175 // pred_check
              _
            $region182: #{fno3d_forward.9} parent=175 // pred_check_branch
              %668 = sbr.rel target = $region184
            $region183: #{fno3d_forward.9} parent=175 // pred_region
              %s670 = ssub.s32 256, 1
              loop: start=0, step=1, limit=1
              $region185: #{fno3d_forward.9} parent=183 // loop_pre_header
                _
              $region186: #{fno3d_forward.9} parent=183 // loop_header
                %s672 = sphi 0, %s676
                %p673 = scmp.ge.s32.totalorder %s672, 1
                %s677 = sphi %s662, %s662
                %s678 = sphi %s660, %s660
              $region187: #{fno3d_forward.9} parent=183 // loop_header_branch
                %675 = sbr.rel (%p673) target = $region191
              $region188: #{fno3d_forward.9} parent=183 // loop_body
                %v679 = vld [vmem:[%s677] sm:%s670]
                %680 = vst [vmem:[%s678] sm:%s670] %v679
                %v681 = vld [vmem:[%s677 + $0x10] sm:%s670]
                %682 = vst [vmem:[%s678 + $0x8] sm:%s670] %v681
                %v683 = vld [vmem:[%s677 + $0x20] sm:%s670]
                %684 = vst [vmem:[%s678 + $0x10] sm:%s670] %v683
                %v685 = vld [vmem:[%s677 + $0x30] sm:%s670]
                %686 = vst [vmem:[%s678 + $0x18] sm:%s670] %v685
                %v687 = vld [vmem:[%s677 + $0x40] sm:%s670]
                %688 = vst [vmem:[%s678 + $0x20] sm:%s670] %v687
                %v689 = vld [vmem:[%s677 + $0x50] sm:%s670]
                %690 = vst [vmem:[%s678 + $0x28] sm:%s670] %v689
                %v691 = vld [vmem:[%s677 + $0x60] sm:%s670]
                %692 = vst [vmem:[%s678 + $0x30] sm:%s670] %v691
                %v693 = vld [vmem:[%s677 + $0x70] sm:%s670]
                %694 = vst [vmem:[%s678 + $0x38] sm:%s670] %v693
                %v695 = vld [vmem:[%s677 + $0x80] sm:%s670]
                %696 = vst [vmem:[%s678 + $0x40] sm:%s670] %v695
                %v697 = vld [vmem:[%s677 + $0x90] sm:%s670]
                %698 = vst [vmem:[%s678 + $0x48] sm:%s670] %v697
                %v699 = vld [vmem:[%s677 + $0xa0] sm:%s670]
                %700 = vst [vmem:[%s678 + $0x50] sm:%s670] %v699
                %v701 = vld [vmem:[%s677 + $0xb0] sm:%s670]
                %702 = vst [vmem:[%s678 + $0x58] sm:%s670] %v701
                %v703 = vld [vmem:[%s677 + $0xc0] sm:%s670]
                %704 = vst [vmem:[%s678 + $0x60] sm:%s670] %v703
                %v705 = vld [vmem:[%s677 + $0xd0] sm:%s670]
                %706 = vst [vmem:[%s678 + $0x68] sm:%s670] %v705
                %v707 = vld [vmem:[%s677 + $0xe0] sm:%s670]
                %708 = vst [vmem:[%s678 + $0x70] sm:%s670] %v707
                %v709 = vld [vmem:[%s677 + $0xf0] sm:%s670]
                %710 = vst [vmem:[%s678 + $0x78] sm:%s670] %v709
                %v711 = vld [vmem:[%s677 + $0x100] sm:%s670]
                %712 = vst [vmem:[%s678 + $0x80] sm:%s670] %v711
                %v713 = vld [vmem:[%s677 + $0x110] sm:%s670]
                %714 = vst [vmem:[%s678 + $0x88] sm:%s670] %v713
                %v715 = vld [vmem:[%s677 + $0x120] sm:%s670]
                %716 = vst [vmem:[%s678 + $0x90] sm:%s670] %v715
                %v717 = vld [vmem:[%s677 + $0x130] sm:%s670]
                %718 = vst [vmem:[%s678 + $0x98] sm:%s670] %v717
                %v719 = vld [vmem:[%s677 + $0x140] sm:%s670]
                %720 = vst [vmem:[%s678 + $0xa0] sm:%s670] %v719
                %v721 = vld [vmem:[%s677 + $0x150] sm:%s670]
                %722 = vst [vmem:[%s678 + $0xa8] sm:%s670] %v721
                %v723 = vld [vmem:[%s677 + $0x160] sm:%s670]
                %724 = vst [vmem:[%s678 + $0xb0] sm:%s670] %v723
                %v725 = vld [vmem:[%s677 + $0x170] sm:%s670]
                %726 = vst [vmem:[%s678 + $0xb8] sm:%s670] %v725
                %v727 = vld [vmem:[%s677 + $0x180] sm:%s670]
                %728 = vst [vmem:[%s678 + $0xc0] sm:%s670] %v727
                %v729 = vld [vmem:[%s677 + $0x190] sm:%s670]
                %730 = vst [vmem:[%s678 + $0xc8] sm:%s670] %v729
                %v731 = vld [vmem:[%s677 + $0x1a0] sm:%s670]
                %732 = vst [vmem:[%s678 + $0xd0] sm:%s670] %v731
                %v733 = vld [vmem:[%s677 + $0x1b0] sm:%s670]
                %734 = vst [vmem:[%s678 + $0xd8] sm:%s670] %v733
                %v735 = vld [vmem:[%s677 + $0x1c0] sm:%s670]
                %736 = vst [vmem:[%s678 + $0xe0] sm:%s670] %v735
                %v737 = vld [vmem:[%s677 + $0x1d0] sm:%s670]
                %738 = vst [vmem:[%s678 + $0xe8] sm:%s670] %v737
                %v739 = vld [vmem:[%s677 + $0x1e0] sm:%s670]
                %740 = vst [vmem:[%s678 + $0xf0] sm:%s670] %v739
                %v741 = vld [vmem:[%s677 + $0x1f0] sm:%s670]
                %742 = vst [vmem:[%s678 + $0xf8] sm:%s670] %v741
              $region189: #{fno3d_forward.9} parent=183 // loop_footer
                %s676 = sadd.s32 1, %s672
              $region190: #{fno3d_forward.9} parent=183 // loop_footer_branch
                %671 = sbr.rel target = $region186
              $region191: #{fno3d_forward.9} parent=183 // loop_exit
                _
            $region184: #{fno3d_forward.9} parent=175 // pred_fallthru
              _
          $region176: #{fno3d_forward.9} parent=171 // pred_fallthru
            _
          %819 = vnop
        $region172: #{fno3d_forward.9} parent=15 // pred_fallthru
          _
      $region16: #{fno3d_forward.9} parent=5 // pred_fallthru
        _
      %p820 = scmp.le.s32.totalorder 1, %s13
      %p821 = scmp.lt.s32.totalorder %s13, 3
      %p822 = pnand %p820, %p821
      %p823 = pneg %p822
      // Predicated region
      $region207: #{fno3d_forward.9} parent=5 // pred_check
        _
      $region208: #{fno3d_forward.9} parent=5 // pred_check_branch
        %825 = sbr.rel (%p822) target = $region210
      $region209: #{fno3d_forward.9} parent=5 // pred_region
        %s826 = ssub.s32 %s13, 1
        %s827 = sand.u32 %s26, 1
        %s828 = sand.u32 %s26, 1
        %s829 = smul.addr %s828, 32
        %s830 = scalar_lea.vmem [#allocation2], %s829
        // Predicated region
        $region211: #{fno3d_forward.9} parent=209 // pred_check
          %p831 = pneg %p39
        $region212: #{fno3d_forward.9} parent=209 // pred_check_branch
          %833 = sbr.rel (%p831) target = $region214
        $region213: #{fno3d_forward.9} parent=209 // pred_region
          _
        $region214: #{fno3d_forward.9} parent=209 // pred_fallthru
          _
        %s834 = sand.u32 %s52, 1
        %s835 = sand.u32 %s52, 1
        %s836 = smul.addr %s835, 32
        %s837 = scalar_lea.vmem [#allocation3], %s836
        // Predicated region
        $region215: #{fno3d_forward.9} parent=209 // pred_check
          %p838 = pneg %p65
        $region216: #{fno3d_forward.9} parent=209 // pred_check_branch
          %840 = sbr.rel (%p838) target = $region218
        $region217: #{fno3d_forward.9} parent=209 // pred_region
          _
        $region218: #{fno3d_forward.9} parent=209 // pred_fallthru
          _
        %s841 = sand.u32 %s78, 1
        %s842 = sand.u32 %s78, 1
        %s843 = smul.addr %s842, 256
        %s844 = scalar_lea.vmem [#allocation4], %s843
        // Predicated region
        $region219: #{fno3d_forward.9} parent=209 // pred_check
          %p845 = pneg %p91
        $region220: #{fno3d_forward.9} parent=209 // pred_check_branch
          %847 = sbr.rel (%p845) target = $region222
        $region221: #{fno3d_forward.9} parent=209 // pred_region
          _
        $region222: #{fno3d_forward.9} parent=209 // pred_fallthru
          _
        %s848 = sand.u32 %s104, 1
        %s849 = sand.u32 %s104, 1
        %s850 = smul.addr %s849, 256
        %s851 = scalar_lea.vmem [#allocation5], %s850
        // Predicated region
        $region223: #{fno3d_forward.9} parent=209 // pred_check
          %p852 = pneg %p117
        $region224: #{fno3d_forward.9} parent=209 // pred_check_branch
          %854 = sbr.rel (%p852) target = $region226
        $region225: #{fno3d_forward.9} parent=209 // pred_region
          _
        $region226: #{fno3d_forward.9} parent=209 // pred_fallthru
          _
        %s855 = sand.u32 %s130, 1
        %s856 = sand.u32 %s130, 1
        %s857 = smul.addr %s856, 256
        %s858 = scalar_lea.vmem [#allocation6], %s857
        // Predicated region
        $region227: #{fno3d_forward.9} parent=209 // pred_check
          %p859 = pneg %p143
        $region228: #{fno3d_forward.9} parent=209 // pred_check_branch
          %861 = sbr.rel (%p859) target = $region230
        $region229: #{fno3d_forward.9} parent=209 // pred_region
          _
        $region230: #{fno3d_forward.9} parent=209 // pred_fallthru
          _
        %s862 = sand.u32 %s26, 1
        %s863 = sand.u32 %s26, 1
        %s864 = smul.addr %s863, 32
        %s865 = scalar_lea.vmem [#allocation2], %s864
        %p866 = pneg %p39
        %p867 = pneg %p36
        %s868 = sand.u32 %s52, 1
        %s869 = sand.u32 %s52, 1
        %s870 = smul.addr %s869, 32
        %s871 = scalar_lea.vmem [#allocation3], %s870
        %p872 = pneg %p65
        %p873 = pneg %p62
        %s874 = sand.u32 %s78, 1
        %s875 = sand.u32 %s78, 1
        %s876 = smul.addr %s875, 256
        %s877 = scalar_lea.vmem [#allocation4], %s876
        %p878 = pneg %p91
        %p879 = pneg %p88
        %s880 = sand.u32 %s104, 1
        %s881 = sand.u32 %s104, 1
        %s882 = smul.addr %s881, 256
        %s883 = scalar_lea.vmem [#allocation5], %s882
        %p884 = pneg %p117
        %p885 = pneg %p114
        %s886 = sand.u32 %s130, 1
        %s887 = sand.u32 %s130, 1
        %s888 = smul.addr %s887, 256
        %s889 = scalar_lea.vmem [#allocation6], %s888
        %p890 = pneg %p143
        %p891 = pneg %p140
        %p892 = pneg %p169
        %p893 = pneg %p166
        %s894 = sand.u32 %s156, 1
        %s895 = sand.u32 %s156, 1
        %s896 = smul.addr %s895, 32
        %s897 = scalar_lea.vmem [#allocation7], %s896
        %p898 = pneg %p195
        %p899 = pneg %p192
        %s900 = sand.u32 %s182, 1
        %s901 = sand.u32 %s182, 1
        %s902 = smul.addr %s901, 32
        %s903 = scalar_lea.vmem [#allocation8], %s902
        %v904 = vld [vmem:[%s830] sm:$0xff]
        %v905 = vld [vmem:[%s830 + $0x8] sm:$0xff]
        %v906 = vld [vmem:[%s837] sm:$0xff]
        %v907 = vld [vmem:[%s837 + $0x8] sm:$0xff]
        %v908 = vld [vmem:[%s844] sm:$0xff]
        %v909 = vld [vmem:[%s844 + $0x8] sm:$0xff]
        %v910 = vadd.f32 %v904, %v906
        %v911 = vlaneseq
        %v912 = vshrl.u32 %v911, 7
        %v913 = vsub.s32 0, %v912
        %v914 = vrot.slane %v910, %v913
        %v915 = vmul.f32 %v908, %v914
        %v916 = vmul.f32 %v909, %v914
        %v917 = vld [vmem:[%s851] sm:$0xff]
        %v918 = vld [vmem:[%s851 + $0x8] sm:$0xff]
        %v919 = vlaneseq
        %v920 = vshrl.u32 %v919, 7
        %v921 = vsub.s32 0, %v920
        %v922 = vrot.slane %v906, %v921
        %v923 = vmul.f32 %v922, %v917
        %v924 = vmul.f32 %v922, %v918
        %v925 = vsub.f32 %v915, %v923
        %v926 = vsub.f32 %v916, %v924
        %v927 = vadd.f32 %v925, 0.0
        %v928 = vadd.f32 %v926, 0.0
        %v929 = vld [vmem:[%s858] sm:$0xff]
        %v930 = vld [vmem:[%s858 + $0x8] sm:$0xff]
        %v931 = vlaneseq
        %v932 = vshrl.u32 %v931, 7
        %v933 = vsub.s32 0, %v932
        %v934 = vrot.slane %v904, %v933
        %v935 = vmul.f32 %v934, %v929
        %v936 = vmul.f32 %v934, %v930
        %v937 = vadd.f32 %v915, %v935
        %v938 = vadd.f32 %v916, %v936
        %v939 = vadd.f32 %v937, 0.0
        %v940 = vadd.f32 %v938, 0.0
        %s941 = scalar_lea.vmem %s844, 16 [#allocation4]
        %v942 = vld [vmem:[%s941] sm:$0xff]
        %v943 = vld [vmem:[%s941 + $0x8] sm:$0xff]
        %v944 = vlaneseq
        %v945 = vshrl.u32 %v944, 7
        %v946 = vsub.s32 1, %v945
        %v947 = vrot.slane %v910, %v946
        %v948 = vmul.f32 %v942, %v947
        %v949 = vmul.f32 %v943, %v947
        %s950 = scalar_lea.vmem %s851, 16 [#allocation5]
        %v951 = vld [vmem:[%s950] sm:$0xff]
        %v952 = vld [vmem:[%s950 + $0x8] sm:$0xff]
        %v953 = vlaneseq
        %v954 = vshrl.u32 %v953, 7
        %v955 = vsub.s32 1, %v954
        %v956 = vrot.slane %v906, %v955
        %v957 = vmul.f32 %v956, %v951
        %v958 = vmul.f32 %v956, %v952
        %v959 = vsub.f32 %v948, %v957
        %v960 = vsub.f32 %v949, %v958
        %v961 = vadd.f32 %v927, %v959
        %v962 = vadd.f32 %v928, %v960
        %s963 = scalar_lea.vmem %s858, 16 [#allocation6]
        %v964 = vld [vmem:[%s963] sm:$0xff]
        %v965 = vld [vmem:[%s963 + $0x8] sm:$0xff]
        %v966 = vlaneseq
        %v967 = vshrl.u32 %v966, 7
        %v968 = vsub.s32 1, %v967
        %v969 = vrot.slane %v904, %v968
        %v970 = vmul.f32 %v969, %v964
        %v971 = vmul.f32 %v969, %v965
        %v972 = vadd.f32 %v948, %v970
        %v973 = vadd.f32 %v949, %v971
        %v974 = vadd.f32 %v939, %v972
        %v975 = vadd.f32 %v940, %v973
        %s976 = scalar_lea.vmem %s844, 32 [#allocation4]
        %v977 = vld [vmem:[%s976] sm:$0xff]
        %v978 = vld [vmem:[%s976 + $0x8] sm:$0xff]
        %v979 = vlaneseq
        %v980 = vshrl.u32 %v979, 7
        %v981 = vsub.s32 2, %v980
        %v982 = vrot.slane %v910, %v981
        %v983 = vmul.f32 %v977, %v982
        %v984 = vmul.f32 %v978, %v982
        %s985 = scalar_lea.vmem %s851, 32 [#allocation5]
        %v986 = vld [vmem:[%s985] sm:$0xff]
        %v987 = vld [vmem:[%s985 + $0x8] sm:$0xff]
        %v988 = vlaneseq
        %v989 = vshrl.u32 %v988, 7
        %v990 = vsub.s32 2, %v989
        %v991 = vrot.slane %v906, %v990
        %v992 = vmul.f32 %v991, %v986
        %v993 = vmul.f32 %v991, %v987
        %v994 = vsub.f32 %v983, %v992
        %v995 = vsub.f32 %v984, %v993
        %v996 = vadd.f32 %v961, %v994
        %v997 = vadd.f32 %v962, %v995
        %s998 = scalar_lea.vmem %s858, 32 [#allocation6]
        %v999 = vld [vmem:[%s998] sm:$0xff]
        %v1000 = vld [vmem:[%s998 + $0x8] sm:$0xff]
        %v1001 = vlaneseq
        %v1002 = vshrl.u32 %v1001, 7
        %v1003 = vsub.s32 2, %v1002
        %v1004 = vrot.slane %v904, %v1003
        %v1005 = vmul.f32 %v1004, %v999
        %v1006 = vmul.f32 %v1004, %v1000
        %v1007 = vadd.f32 %v983, %v1005
        %v1008 = vadd.f32 %v984, %v1006
        %v1009 = vadd.f32 %v974, %v1007
        %v1010 = vadd.f32 %v975, %v1008
        %s1011 = scalar_lea.vmem %s844, 48 [#allocation4]
        %v1012 = vld [vmem:[%s1011] sm:$0xff]
        %v1013 = vld [vmem:[%s1011 + $0x8] sm:$0xff]
        %v1014 = vlaneseq
        %v1015 = vshrl.u32 %v1014, 7
        %v1016 = vsub.s32 3, %v1015
        %v1017 = vrot.slane %v910, %v1016
        %v1018 = vmul.f32 %v1012, %v1017
        %v1019 = vmul.f32 %v1013, %v1017
        %s1020 = scalar_lea.vmem %s851, 48 [#allocation5]
        %v1021 = vld [vmem:[%s1020] sm:$0xff]
        %v1022 = vld [vmem:[%s1020 + $0x8] sm:$0xff]
        %v1023 = vlaneseq
        %v1024 = vshrl.u32 %v1023, 7
        %v1025 = vsub.s32 3, %v1024
        %v1026 = vrot.slane %v906, %v1025
        %v1027 = vmul.f32 %v1026, %v1021
        %v1028 = vmul.f32 %v1026, %v1022
        %v1029 = vsub.f32 %v1018, %v1027
        %v1030 = vsub.f32 %v1019, %v1028
        %v1031 = vadd.f32 %v996, %v1029
        %v1032 = vadd.f32 %v997, %v1030
        %s1033 = scalar_lea.vmem %s858, 48 [#allocation6]
        %v1034 = vld [vmem:[%s1033] sm:$0xff]
        %v1035 = vld [vmem:[%s1033 + $0x8] sm:$0xff]
        %v1036 = vlaneseq
        %v1037 = vshrl.u32 %v1036, 7
        %v1038 = vsub.s32 3, %v1037
        %v1039 = vrot.slane %v904, %v1038
        %v1040 = vmul.f32 %v1039, %v1034
        %v1041 = vmul.f32 %v1039, %v1035
        %v1042 = vadd.f32 %v1018, %v1040
        %v1043 = vadd.f32 %v1019, %v1041
        %v1044 = vadd.f32 %v1009, %v1042
        %v1045 = vadd.f32 %v1010, %v1043
        %s1046 = scalar_lea.vmem %s844, 64 [#allocation4]
        %v1047 = vld [vmem:[%s1046] sm:$0xff]
        %v1048 = vld [vmem:[%s1046 + $0x8] sm:$0xff]
        %v1049 = vlaneseq
        %v1050 = vshrl.u32 %v1049, 7
        %v1051 = vsub.s32 4, %v1050
        %v1052 = vrot.slane %v910, %v1051
        %v1053 = vmul.f32 %v1047, %v1052
        %v1054 = vmul.f32 %v1048, %v1052
        %s1055 = scalar_lea.vmem %s851, 64 [#allocation5]
        %v1056 = vld [vmem:[%s1055] sm:$0xff]
        %v1057 = vld [vmem:[%s1055 + $0x8] sm:$0xff]
        %v1058 = vlaneseq
        %v1059 = vshrl.u32 %v1058, 7
        %v1060 = vsub.s32 4, %v1059
        %v1061 = vrot.slane %v906, %v1060
        %v1062 = vmul.f32 %v1061, %v1056
        %v1063 = vmul.f32 %v1061, %v1057
        %v1064 = vsub.f32 %v1053, %v1062
        %v1065 = vsub.f32 %v1054, %v1063
        %v1066 = vadd.f32 %v1031, %v1064
        %v1067 = vadd.f32 %v1032, %v1065
        %s1068 = scalar_lea.vmem %s858, 64 [#allocation6]
        %v1069 = vld [vmem:[%s1068] sm:$0xff]
        %v1070 = vld [vmem:[%s1068 + $0x8] sm:$0xff]
        %v1071 = vlaneseq
        %v1072 = vshrl.u32 %v1071, 7
        %v1073 = vsub.s32 4, %v1072
        %v1074 = vrot.slane %v904, %v1073
        %v1075 = vmul.f32 %v1074, %v1069
        %v1076 = vmul.f32 %v1074, %v1070
        %v1077 = vadd.f32 %v1053, %v1075
        %v1078 = vadd.f32 %v1054, %v1076
        %v1079 = vadd.f32 %v1044, %v1077
        %v1080 = vadd.f32 %v1045, %v1078
        %s1081 = scalar_lea.vmem %s844, 80 [#allocation4]
        %v1082 = vld [vmem:[%s1081] sm:$0xff]
        %v1083 = vld [vmem:[%s1081 + $0x8] sm:$0xff]
        %v1084 = vlaneseq
        %v1085 = vshrl.u32 %v1084, 7
        %v1086 = vsub.s32 5, %v1085
        %v1087 = vrot.slane %v910, %v1086
        %v1088 = vmul.f32 %v1082, %v1087
        %v1089 = vmul.f32 %v1083, %v1087
        %s1090 = scalar_lea.vmem %s851, 80 [#allocation5]
        %v1091 = vld [vmem:[%s1090] sm:$0xff]
        %v1092 = vld [vmem:[%s1090 + $0x8] sm:$0xff]
        %v1093 = vlaneseq
        %v1094 = vshrl.u32 %v1093, 7
        %v1095 = vsub.s32 5, %v1094
        %v1096 = vrot.slane %v906, %v1095
        %v1097 = vmul.f32 %v1096, %v1091
        %v1098 = vmul.f32 %v1096, %v1092
        %v1099 = vsub.f32 %v1088, %v1097
        %v1100 = vsub.f32 %v1089, %v1098
        %v1101 = vadd.f32 %v1066, %v1099
        %v1102 = vadd.f32 %v1067, %v1100
        %s1103 = scalar_lea.vmem %s858, 80 [#allocation6]
        %v1104 = vld [vmem:[%s1103] sm:$0xff]
        %v1105 = vld [vmem:[%s1103 + $0x8] sm:$0xff]
        %v1106 = vlaneseq
        %v1107 = vshrl.u32 %v1106, 7
        %v1108 = vsub.s32 5, %v1107
        %v1109 = vrot.slane %v904, %v1108
        %v1110 = vmul.f32 %v1109, %v1104
        %v1111 = vmul.f32 %v1109, %v1105
        %v1112 = vadd.f32 %v1088, %v1110
        %v1113 = vadd.f32 %v1089, %v1111
        %v1114 = vadd.f32 %v1079, %v1112
        %v1115 = vadd.f32 %v1080, %v1113
        %s1116 = scalar_lea.vmem %s844, 96 [#allocation4]
        %v1117 = vld [vmem:[%s1116] sm:$0xff]
        %v1118 = vld [vmem:[%s1116 + $0x8] sm:$0xff]
        %v1119 = vlaneseq
        %v1120 = vshrl.u32 %v1119, 7
        %v1121 = vsub.s32 6, %v1120
        %v1122 = vrot.slane %v910, %v1121
        %v1123 = vmul.f32 %v1117, %v1122
        %v1124 = vmul.f32 %v1118, %v1122
        %s1125 = scalar_lea.vmem %s851, 96 [#allocation5]
        %v1126 = vld [vmem:[%s1125] sm:$0xff]
        %v1127 = vld [vmem:[%s1125 + $0x8] sm:$0xff]
        %v1128 = vlaneseq
        %v1129 = vshrl.u32 %v1128, 7
        %v1130 = vsub.s32 6, %v1129
        %v1131 = vrot.slane %v906, %v1130
        %v1132 = vmul.f32 %v1131, %v1126
        %v1133 = vmul.f32 %v1131, %v1127
        %v1134 = vsub.f32 %v1123, %v1132
        %v1135 = vsub.f32 %v1124, %v1133
        %v1136 = vadd.f32 %v1101, %v1134
        %v1137 = vadd.f32 %v1102, %v1135
        %s1138 = scalar_lea.vmem %s858, 96 [#allocation6]
        %v1139 = vld [vmem:[%s1138] sm:$0xff]
        %v1140 = vld [vmem:[%s1138 + $0x8] sm:$0xff]
        %v1141 = vlaneseq
        %v1142 = vshrl.u32 %v1141, 7
        %v1143 = vsub.s32 6, %v1142
        %v1144 = vrot.slane %v904, %v1143
        %v1145 = vmul.f32 %v1144, %v1139
        %v1146 = vmul.f32 %v1144, %v1140
        %v1147 = vadd.f32 %v1123, %v1145
        %v1148 = vadd.f32 %v1124, %v1146
        %v1149 = vadd.f32 %v1114, %v1147
        %v1150 = vadd.f32 %v1115, %v1148
        %s1151 = scalar_lea.vmem %s844, 112 [#allocation4]
        %v1152 = vld [vmem:[%s1151] sm:$0xff]
        %v1153 = vld [vmem:[%s1151 + $0x8] sm:$0xff]
        %v1154 = vlaneseq
        %v1155 = vshrl.u32 %v1154, 7
        %v1156 = vsub.s32 7, %v1155
        %v1157 = vrot.slane %v910, %v1156
        %v1158 = vmul.f32 %v1152, %v1157
        %v1159 = vmul.f32 %v1153, %v1157
        %s1160 = scalar_lea.vmem %s851, 112 [#allocation5]
        %v1161 = vld [vmem:[%s1160] sm:$0xff]
        %v1162 = vld [vmem:[%s1160 + $0x8] sm:$0xff]
        %v1163 = vlaneseq
        %v1164 = vshrl.u32 %v1163, 7
        %v1165 = vsub.s32 7, %v1164
        %v1166 = vrot.slane %v906, %v1165
        %v1167 = vmul.f32 %v1166, %v1161
        %v1168 = vmul.f32 %v1166, %v1162
        %v1169 = vsub.f32 %v1158, %v1167
        %v1170 = vsub.f32 %v1159, %v1168
        %v1171 = vadd.f32 %v1136, %v1169
        %v1172 = vadd.f32 %v1137, %v1170
        %s1173 = scalar_lea.vmem %s858, 112 [#allocation6]
        %v1174 = vld [vmem:[%s1173] sm:$0xff]
        %v1175 = vld [vmem:[%s1173 + $0x8] sm:$0xff]
        %v1176 = vlaneseq
        %v1177 = vshrl.u32 %v1176, 7
        %v1178 = vsub.s32 7, %v1177
        %v1179 = vrot.slane %v904, %v1178
        %v1180 = vmul.f32 %v1179, %v1174
        %v1181 = vmul.f32 %v1179, %v1175
        %v1182 = vadd.f32 %v1158, %v1180
        %v1183 = vadd.f32 %v1159, %v1181
        %v1184 = vadd.f32 %v1149, %v1182
        %v1185 = vadd.f32 %v1150, %v1183
        %s1186 = scalar_lea.vmem %s844, 128 [#allocation4]
        %v1187 = vld [vmem:[%s1186] sm:$0xff]
        %v1188 = vld [vmem:[%s1186 + $0x8] sm:$0xff]
        %v1189 = vadd.f32 %v905, %v907
        %v1190 = vlaneseq
        %v1191 = vshrl.u32 %v1190, 7
        %v1192 = vsub.s32 0, %v1191
        %v1193 = vrot.slane %v1189, %v1192
        %v1194 = vmul.f32 %v1187, %v1193
        %v1195 = vmul.f32 %v1188, %v1193
        %s1196 = scalar_lea.vmem %s851, 128 [#allocation5]
        %v1197 = vld [vmem:[%s1196] sm:$0xff]
        %v1198 = vld [vmem:[%s1196 + $0x8] sm:$0xff]
        %v1199 = vlaneseq
        %v1200 = vshrl.u32 %v1199, 7
        %v1201 = vsub.s32 0, %v1200
        %v1202 = vrot.slane %v907, %v1201
        %v1203 = vmul.f32 %v1202, %v1197
        %v1204 = vmul.f32 %v1202, %v1198
        %v1205 = vsub.f32 %v1194, %v1203
        %v1206 = vsub.f32 %v1195, %v1204
        %v1207 = vadd.f32 %v1171, %v1205
        %v1208 = vadd.f32 %v1172, %v1206
        %s1209 = scalar_lea.vmem %s858, 128 [#allocation6]
        %v1210 = vld [vmem:[%s1209] sm:$0xff]
        %v1211 = vld [vmem:[%s1209 + $0x8] sm:$0xff]
        %v1212 = vlaneseq
        %v1213 = vshrl.u32 %v1212, 7
        %v1214 = vsub.s32 0, %v1213
        %v1215 = vrot.slane %v905, %v1214
        %v1216 = vmul.f32 %v1215, %v1210
        %v1217 = vmul.f32 %v1215, %v1211
        %v1218 = vadd.f32 %v1194, %v1216
        %v1219 = vadd.f32 %v1195, %v1217
        %v1220 = vadd.f32 %v1184, %v1218
        %v1221 = vadd.f32 %v1185, %v1219
        %s1222 = scalar_lea.vmem %s844, 144 [#allocation4]
        %v1223 = vld [vmem:[%s1222] sm:$0xff]
        %v1224 = vld [vmem:[%s1222 + $0x8] sm:$0xff]
        %v1225 = vlaneseq
        %v1226 = vshrl.u32 %v1225, 7
        %v1227 = vsub.s32 1, %v1226
        %v1228 = vrot.slane %v1189, %v1227
        %v1229 = vmul.f32 %v1223, %v1228
        %v1230 = vmul.f32 %v1224, %v1228
        %s1231 = scalar_lea.vmem %s851, 144 [#allocation5]
        %v1232 = vld [vmem:[%s1231] sm:$0xff]
        %v1233 = vld [vmem:[%s1231 + $0x8] sm:$0xff]
        %v1234 = vlaneseq
        %v1235 = vshrl.u32 %v1234, 7
        %v1236 = vsub.s32 1, %v1235
        %v1237 = vrot.slane %v907, %v1236
        %v1238 = vmul.f32 %v1237, %v1232
        %v1239 = vmul.f32 %v1237, %v1233
        %v1240 = vsub.f32 %v1229, %v1238
        %v1241 = vsub.f32 %v1230, %v1239
        %v1242 = vadd.f32 %v1207, %v1240
        %v1243 = vadd.f32 %v1208, %v1241
        %s1244 = scalar_lea.vmem %s858, 144 [#allocation6]
        %v1245 = vld [vmem:[%s1244] sm:$0xff]
        %v1246 = vld [vmem:[%s1244 + $0x8] sm:$0xff]
        %v1247 = vlaneseq
        %v1248 = vshrl.u32 %v1247, 7
        %v1249 = vsub.s32 1, %v1248
        %v1250 = vrot.slane %v905, %v1249
        %v1251 = vmul.f32 %v1250, %v1245
        %v1252 = vmul.f32 %v1250, %v1246
        %v1253 = vadd.f32 %v1229, %v1251
        %v1254 = vadd.f32 %v1230, %v1252
        %v1255 = vadd.f32 %v1220, %v1253
        %v1256 = vadd.f32 %v1221, %v1254
        %s1257 = scalar_lea.vmem %s844, 160 [#allocation4]
        %v1258 = vld [vmem:[%s1257] sm:$0xff]
        %v1259 = vld [vmem:[%s1257 + $0x8] sm:$0xff]
        %v1260 = vlaneseq
        %v1261 = vshrl.u32 %v1260, 7
        %v1262 = vsub.s32 2, %v1261
        %v1263 = vrot.slane %v1189, %v1262
        %v1264 = vmul.f32 %v1258, %v1263
        %v1265 = vmul.f32 %v1259, %v1263
        %s1266 = scalar_lea.vmem %s851, 160 [#allocation5]
        %v1267 = vld [vmem:[%s1266] sm:$0xff]
        %v1268 = vld [vmem:[%s1266 + $0x8] sm:$0xff]
        %v1269 = vlaneseq
        %v1270 = vshrl.u32 %v1269, 7
        %v1271 = vsub.s32 2, %v1270
        %v1272 = vrot.slane %v907, %v1271
        %v1273 = vmul.f32 %v1272, %v1267
        %v1274 = vmul.f32 %v1272, %v1268
        %v1275 = vsub.f32 %v1264, %v1273
        %v1276 = vsub.f32 %v1265, %v1274
        %v1277 = vadd.f32 %v1242, %v1275
        %v1278 = vadd.f32 %v1243, %v1276
        %s1279 = scalar_lea.vmem %s858, 160 [#allocation6]
        %v1280 = vld [vmem:[%s1279] sm:$0xff]
        %v1281 = vld [vmem:[%s1279 + $0x8] sm:$0xff]
        %v1282 = vlaneseq
        %v1283 = vshrl.u32 %v1282, 7
        %v1284 = vsub.s32 2, %v1283
        %v1285 = vrot.slane %v905, %v1284
        %v1286 = vmul.f32 %v1285, %v1280
        %v1287 = vmul.f32 %v1285, %v1281
        %v1288 = vadd.f32 %v1264, %v1286
        %v1289 = vadd.f32 %v1265, %v1287
        %v1290 = vadd.f32 %v1255, %v1288
        %v1291 = vadd.f32 %v1256, %v1289
        %s1292 = scalar_lea.vmem %s844, 176 [#allocation4]
        %v1293 = vld [vmem:[%s1292] sm:$0xff]
        %v1294 = vld [vmem:[%s1292 + $0x8] sm:$0xff]
        %v1295 = vlaneseq
        %v1296 = vshrl.u32 %v1295, 7
        %v1297 = vsub.s32 3, %v1296
        %v1298 = vrot.slane %v1189, %v1297
        %v1299 = vmul.f32 %v1293, %v1298
        %v1300 = vmul.f32 %v1294, %v1298
        %s1301 = scalar_lea.vmem %s851, 176 [#allocation5]
        %v1302 = vld [vmem:[%s1301] sm:$0xff]
        %v1303 = vld [vmem:[%s1301 + $0x8] sm:$0xff]
        %v1304 = vlaneseq
        %v1305 = vshrl.u32 %v1304, 7
        %v1306 = vsub.s32 3, %v1305
        %v1307 = vrot.slane %v907, %v1306
        %v1308 = vmul.f32 %v1307, %v1302
        %v1309 = vmul.f32 %v1307, %v1303
        %v1310 = vsub.f32 %v1299, %v1308
        %v1311 = vsub.f32 %v1300, %v1309
        %v1312 = vadd.f32 %v1277, %v1310
        %v1313 = vadd.f32 %v1278, %v1311
        %s1314 = scalar_lea.vmem %s858, 176 [#allocation6]
        %v1315 = vld [vmem:[%s1314] sm:$0xff]
        %v1316 = vld [vmem:[%s1314 + $0x8] sm:$0xff]
        %v1317 = vlaneseq
        %v1318 = vshrl.u32 %v1317, 7
        %v1319 = vsub.s32 3, %v1318
        %v1320 = vrot.slane %v905, %v1319
        %v1321 = vmul.f32 %v1320, %v1315
        %v1322 = vmul.f32 %v1320, %v1316
        %v1323 = vadd.f32 %v1299, %v1321
        %v1324 = vadd.f32 %v1300, %v1322
        %v1325 = vadd.f32 %v1290, %v1323
        %v1326 = vadd.f32 %v1291, %v1324
        %s1327 = scalar_lea.vmem %s844, 192 [#allocation4]
        %v1328 = vld [vmem:[%s1327] sm:$0xff]
        %v1329 = vld [vmem:[%s1327 + $0x8] sm:$0xff]
        %v1330 = vlaneseq
        %v1331 = vshrl.u32 %v1330, 7
        %v1332 = vsub.s32 4, %v1331
        %v1333 = vrot.slane %v1189, %v1332
        %v1334 = vmul.f32 %v1328, %v1333
        %v1335 = vmul.f32 %v1329, %v1333
        %s1336 = scalar_lea.vmem %s851, 192 [#allocation5]
        %v1337 = vld [vmem:[%s1336] sm:$0xff]
        %v1338 = vld [vmem:[%s1336 + $0x8] sm:$0xff]
        %v1339 = vlaneseq
        %v1340 = vshrl.u32 %v1339, 7
        %v1341 = vsub.s32 4, %v1340
        %v1342 = vrot.slane %v907, %v1341
        %v1343 = vmul.f32 %v1342, %v1337
        %v1344 = vmul.f32 %v1342, %v1338
        %v1345 = vsub.f32 %v1334, %v1343
        %v1346 = vsub.f32 %v1335, %v1344
        %v1347 = vadd.f32 %v1312, %v1345
        %v1348 = vadd.f32 %v1313, %v1346
        %s1349 = scalar_lea.vmem %s858, 192 [#allocation6]
        %v1350 = vld [vmem:[%s1349] sm:$0xff]
        %v1351 = vld [vmem:[%s1349 + $0x8] sm:$0xff]
        %v1352 = vlaneseq
        %v1353 = vshrl.u32 %v1352, 7
        %v1354 = vsub.s32 4, %v1353
        %v1355 = vrot.slane %v905, %v1354
        %v1356 = vmul.f32 %v1355, %v1350
        %v1357 = vmul.f32 %v1355, %v1351
        %v1358 = vadd.f32 %v1334, %v1356
        %v1359 = vadd.f32 %v1335, %v1357
        %v1360 = vadd.f32 %v1325, %v1358
        %v1361 = vadd.f32 %v1326, %v1359
        %s1362 = scalar_lea.vmem %s844, 208 [#allocation4]
        %v1363 = vld [vmem:[%s1362] sm:$0xff]
        %v1364 = vld [vmem:[%s1362 + $0x8] sm:$0xff]
        %v1365 = vlaneseq
        %v1366 = vshrl.u32 %v1365, 7
        %v1367 = vsub.s32 5, %v1366
        %v1368 = vrot.slane %v1189, %v1367
        %v1369 = vmul.f32 %v1363, %v1368
        %v1370 = vmul.f32 %v1364, %v1368
        %s1371 = scalar_lea.vmem %s851, 208 [#allocation5]
        %v1372 = vld [vmem:[%s1371] sm:$0xff]
        %v1373 = vld [vmem:[%s1371 + $0x8] sm:$0xff]
        %v1374 = vlaneseq
        %v1375 = vshrl.u32 %v1374, 7
        %v1376 = vsub.s32 5, %v1375
        %v1377 = vrot.slane %v907, %v1376
        %v1378 = vmul.f32 %v1377, %v1372
        %v1379 = vmul.f32 %v1377, %v1373
        %v1380 = vsub.f32 %v1369, %v1378
        %v1381 = vsub.f32 %v1370, %v1379
        %v1382 = vadd.f32 %v1347, %v1380
        %v1383 = vadd.f32 %v1348, %v1381
        %s1384 = scalar_lea.vmem %s858, 208 [#allocation6]
        %v1385 = vld [vmem:[%s1384] sm:$0xff]
        %v1386 = vld [vmem:[%s1384 + $0x8] sm:$0xff]
        %v1387 = vlaneseq
        %v1388 = vshrl.u32 %v1387, 7
        %v1389 = vsub.s32 5, %v1388
        %v1390 = vrot.slane %v905, %v1389
        %v1391 = vmul.f32 %v1390, %v1385
        %v1392 = vmul.f32 %v1390, %v1386
        %v1393 = vadd.f32 %v1369, %v1391
        %v1394 = vadd.f32 %v1370, %v1392
        %v1395 = vadd.f32 %v1360, %v1393
        %v1396 = vadd.f32 %v1361, %v1394
        %s1397 = scalar_lea.vmem %s844, 224 [#allocation4]
        %v1398 = vld [vmem:[%s1397] sm:$0xff]
        %v1399 = vld [vmem:[%s1397 + $0x8] sm:$0xff]
        %v1400 = vlaneseq
        %v1401 = vshrl.u32 %v1400, 7
        %v1402 = vsub.s32 6, %v1401
        %v1403 = vrot.slane %v1189, %v1402
        %v1404 = vmul.f32 %v1398, %v1403
        %v1405 = vmul.f32 %v1399, %v1403
        %s1406 = scalar_lea.vmem %s851, 224 [#allocation5]
        %v1407 = vld [vmem:[%s1406] sm:$0xff]
        %v1408 = vld [vmem:[%s1406 + $0x8] sm:$0xff]
        %v1409 = vlaneseq
        %v1410 = vshrl.u32 %v1409, 7
        %v1411 = vsub.s32 6, %v1410
        %v1412 = vrot.slane %v907, %v1411
        %v1413 = vmul.f32 %v1412, %v1407
        %v1414 = vmul.f32 %v1412, %v1408
        %v1415 = vsub.f32 %v1404, %v1413
        %v1416 = vsub.f32 %v1405, %v1414
        %v1417 = vadd.f32 %v1382, %v1415
        %v1418 = vadd.f32 %v1383, %v1416
        %s1419 = scalar_lea.vmem %s858, 224 [#allocation6]
        %v1420 = vld [vmem:[%s1419] sm:$0xff]
        %v1421 = vld [vmem:[%s1419 + $0x8] sm:$0xff]
        %v1422 = vlaneseq
        %v1423 = vshrl.u32 %v1422, 7
        %v1424 = vsub.s32 6, %v1423
        %v1425 = vrot.slane %v905, %v1424
        %v1426 = vmul.f32 %v1425, %v1420
        %v1427 = vmul.f32 %v1425, %v1421
        %v1428 = vadd.f32 %v1404, %v1426
        %v1429 = vadd.f32 %v1405, %v1427
        %v1430 = vadd.f32 %v1395, %v1428
        %v1431 = vadd.f32 %v1396, %v1429
        %s1432 = scalar_lea.vmem %s844, 240 [#allocation4]
        %v1433 = vld [vmem:[%s1432] sm:$0xff]
        %v1434 = vld [vmem:[%s1432 + $0x8] sm:$0xff]
        %v1435 = vlaneseq
        %v1436 = vshrl.u32 %v1435, 7
        %v1437 = vsub.s32 7, %v1436
        %v1438 = vrot.slane %v1189, %v1437
        %v1439 = vmul.f32 %v1433, %v1438
        %v1440 = vmul.f32 %v1434, %v1438
        %s1441 = scalar_lea.vmem %s851, 240 [#allocation5]
        %v1442 = vld [vmem:[%s1441] sm:$0xff]
        %v1443 = vld [vmem:[%s1441 + $0x8] sm:$0xff]
        %v1444 = vlaneseq
        %v1445 = vshrl.u32 %v1444, 7
        %v1446 = vsub.s32 7, %v1445
        %v1447 = vrot.slane %v907, %v1446
        %v1448 = vmul.f32 %v1447, %v1442
        %v1449 = vmul.f32 %v1447, %v1443
        %v1450 = vsub.f32 %v1439, %v1448
        %v1451 = vsub.f32 %v1440, %v1449
        %v1452 = vadd.f32 %v1417, %v1450
        %v1453 = vadd.f32 %v1418, %v1451
        %s1454 = scalar_lea.vmem %s858, 240 [#allocation6]
        %v1455 = vld [vmem:[%s1454] sm:$0xff]
        %v1456 = vld [vmem:[%s1454 + $0x8] sm:$0xff]
        %v1457 = vlaneseq
        %v1458 = vshrl.u32 %v1457, 7
        %v1459 = vsub.s32 7, %v1458
        %v1460 = vrot.slane %v905, %v1459
        %v1461 = vmul.f32 %v1460, %v1455
        %v1462 = vmul.f32 %v1460, %v1456
        %v1463 = vadd.f32 %v1439, %v1461
        %v1464 = vadd.f32 %v1440, %v1462
        %v1465 = vadd.f32 %v1430, %v1463
        %v1466 = vadd.f32 %v1431, %v1464
        %1467 = vst [vmem:[%s897] sm:$0xff] %v1452
        %1468 = vst [vmem:[%s897 + $0x8] sm:$0xff] %v1453
        %1469 = vst [vmem:[%s903] sm:$0xff] %v1465
        %1470 = vst [vmem:[%s903 + $0x8] sm:$0xff] %v1466
        %s1471 = scalar_lea.vmem %s830, 16 [#allocation2]
        %v1472 = vld [vmem:[%s1471] sm:$0xff]
        %v1473 = vld [vmem:[%s1471 + $0x8] sm:$0xff]
        %s1474 = scalar_lea.vmem %s837, 16 [#allocation3]
        %v1475 = vld [vmem:[%s1474] sm:$0xff]
        %v1476 = vld [vmem:[%s1474 + $0x8] sm:$0xff]
        %v1477 = vld [vmem:[%s844] sm:$0xff]
        %v1478 = vld [vmem:[%s844 + $0x8] sm:$0xff]
        %v1479 = vadd.f32 %v1472, %v1475
        %v1480 = vlaneseq
        %v1481 = vshrl.u32 %v1480, 7
        %v1482 = vsub.s32 0, %v1481
        %v1483 = vrot.slane %v1479, %v1482
        %v1484 = vmul.f32 %v1477, %v1483
        %v1485 = vmul.f32 %v1478, %v1483
        %v1486 = vld [vmem:[%s851] sm:$0xff]
        %v1487 = vld [vmem:[%s851 + $0x8] sm:$0xff]
        %v1488 = vlaneseq
        %v1489 = vshrl.u32 %v1488, 7
        %v1490 = vsub.s32 0, %v1489
        %v1491 = vrot.slane %v1475, %v1490
        %v1492 = vmul.f32 %v1491, %v1486
        %v1493 = vmul.f32 %v1491, %v1487
        %v1494 = vsub.f32 %v1484, %v1492
        %v1495 = vsub.f32 %v1485, %v1493
        %v1496 = vadd.f32 %v1494, 0.0
        %v1497 = vadd.f32 %v1495, 0.0
        %v1498 = vld [vmem:[%s858] sm:$0xff]
        %v1499 = vld [vmem:[%s858 + $0x8] sm:$0xff]
        %v1500 = vlaneseq
        %v1501 = vshrl.u32 %v1500, 7
        %v1502 = vsub.s32 0, %v1501
        %v1503 = vrot.slane %v1472, %v1502
        %v1504 = vmul.f32 %v1503, %v1498
        %v1505 = vmul.f32 %v1503, %v1499
        %v1506 = vadd.f32 %v1484, %v1504
        %v1507 = vadd.f32 %v1485, %v1505
        %v1508 = vadd.f32 %v1506, 0.0
        %v1509 = vadd.f32 %v1507, 0.0
        %v1510 = vld [vmem:[%s941] sm:$0xff]
        %v1511 = vld [vmem:[%s941 + $0x8] sm:$0xff]
        %v1512 = vlaneseq
        %v1513 = vshrl.u32 %v1512, 7
        %v1514 = vsub.s32 1, %v1513
        %v1515 = vrot.slane %v1479, %v1514
        %v1516 = vmul.f32 %v1510, %v1515
        %v1517 = vmul.f32 %v1511, %v1515
        %v1518 = vld [vmem:[%s950] sm:$0xff]
        %v1519 = vld [vmem:[%s950 + $0x8] sm:$0xff]
        %v1520 = vlaneseq
        %v1521 = vshrl.u32 %v1520, 7
        %v1522 = vsub.s32 1, %v1521
        %v1523 = vrot.slane %v1475, %v1522
        %v1524 = vmul.f32 %v1523, %v1518
        %v1525 = vmul.f32 %v1523, %v1519
        %v1526 = vsub.f32 %v1516, %v1524
        %v1527 = vsub.f32 %v1517, %v1525
        %v1528 = vadd.f32 %v1496, %v1526
        %v1529 = vadd.f32 %v1497, %v1527
        %v1530 = vld [vmem:[%s963] sm:$0xff]
        %v1531 = vld [vmem:[%s963 + $0x8] sm:$0xff]
        %v1532 = vlaneseq
        %v1533 = vshrl.u32 %v1532, 7
        %v1534 = vsub.s32 1, %v1533
        %v1535 = vrot.slane %v1472, %v1534
        %v1536 = vmul.f32 %v1535, %v1530
        %v1537 = vmul.f32 %v1535, %v1531
        %v1538 = vadd.f32 %v1516, %v1536
        %v1539 = vadd.f32 %v1517, %v1537
        %v1540 = vadd.f32 %v1508, %v1538
        %v1541 = vadd.f32 %v1509, %v1539
        %v1542 = vld [vmem:[%s976] sm:$0xff]
        %v1543 = vld [vmem:[%s976 + $0x8] sm:$0xff]
        %v1544 = vlaneseq
        %v1545 = vshrl.u32 %v1544, 7
        %v1546 = vsub.s32 2, %v1545
        %v1547 = vrot.slane %v1479, %v1546
        %v1548 = vmul.f32 %v1542, %v1547
        %v1549 = vmul.f32 %v1543, %v1547
        %v1550 = vld [vmem:[%s985] sm:$0xff]
        %v1551 = vld [vmem:[%s985 + $0x8] sm:$0xff]
        %v1552 = vlaneseq
        %v1553 = vshrl.u32 %v1552, 7
        %v1554 = vsub.s32 2, %v1553
        %v1555 = vrot.slane %v1475, %v1554
        %v1556 = vmul.f32 %v1555, %v1550
        %v1557 = vmul.f32 %v1555, %v1551
        %v1558 = vsub.f32 %v1548, %v1556
        %v1559 = vsub.f32 %v1549, %v1557
        %v1560 = vadd.f32 %v1528, %v1558
        %v1561 = vadd.f32 %v1529, %v1559
        %v1562 = vld [vmem:[%s998] sm:$0xff]
        %v1563 = vld [vmem:[%s998 + $0x8] sm:$0xff]
        %v1564 = vlaneseq
        %v1565 = vshrl.u32 %v1564, 7
        %v1566 = vsub.s32 2, %v1565
        %v1567 = vrot.slane %v1472, %v1566
        %v1568 = vmul.f32 %v1567, %v1562
        %v1569 = vmul.f32 %v1567, %v1563
        %v1570 = vadd.f32 %v1548, %v1568
        %v1571 = vadd.f32 %v1549, %v1569
        %v1572 = vadd.f32 %v1540, %v1570
        %v1573 = vadd.f32 %v1541, %v1571
        %v1574 = vld [vmem:[%s1011] sm:$0xff]
        %v1575 = vld [vmem:[%s1011 + $0x8] sm:$0xff]
        %v1576 = vlaneseq
        %v1577 = vshrl.u32 %v1576, 7
        %v1578 = vsub.s32 3, %v1577
        %v1579 = vrot.slane %v1479, %v1578
        %v1580 = vmul.f32 %v1574, %v1579
        %v1581 = vmul.f32 %v1575, %v1579
        %v1582 = vld [vmem:[%s1020] sm:$0xff]
        %v1583 = vld [vmem:[%s1020 + $0x8] sm:$0xff]
        %v1584 = vlaneseq
        %v1585 = vshrl.u32 %v1584, 7
        %v1586 = vsub.s32 3, %v1585
        %v1587 = vrot.slane %v1475, %v1586
        %v1588 = vmul.f32 %v1587, %v1582
        %v1589 = vmul.f32 %v1587, %v1583
        %v1590 = vsub.f32 %v1580, %v1588
        %v1591 = vsub.f32 %v1581, %v1589
        %v1592 = vadd.f32 %v1560, %v1590
        %v1593 = vadd.f32 %v1561, %v1591
        %v1594 = vld [vmem:[%s1033] sm:$0xff]
        %v1595 = vld [vmem:[%s1033 + $0x8] sm:$0xff]
        %v1596 = vlaneseq
        %v1597 = vshrl.u32 %v1596, 7
        %v1598 = vsub.s32 3, %v1597
        %v1599 = vrot.slane %v1472, %v1598
        %v1600 = vmul.f32 %v1599, %v1594
        %v1601 = vmul.f32 %v1599, %v1595
        %v1602 = vadd.f32 %v1580, %v1600
        %v1603 = vadd.f32 %v1581, %v1601
        %v1604 = vadd.f32 %v1572, %v1602
        %v1605 = vadd.f32 %v1573, %v1603
        %v1606 = vld [vmem:[%s1046] sm:$0xff]
        %v1607 = vld [vmem:[%s1046 + $0x8] sm:$0xff]
        %v1608 = vlaneseq
        %v1609 = vshrl.u32 %v1608, 7
        %v1610 = vsub.s32 4, %v1609
        %v1611 = vrot.slane %v1479, %v1610
        %v1612 = vmul.f32 %v1606, %v1611
        %v1613 = vmul.f32 %v1607, %v1611
        %v1614 = vld [vmem:[%s1055] sm:$0xff]
        %v1615 = vld [vmem:[%s1055 + $0x8] sm:$0xff]
        %v1616 = vlaneseq
        %v1617 = vshrl.u32 %v1616, 7
        %v1618 = vsub.s32 4, %v1617
        %v1619 = vrot.slane %v1475, %v1618
        %v1620 = vmul.f32 %v1619, %v1614
        %v1621 = vmul.f32 %v1619, %v1615
        %v1622 = vsub.f32 %v1612, %v1620
        %v1623 = vsub.f32 %v1613, %v1621
        %v1624 = vadd.f32 %v1592, %v1622
        %v1625 = vadd.f32 %v1593, %v1623
        %v1626 = vld [vmem:[%s1068] sm:$0xff]
        %v1627 = vld [vmem:[%s1068 + $0x8] sm:$0xff]
        %v1628 = vlaneseq
        %v1629 = vshrl.u32 %v1628, 7
        %v1630 = vsub.s32 4, %v1629
        %v1631 = vrot.slane %v1472, %v1630
        %v1632 = vmul.f32 %v1631, %v1626
        %v1633 = vmul.f32 %v1631, %v1627
        %v1634 = vadd.f32 %v1612, %v1632
        %v1635 = vadd.f32 %v1613, %v1633
        %v1636 = vadd.f32 %v1604, %v1634
        %v1637 = vadd.f32 %v1605, %v1635
        %v1638 = vld [vmem:[%s1081] sm:$0xff]
        %v1639 = vld [vmem:[%s1081 + $0x8] sm:$0xff]
        %v1640 = vlaneseq
        %v1641 = vshrl.u32 %v1640, 7
        %v1642 = vsub.s32 5, %v1641
        %v1643 = vrot.slane %v1479, %v1642
        %v1644 = vmul.f32 %v1638, %v1643
        %v1645 = vmul.f32 %v1639, %v1643
        %v1646 = vld [vmem:[%s1090] sm:$0xff]
        %v1647 = vld [vmem:[%s1090 + $0x8] sm:$0xff]
        %v1648 = vlaneseq
        %v1649 = vshrl.u32 %v1648, 7
        %v1650 = vsub.s32 5, %v1649
        %v1651 = vrot.slane %v1475, %v1650
        %v1652 = vmul.f32 %v1651, %v1646
        %v1653 = vmul.f32 %v1651, %v1647
        %v1654 = vsub.f32 %v1644, %v1652
        %v1655 = vsub.f32 %v1645, %v1653
        %v1656 = vadd.f32 %v1624, %v1654
        %v1657 = vadd.f32 %v1625, %v1655
        %v1658 = vld [vmem:[%s1103] sm:$0xff]
        %v1659 = vld [vmem:[%s1103 + $0x8] sm:$0xff]
        %v1660 = vlaneseq
        %v1661 = vshrl.u32 %v1660, 7
        %v1662 = vsub.s32 5, %v1661
        %v1663 = vrot.slane %v1472, %v1662
        %v1664 = vmul.f32 %v1663, %v1658
        %v1665 = vmul.f32 %v1663, %v1659
        %v1666 = vadd.f32 %v1644, %v1664
        %v1667 = vadd.f32 %v1645, %v1665
        %v1668 = vadd.f32 %v1636, %v1666
        %v1669 = vadd.f32 %v1637, %v1667
        %v1670 = vld [vmem:[%s1116] sm:$0xff]
        %v1671 = vld [vmem:[%s1116 + $0x8] sm:$0xff]
        %v1672 = vlaneseq
        %v1673 = vshrl.u32 %v1672, 7
        %v1674 = vsub.s32 6, %v1673
        %v1675 = vrot.slane %v1479, %v1674
        %v1676 = vmul.f32 %v1670, %v1675
        %v1677 = vmul.f32 %v1671, %v1675
        %v1678 = vld [vmem:[%s1125] sm:$0xff]
        %v1679 = vld [vmem:[%s1125 + $0x8] sm:$0xff]
        %v1680 = vlaneseq
        %v1681 = vshrl.u32 %v1680, 7
        %v1682 = vsub.s32 6, %v1681
        %v1683 = vrot.slane %v1475, %v1682
        %v1684 = vmul.f32 %v1683, %v1678
        %v1685 = vmul.f32 %v1683, %v1679
        %v1686 = vsub.f32 %v1676, %v1684
        %v1687 = vsub.f32 %v1677, %v1685
        %v1688 = vadd.f32 %v1656, %v1686
        %v1689 = vadd.f32 %v1657, %v1687
        %v1690 = vld [vmem:[%s1138] sm:$0xff]
        %v1691 = vld [vmem:[%s1138 + $0x8] sm:$0xff]
        %v1692 = vlaneseq
        %v1693 = vshrl.u32 %v1692, 7
        %v1694 = vsub.s32 6, %v1693
        %v1695 = vrot.slane %v1472, %v1694
        %v1696 = vmul.f32 %v1695, %v1690
        %v1697 = vmul.f32 %v1695, %v1691
        %v1698 = vadd.f32 %v1676, %v1696
        %v1699 = vadd.f32 %v1677, %v1697
        %v1700 = vadd.f32 %v1668, %v1698
        %v1701 = vadd.f32 %v1669, %v1699
        %v1702 = vld [vmem:[%s1151] sm:$0xff]
        %v1703 = vld [vmem:[%s1151 + $0x8] sm:$0xff]
        %v1704 = vlaneseq
        %v1705 = vshrl.u32 %v1704, 7
        %v1706 = vsub.s32 7, %v1705
        %v1707 = vrot.slane %v1479, %v1706
        %v1708 = vmul.f32 %v1702, %v1707
        %v1709 = vmul.f32 %v1703, %v1707
        %v1710 = vld [vmem:[%s1160] sm:$0xff]
        %v1711 = vld [vmem:[%s1160 + $0x8] sm:$0xff]
        %v1712 = vlaneseq
        %v1713 = vshrl.u32 %v1712, 7
        %v1714 = vsub.s32 7, %v1713
        %v1715 = vrot.slane %v1475, %v1714
        %v1716 = vmul.f32 %v1715, %v1710
        %v1717 = vmul.f32 %v1715, %v1711
        %v1718 = vsub.f32 %v1708, %v1716
        %v1719 = vsub.f32 %v1709, %v1717
        %v1720 = vadd.f32 %v1688, %v1718
        %v1721 = vadd.f32 %v1689, %v1719
        %v1722 = vld [vmem:[%s1173] sm:$0xff]
        %v1723 = vld [vmem:[%s1173 + $0x8] sm:$0xff]
        %v1724 = vlaneseq
        %v1725 = vshrl.u32 %v1724, 7
        %v1726 = vsub.s32 7, %v1725
        %v1727 = vrot.slane %v1472, %v1726
        %v1728 = vmul.f32 %v1727, %v1722
        %v1729 = vmul.f32 %v1727, %v1723
        %v1730 = vadd.f32 %v1708, %v1728
        %v1731 = vadd.f32 %v1709, %v1729
        %v1732 = vadd.f32 %v1700, %v1730
        %v1733 = vadd.f32 %v1701, %v1731
        %v1734 = vld [vmem:[%s1186] sm:$0xff]
        %v1735 = vld [vmem:[%s1186 + $0x8] sm:$0xff]
        %v1736 = vadd.f32 %v1473, %v1476
        %v1737 = vlaneseq
        %v1738 = vshrl.u32 %v1737, 7
        %v1739 = vsub.s32 0, %v1738
        %v1740 = vrot.slane %v1736, %v1739
        %v1741 = vmul.f32 %v1734, %v1740
        %v1742 = vmul.f32 %v1735, %v1740
        %v1743 = vld [vmem:[%s1196] sm:$0xff]
        %v1744 = vld [vmem:[%s1196 + $0x8] sm:$0xff]
        %v1745 = vlaneseq
        %v1746 = vshrl.u32 %v1745, 7
        %v1747 = vsub.s32 0, %v1746
        %v1748 = vrot.slane %v1476, %v1747
        %v1749 = vmul.f32 %v1748, %v1743
        %v1750 = vmul.f32 %v1748, %v1744
        %v1751 = vsub.f32 %v1741, %v1749
        %v1752 = vsub.f32 %v1742, %v1750
        %v1753 = vadd.f32 %v1720, %v1751
        %v1754 = vadd.f32 %v1721, %v1752
        %v1755 = vld [vmem:[%s1209] sm:$0xff]
        %v1756 = vld [vmem:[%s1209 + $0x8] sm:$0xff]
        %v1757 = vlaneseq
        %v1758 = vshrl.u32 %v1757, 7
        %v1759 = vsub.s32 0, %v1758
        %v1760 = vrot.slane %v1473, %v1759
        %v1761 = vmul.f32 %v1760, %v1755
        %v1762 = vmul.f32 %v1760, %v1756
        %v1763 = vadd.f32 %v1741, %v1761
        %v1764 = vadd.f32 %v1742, %v1762
        %v1765 = vadd.f32 %v1732, %v1763
        %v1766 = vadd.f32 %v1733, %v1764
        %v1767 = vld [vmem:[%s1222] sm:$0xff]
        %v1768 = vld [vmem:[%s1222 + $0x8] sm:$0xff]
        %v1769 = vlaneseq
        %v1770 = vshrl.u32 %v1769, 7
        %v1771 = vsub.s32 1, %v1770
        %v1772 = vrot.slane %v1736, %v1771
        %v1773 = vmul.f32 %v1767, %v1772
        %v1774 = vmul.f32 %v1768, %v1772
        %v1775 = vld [vmem:[%s1231] sm:$0xff]
        %v1776 = vld [vmem:[%s1231 + $0x8] sm:$0xff]
        %v1777 = vlaneseq
        %v1778 = vshrl.u32 %v1777, 7
        %v1779 = vsub.s32 1, %v1778
        %v1780 = vrot.slane %v1476, %v1779
        %v1781 = vmul.f32 %v1780, %v1775
        %v1782 = vmul.f32 %v1780, %v1776
        %v1783 = vsub.f32 %v1773, %v1781
        %v1784 = vsub.f32 %v1774, %v1782
        %v1785 = vadd.f32 %v1753, %v1783
        %v1786 = vadd.f32 %v1754, %v1784
        %v1787 = vld [vmem:[%s1244] sm:$0xff]
        %v1788 = vld [vmem:[%s1244 + $0x8] sm:$0xff]
        %v1789 = vlaneseq
        %v1790 = vshrl.u32 %v1789, 7
        %v1791 = vsub.s32 1, %v1790
        %v1792 = vrot.slane %v1473, %v1791
        %v1793 = vmul.f32 %v1792, %v1787
        %v1794 = vmul.f32 %v1792, %v1788
        %v1795 = vadd.f32 %v1773, %v1793
        %v1796 = vadd.f32 %v1774, %v1794
        %v1797 = vadd.f32 %v1765, %v1795
        %v1798 = vadd.f32 %v1766, %v1796
        %v1799 = vld [vmem:[%s1257] sm:$0xff]
        %v1800 = vld [vmem:[%s1257 + $0x8] sm:$0xff]
        %v1801 = vlaneseq
        %v1802 = vshrl.u32 %v1801, 7
        %v1803 = vsub.s32 2, %v1802
        %v1804 = vrot.slane %v1736, %v1803
        %v1805 = vmul.f32 %v1799, %v1804
        %v1806 = vmul.f32 %v1800, %v1804
        %v1807 = vld [vmem:[%s1266] sm:$0xff]
        %v1808 = vld [vmem:[%s1266 + $0x8] sm:$0xff]
        %v1809 = vlaneseq
        %v1810 = vshrl.u32 %v1809, 7
        %v1811 = vsub.s32 2, %v1810
        %v1812 = vrot.slane %v1476, %v1811
        %v1813 = vmul.f32 %v1812, %v1807
        %v1814 = vmul.f32 %v1812, %v1808
        %v1815 = vsub.f32 %v1805, %v1813
        %v1816 = vsub.f32 %v1806, %v1814
        %v1817 = vadd.f32 %v1785, %v1815
        %v1818 = vadd.f32 %v1786, %v1816
        %v1819 = vld [vmem:[%s1279] sm:$0xff]
        %v1820 = vld [vmem:[%s1279 + $0x8] sm:$0xff]
        %v1821 = vlaneseq
        %v1822 = vshrl.u32 %v1821, 7
        %v1823 = vsub.s32 2, %v1822
        %v1824 = vrot.slane %v1473, %v1823
        %v1825 = vmul.f32 %v1824, %v1819
        %v1826 = vmul.f32 %v1824, %v1820
        %v1827 = vadd.f32 %v1805, %v1825
        %v1828 = vadd.f32 %v1806, %v1826
        %v1829 = vadd.f32 %v1797, %v1827
        %v1830 = vadd.f32 %v1798, %v1828
        %v1831 = vld [vmem:[%s1292] sm:$0xff]
        %v1832 = vld [vmem:[%s1292 + $0x8] sm:$0xff]
        %v1833 = vlaneseq
        %v1834 = vshrl.u32 %v1833, 7
        %v1835 = vsub.s32 3, %v1834
        %v1836 = vrot.slane %v1736, %v1835
        %v1837 = vmul.f32 %v1831, %v1836
        %v1838 = vmul.f32 %v1832, %v1836
        %v1839 = vld [vmem:[%s1301] sm:$0xff]
        %v1840 = vld [vmem:[%s1301 + $0x8] sm:$0xff]
        %v1841 = vlaneseq
        %v1842 = vshrl.u32 %v1841, 7
        %v1843 = vsub.s32 3, %v1842
        %v1844 = vrot.slane %v1476, %v1843
        %v1845 = vmul.f32 %v1844, %v1839
        %v1846 = vmul.f32 %v1844, %v1840
        %v1847 = vsub.f32 %v1837, %v1845
        %v1848 = vsub.f32 %v1838, %v1846
        %v1849 = vadd.f32 %v1817, %v1847
        %v1850 = vadd.f32 %v1818, %v1848
        %v1851 = vld [vmem:[%s1314] sm:$0xff]
        %v1852 = vld [vmem:[%s1314 + $0x8] sm:$0xff]
        %v1853 = vlaneseq
        %v1854 = vshrl.u32 %v1853, 7
        %v1855 = vsub.s32 3, %v1854
        %v1856 = vrot.slane %v1473, %v1855
        %v1857 = vmul.f32 %v1856, %v1851
        %v1858 = vmul.f32 %v1856, %v1852
        %v1859 = vadd.f32 %v1837, %v1857
        %v1860 = vadd.f32 %v1838, %v1858
        %v1861 = vadd.f32 %v1829, %v1859
        %v1862 = vadd.f32 %v1830, %v1860
        %v1863 = vld [vmem:[%s1327] sm:$0xff]
        %v1864 = vld [vmem:[%s1327 + $0x8] sm:$0xff]
        %v1865 = vlaneseq
        %v1866 = vshrl.u32 %v1865, 7
        %v1867 = vsub.s32 4, %v1866
        %v1868 = vrot.slane %v1736, %v1867
        %v1869 = vmul.f32 %v1863, %v1868
        %v1870 = vmul.f32 %v1864, %v1868
        %v1871 = vld [vmem:[%s1336] sm:$0xff]
        %v1872 = vld [vmem:[%s1336 + $0x8] sm:$0xff]
        %v1873 = vlaneseq
        %v1874 = vshrl.u32 %v1873, 7
        %v1875 = vsub.s32 4, %v1874
        %v1876 = vrot.slane %v1476, %v1875
        %v1877 = vmul.f32 %v1876, %v1871
        %v1878 = vmul.f32 %v1876, %v1872
        %v1879 = vsub.f32 %v1869, %v1877
        %v1880 = vsub.f32 %v1870, %v1878
        %v1881 = vadd.f32 %v1849, %v1879
        %v1882 = vadd.f32 %v1850, %v1880
        %v1883 = vld [vmem:[%s1349] sm:$0xff]
        %v1884 = vld [vmem:[%s1349 + $0x8] sm:$0xff]
        %v1885 = vlaneseq
        %v1886 = vshrl.u32 %v1885, 7
        %v1887 = vsub.s32 4, %v1886
        %v1888 = vrot.slane %v1473, %v1887
        %v1889 = vmul.f32 %v1888, %v1883
        %v1890 = vmul.f32 %v1888, %v1884
        %v1891 = vadd.f32 %v1869, %v1889
        %v1892 = vadd.f32 %v1870, %v1890
        %v1893 = vadd.f32 %v1861, %v1891
        %v1894 = vadd.f32 %v1862, %v1892
        %v1895 = vld [vmem:[%s1362] sm:$0xff]
        %v1896 = vld [vmem:[%s1362 + $0x8] sm:$0xff]
        %v1897 = vlaneseq
        %v1898 = vshrl.u32 %v1897, 7
        %v1899 = vsub.s32 5, %v1898
        %v1900 = vrot.slane %v1736, %v1899
        %v1901 = vmul.f32 %v1895, %v1900
        %v1902 = vmul.f32 %v1896, %v1900
        %v1903 = vld [vmem:[%s1371] sm:$0xff]
        %v1904 = vld [vmem:[%s1371 + $0x8] sm:$0xff]
        %v1905 = vlaneseq
        %v1906 = vshrl.u32 %v1905, 7
        %v1907 = vsub.s32 5, %v1906
        %v1908 = vrot.slane %v1476, %v1907
        %v1909 = vmul.f32 %v1908, %v1903
        %v1910 = vmul.f32 %v1908, %v1904
        %v1911 = vsub.f32 %v1901, %v1909
        %v1912 = vsub.f32 %v1902, %v1910
        %v1913 = vadd.f32 %v1881, %v1911
        %v1914 = vadd.f32 %v1882, %v1912
        %v1915 = vld [vmem:[%s1384] sm:$0xff]
        %v1916 = vld [vmem:[%s1384 + $0x8] sm:$0xff]
        %v1917 = vlaneseq
        %v1918 = vshrl.u32 %v1917, 7
        %v1919 = vsub.s32 5, %v1918
        %v1920 = vrot.slane %v1473, %v1919
        %v1921 = vmul.f32 %v1920, %v1915
        %v1922 = vmul.f32 %v1920, %v1916
        %v1923 = vadd.f32 %v1901, %v1921
        %v1924 = vadd.f32 %v1902, %v1922
        %v1925 = vadd.f32 %v1893, %v1923
        %v1926 = vadd.f32 %v1894, %v1924
        %v1927 = vld [vmem:[%s1397] sm:$0xff]
        %v1928 = vld [vmem:[%s1397 + $0x8] sm:$0xff]
        %v1929 = vlaneseq
        %v1930 = vshrl.u32 %v1929, 7
        %v1931 = vsub.s32 6, %v1930
        %v1932 = vrot.slane %v1736, %v1931
        %v1933 = vmul.f32 %v1927, %v1932
        %v1934 = vmul.f32 %v1928, %v1932
        %v1935 = vld [vmem:[%s1406] sm:$0xff]
        %v1936 = vld [vmem:[%s1406 + $0x8] sm:$0xff]
        %v1937 = vlaneseq
        %v1938 = vshrl.u32 %v1937, 7
        %v1939 = vsub.s32 6, %v1938
        %v1940 = vrot.slane %v1476, %v1939
        %v1941 = vmul.f32 %v1940, %v1935
        %v1942 = vmul.f32 %v1940, %v1936
        %v1943 = vsub.f32 %v1933, %v1941
        %v1944 = vsub.f32 %v1934, %v1942
        %v1945 = vadd.f32 %v1913, %v1943
        %v1946 = vadd.f32 %v1914, %v1944
        %v1947 = vld [vmem:[%s1419] sm:$0xff]
        %v1948 = vld [vmem:[%s1419 + $0x8] sm:$0xff]
        %v1949 = vlaneseq
        %v1950 = vshrl.u32 %v1949, 7
        %v1951 = vsub.s32 6, %v1950
        %v1952 = vrot.slane %v1473, %v1951
        %v1953 = vmul.f32 %v1952, %v1947
        %v1954 = vmul.f32 %v1952, %v1948
        %v1955 = vadd.f32 %v1933, %v1953
        %v1956 = vadd.f32 %v1934, %v1954
        %v1957 = vadd.f32 %v1925, %v1955
        %v1958 = vadd.f32 %v1926, %v1956
        %v1959 = vld [vmem:[%s1432] sm:$0xff]
        %v1960 = vld [vmem:[%s1432 + $0x8] sm:$0xff]
        %v1961 = vlaneseq
        %v1962 = vshrl.u32 %v1961, 7
        %v1963 = vsub.s32 7, %v1962
        %v1964 = vrot.slane %v1736, %v1963
        %v1965 = vmul.f32 %v1959, %v1964
        %v1966 = vmul.f32 %v1960, %v1964
        %v1967 = vld [vmem:[%s1441] sm:$0xff]
        %v1968 = vld [vmem:[%s1441 + $0x8] sm:$0xff]
        %v1969 = vlaneseq
        %v1970 = vshrl.u32 %v1969, 7
        %v1971 = vsub.s32 7, %v1970
        %v1972 = vrot.slane %v1476, %v1971
        %v1973 = vmul.f32 %v1972, %v1967
        %v1974 = vmul.f32 %v1972, %v1968
        %v1975 = vsub.f32 %v1965, %v1973
        %v1976 = vsub.f32 %v1966, %v1974
        %v1977 = vadd.f32 %v1945, %v1975
        %v1978 = vadd.f32 %v1946, %v1976
        %v1979 = vld [vmem:[%s1454] sm:$0xff]
        %v1980 = vld [vmem:[%s1454 + $0x8] sm:$0xff]
        %v1981 = vlaneseq
        %v1982 = vshrl.u32 %v1981, 7
        %v1983 = vsub.s32 7, %v1982
        %v1984 = vrot.slane %v1473, %v1983
        %v1985 = vmul.f32 %v1984, %v1979
        %v1986 = vmul.f32 %v1984, %v1980
        %v1987 = vadd.f32 %v1965, %v1985
        %v1988 = vadd.f32 %v1966, %v1986
        %v1989 = vadd.f32 %v1957, %v1987
        %v1990 = vadd.f32 %v1958, %v1988
        %s1991 = scalar_lea.vmem %s897, 16 [#allocation7]
        %1992 = vst [vmem:[%s1991] sm:$0xff] %v1977
        %1993 = vst [vmem:[%s1991 + $0x8] sm:$0xff] %v1978
        %s1994 = scalar_lea.vmem %s903, 16 [#allocation8]
        %1995 = vst [vmem:[%s1994] sm:$0xff] %v1989
        %1996 = vst [vmem:[%s1994 + $0x8] sm:$0xff] %v1990
        %s1997 = sand.u32 %s156, 1
        %s1998 = sand.u32 %s156, 1
        %s1999 = smul.addr %s1998, 32
        %s2000 = scalar_lea.vmem [#allocation7], %s1999
        %s2001 = sand.u32 %s182, 1
        %s2002 = sand.u32 %s182, 1
        %s2003 = smul.addr %s2002, 32
        %s2004 = scalar_lea.vmem [#allocation8], %s2003
        // Predicated region
        $region231: #{fno3d_forward.9} parent=209 // pred_check
          %p2005 = pneg %p166
        $region232: #{fno3d_forward.9} parent=209 // pred_check_branch
          %2007 = sbr.rel (%p2005) target = $region234
        $region233: #{fno3d_forward.9} parent=209 // pred_region
          %s2008 = smul.addr %s18, 8
          %s2009 = scalar_lea.vmem %s5, %s2008
          // Predicated region
          $region235: #{fno3d_forward.9} parent=233 // pred_check
            _
          $region236: #{fno3d_forward.9} parent=233 // pred_check_branch
            %2011 = sbr.rel (0) target = $region238
          $region237: #{fno3d_forward.9} parent=233 // pred_region
            // Predicated region
            $region239: #{fno3d_forward.9} parent=237 // pred_check
              _
            $region240: #{fno3d_forward.9} parent=237 // pred_check_branch
              %2013 = sbr.rel (0) target = $region242
            $region241: #{fno3d_forward.9} parent=237 // pred_region
              // Predicated region
              $region254: #{fno3d_forward.9} parent=241 // pred_check
                _
              $region255: #{fno3d_forward.9} parent=241 // pred_check_branch
                %2035 = sbr.rel (0) target = $region257
              $region256: #{fno3d_forward.9} parent=241 // pred_region
                loop: start=0, step=1, limit=1
                $region258: #{fno3d_forward.9} parent=256 // loop_pre_header
                  _
                $region259: #{fno3d_forward.9} parent=256 // loop_header
                  %s2037 = sphi 0, %s2041
                  %p2038 = scmp.ge.s32.totalorder %s2037, 1
                  %s2042 = sphi %s2000, %s2000
                  %s2043 = sphi %s2009, %s2009
                $region260: #{fno3d_forward.9} parent=256 // loop_header_branch
                  %2040 = sbr.rel (%p2038) target = $region264
                $region261: #{fno3d_forward.9} parent=256 // loop_body
                  %v2044 = vld [vmem:[%s2042] sm:$0xff]
                  %2045 = vst [vmem:[%s2043] sm:$0xff] %v2044
                  %v2046 = vld [vmem:[%s2042 + $0x8] sm:$0xff]
                  %2047 = vst [vmem:[%s2043 + $0x10] sm:$0xff] %v2046
                  %v2048 = vld [vmem:[%s2042 + $0x10] sm:$0xff]
                  %2049 = vst [vmem:[%s2043 + $0x20] sm:$0xff] %v2048
                  %v2050 = vld [vmem:[%s2042 + $0x18] sm:$0xff]
                  %2051 = vst [vmem:[%s2043 + $0x30] sm:$0xff] %v2050
                $region262: #{fno3d_forward.9} parent=256 // loop_footer
                  %s2041 = sadd.s32 1, %s2037
                $region263: #{fno3d_forward.9} parent=256 // loop_footer_branch
                  %2036 = sbr.rel target = $region259
                $region264: #{fno3d_forward.9} parent=256 // loop_exit
                  _
              $region257: #{fno3d_forward.9} parent=241 // pred_fallthru
                _
              // Predicated region
              $region265: #{fno3d_forward.9} parent=241 // pred_check
                _
              $region266: #{fno3d_forward.9} parent=241 // pred_check_branch
                %2053 = sbr.rel target = $region268
              $region267: #{fno3d_forward.9} parent=241 // pred_region
                _
              $region268: #{fno3d_forward.9} parent=241 // pred_fallthru
                _
            $region242: #{fno3d_forward.9} parent=237 // pred_fallthru
              _
            // Predicated region
            $region243: #{fno3d_forward.9} parent=237 // pred_check
              _
            $region244: #{fno3d_forward.9} parent=237 // pred_check_branch
              %2015 = sbr.rel target = $region246
            $region245: #{fno3d_forward.9} parent=237 // pred_region
              %s2017 = ssub.s32 256, 1
              loop: start=0, step=1, limit=1
              $region247: #{fno3d_forward.9} parent=245 // loop_pre_header
                _
              $region248: #{fno3d_forward.9} parent=245 // loop_header
                %s2019 = sphi 0, %s2023
                %p2020 = scmp.ge.s32.totalorder %s2019, 1
                %s2024 = sphi %s2000, %s2000
                %s2025 = sphi %s2009, %s2009
              $region249: #{fno3d_forward.9} parent=245 // loop_header_branch
                %2022 = sbr.rel (%p2020) target = $region253
              $region250: #{fno3d_forward.9} parent=245 // loop_body
                %v2026 = vld [vmem:[%s2024] sm:%s2017]
                %2027 = vst [vmem:[%s2025] sm:%s2017] %v2026
                %v2028 = vld [vmem:[%s2024 + $0x8] sm:%s2017]
                %2029 = vst [vmem:[%s2025 + $0x10] sm:%s2017] %v2028
                %v2030 = vld [vmem:[%s2024 + $0x10] sm:%s2017]
                %2031 = vst [vmem:[%s2025 + $0x20] sm:%s2017] %v2030
                %v2032 = vld [vmem:[%s2024 + $0x18] sm:%s2017]
                %2033 = vst [vmem:[%s2025 + $0x30] sm:%s2017] %v2032
              $region251: #{fno3d_forward.9} parent=245 // loop_footer
                %s2023 = sadd.s32 1, %s2019
              $region252: #{fno3d_forward.9} parent=245 // loop_footer_branch
                %2018 = sbr.rel target = $region248
              $region253: #{fno3d_forward.9} parent=245 // loop_exit
                _
            $region246: #{fno3d_forward.9} parent=237 // pred_fallthru
              _
          $region238: #{fno3d_forward.9} parent=233 // pred_fallthru
            _
          %2054 = vnop
        $region234: #{fno3d_forward.9} parent=209 // pred_fallthru
          _
        // Predicated region
        $region269: #{fno3d_forward.9} parent=209 // pred_check
          %p2055 = pneg %p192
        $region270: #{fno3d_forward.9} parent=209 // pred_check_branch
          %2057 = sbr.rel (%p2055) target = $region272
        $region271: #{fno3d_forward.9} parent=209 // pred_region
          %s2058 = smul.addr %s18, 8
          %s2059 = scalar_lea.vmem %s6, %s2058
          // Predicated region
          $region273: #{fno3d_forward.9} parent=271 // pred_check
            _
          $region274: #{fno3d_forward.9} parent=271 // pred_check_branch
            %2061 = sbr.rel (0) target = $region276
          $region275: #{fno3d_forward.9} parent=271 // pred_region
            // Predicated region
            $region277: #{fno3d_forward.9} parent=275 // pred_check
              _
            $region278: #{fno3d_forward.9} parent=275 // pred_check_branch
              %2063 = sbr.rel (0) target = $region280
            $region279: #{fno3d_forward.9} parent=275 // pred_region
              // Predicated region
              $region292: #{fno3d_forward.9} parent=279 // pred_check
                _
              $region293: #{fno3d_forward.9} parent=279 // pred_check_branch
                %2085 = sbr.rel (0) target = $region295
              $region294: #{fno3d_forward.9} parent=279 // pred_region
                loop: start=0, step=1, limit=1
                $region296: #{fno3d_forward.9} parent=294 // loop_pre_header
                  _
                $region297: #{fno3d_forward.9} parent=294 // loop_header
                  %s2087 = sphi 0, %s2091
                  %p2088 = scmp.ge.s32.totalorder %s2087, 1
                  %s2092 = sphi %s2004, %s2004
                  %s2093 = sphi %s2059, %s2059
                $region298: #{fno3d_forward.9} parent=294 // loop_header_branch
                  %2090 = sbr.rel (%p2088) target = $region302
                $region299: #{fno3d_forward.9} parent=294 // loop_body
                  %v2094 = vld [vmem:[%s2092] sm:$0xff]
                  %2095 = vst [vmem:[%s2093] sm:$0xff] %v2094
                  %v2096 = vld [vmem:[%s2092 + $0x8] sm:$0xff]
                  %2097 = vst [vmem:[%s2093 + $0x10] sm:$0xff] %v2096
                  %v2098 = vld [vmem:[%s2092 + $0x10] sm:$0xff]
                  %2099 = vst [vmem:[%s2093 + $0x20] sm:$0xff] %v2098
                  %v2100 = vld [vmem:[%s2092 + $0x18] sm:$0xff]
                  %2101 = vst [vmem:[%s2093 + $0x30] sm:$0xff] %v2100
                $region300: #{fno3d_forward.9} parent=294 // loop_footer
                  %s2091 = sadd.s32 1, %s2087
                $region301: #{fno3d_forward.9} parent=294 // loop_footer_branch
                  %2086 = sbr.rel target = $region297
                $region302: #{fno3d_forward.9} parent=294 // loop_exit
                  _
              $region295: #{fno3d_forward.9} parent=279 // pred_fallthru
                _
              // Predicated region
              $region303: #{fno3d_forward.9} parent=279 // pred_check
                _
              $region304: #{fno3d_forward.9} parent=279 // pred_check_branch
                %2103 = sbr.rel target = $region306
              $region305: #{fno3d_forward.9} parent=279 // pred_region
                _
              $region306: #{fno3d_forward.9} parent=279 // pred_fallthru
                _
            $region280: #{fno3d_forward.9} parent=275 // pred_fallthru
              _
            // Predicated region
            $region281: #{fno3d_forward.9} parent=275 // pred_check
              _
            $region282: #{fno3d_forward.9} parent=275 // pred_check_branch
              %2065 = sbr.rel target = $region284
            $region283: #{fno3d_forward.9} parent=275 // pred_region
              %s2067 = ssub.s32 256, 1
              loop: start=0, step=1, limit=1
              $region285: #{fno3d_forward.9} parent=283 // loop_pre_header
                _
              $region286: #{fno3d_forward.9} parent=283 // loop_header
                %s2069 = sphi 0, %s2073
                %p2070 = scmp.ge.s32.totalorder %s2069, 1
                %s2074 = sphi %s2004, %s2004
                %s2075 = sphi %s2059, %s2059
              $region287: #{fno3d_forward.9} parent=283 // loop_header_branch
                %2072 = sbr.rel (%p2070) target = $region291
              $region288: #{fno3d_forward.9} parent=283 // loop_body
                %v2076 = vld [vmem:[%s2074] sm:%s2067]
                %2077 = vst [vmem:[%s2075] sm:%s2067] %v2076
                %v2078 = vld [vmem:[%s2074 + $0x8] sm:%s2067]
                %2079 = vst [vmem:[%s2075 + $0x10] sm:%s2067] %v2078
                %v2080 = vld [vmem:[%s2074 + $0x10] sm:%s2067]
                %2081 = vst [vmem:[%s2075 + $0x20] sm:%s2067] %v2080
                %v2082 = vld [vmem:[%s2074 + $0x18] sm:%s2067]
                %2083 = vst [vmem:[%s2075 + $0x30] sm:%s2067] %v2082
              $region289: #{fno3d_forward.9} parent=283 // loop_footer
                %s2073 = sadd.s32 1, %s2069
              $region290: #{fno3d_forward.9} parent=283 // loop_footer_branch
                %2068 = sbr.rel target = $region286
              $region291: #{fno3d_forward.9} parent=283 // loop_exit
                _
            $region284: #{fno3d_forward.9} parent=275 // pred_fallthru
              _
          $region276: #{fno3d_forward.9} parent=271 // pred_fallthru
            _
          %2104 = vnop
        $region272: #{fno3d_forward.9} parent=209 // pred_fallthru
          _
      $region210: #{fno3d_forward.9} parent=5 // pred_fallthru
        _
      %p2105 = scmp.le.s32.totalorder 2, %s13
      // Predicated region
      $region307: #{fno3d_forward.9} parent=5 // pred_check
        %p2106 = pneg %p2105
      $region308: #{fno3d_forward.9} parent=5 // pred_check_branch
        %2108 = sbr.rel (%p2106) target = $region310
      $region309: #{fno3d_forward.9} parent=5 // pred_region
        %s2109 = ssub.s32 %s13, 2
        // Predicated region
        $region311: #{fno3d_forward.9} parent=309 // pred_check
          %p2110 = pneg %p172
        $region312: #{fno3d_forward.9} parent=309 // pred_check_branch
          %2112 = sbr.rel (%p2110) target = $region314
        $region313: #{fno3d_forward.9} parent=309 // pred_region
          %s2113 = sand.u32 %s157, 1
          %s2114 = sand.u32 %s157, 1
          %s2115 = smul.addr %s2114, 32
          %s2116 = scalar_lea.vmem [#allocation7], %s2115
        $region314: #{fno3d_forward.9} parent=309 // pred_fallthru
          _
        // Predicated region
        $region315: #{fno3d_forward.9} parent=309 // pred_check
          %p2117 = pneg %p198
        $region316: #{fno3d_forward.9} parent=309 // pred_check_branch
          %2119 = sbr.rel (%p2117) target = $region318
        $region317: #{fno3d_forward.9} parent=309 // pred_region
          %s2120 = sand.u32 %s183, 1
          %s2121 = sand.u32 %s183, 1
          %s2122 = smul.addr %s2121, 32
          %s2123 = scalar_lea.vmem [#allocation8], %s2122
        $region318: #{fno3d_forward.9} parent=309 // pred_fallthru
          _
      $region310: #{fno3d_forward.9} parent=5 // pred_fallthru
        _
    $region6: #{fno3d_forward.9} parent=1 // loop_footer
      %s17 = sadd.s32 1, %s13
    $region7: #{fno3d_forward.9} parent=1 // loop_footer_branch
      %12 = sbr.rel target = $region3
    $region8: #{fno3d_forward.9} parent=1 // loop_exit
      _

// kernel: reverse.6
$region0: #{reverse.6}
  #allocation0 [shape = 's32[1]{0}', space=sflag, size = 0x4, scoped, tag = 'scoped memory for reverse.6']
  %s0 = inlined_call_operand.vmem [shape: f32[16,2,8,8,2], index: 0, kind: input, shape index: {}]
  %s1 = inlined_call_operand.vmem [shape: f32[16,2,8,8,2], index: 1, kind: output, shape index: {}]
  %s2 = scalar_lea.vmem %s0, 64
  %v3 = vld [vmem:[%s2] sm:$0xff]
  %4 = vst [vmem:[%s1] sm:$0xff] %v3
  %s5 = scalar_lea.vmem %s0, 192
  %v6 = vld [vmem:[%s5] sm:$0xff]
  %s7 = scalar_lea.vmem %s1, 128
  %8 = vst [vmem:[%s7] sm:$0xff] %v6
  %v9 = vld [vmem:[%s0] sm:$0xff]
  %s10 = scalar_lea.vmem %s1, 64
  %11 = vst [vmem:[%s10] sm:$0xff] %v9
  %s12 = scalar_lea.vmem %s0, 128
  %v13 = vld [vmem:[%s12] sm:$0xff]
  %s14 = scalar_lea.vmem %s1, 192
  %15 = vst [vmem:[%s14] sm:$0xff] %v13
  %s16 = scalar_lea.vmem %s0, 72
  %v17 = vld [vmem:[%s16] sm:$0xff]
  %s18 = scalar_lea.vmem %s1, 8
  %19 = vst [vmem:[%s18] sm:$0xff] %v17
  %s20 = scalar_lea.vmem %s0, 200
  %v21 = vld [vmem:[%s20] sm:$0xff]
  %s22 = scalar_lea.vmem %s1, 136
  %23 = vst [vmem:[%s22] sm:$0xff] %v21
  %s24 = scalar_lea.vmem %s0, 8
  %v25 = vld [vmem:[%s24] sm:$0xff]
  %s26 = scalar_lea.vmem %s1, 72
  %27 = vst [vmem:[%s26] sm:$0xff] %v25
  %s28 = scalar_lea.vmem %s0, 136
  %v29 = vld [vmem:[%s28] sm:$0xff]
  %s30 = scalar_lea.vmem %s1, 200
  %31 = vst [vmem:[%s30] sm:$0xff] %v29
  %s32 = scalar_lea.vmem %s0, 80
  %v33 = vld [vmem:[%s32] sm:$0xff]
  %s34 = scalar_lea.vmem %s1, 16
  %35 = vst [vmem:[%s34] sm:$0xff] %v33
  %s36 = scalar_lea.vmem %s0, 208
  %v37 = vld [vmem:[%s36] sm:$0xff]
  %s38 = scalar_lea.vmem %s1, 144
  %39 = vst [vmem:[%s38] sm:$0xff] %v37
  %s40 = scalar_lea.vmem %s0, 16
  %v41 = vld [vmem:[%s40] sm:$0xff]
  %s42 = scalar_lea.vmem %s1, 80
  %43 = vst [vmem:[%s42] sm:$0xff] %v41
  %s44 = scalar_lea.vmem %s0, 144
  %v45 = vld [vmem:[%s44] sm:$0xff]
  %s46 = scalar_lea.vmem %s1, 208
  %47 = vst [vmem:[%s46] sm:$0xff] %v45
  %s48 = scalar_lea.vmem %s0, 88
  %v49 = vld [vmem:[%s48] sm:$0xff]
  %s50 = scalar_lea.vmem %s1, 24
  %51 = vst [vmem:[%s50] sm:$0xff] %v49
  %s52 = scalar_lea.vmem %s0, 216
  %v53 = vld [vmem:[%s52] sm:$0xff]
  %s54 = scalar_lea.vmem %s1, 152
  %55 = vst [vmem:[%s54] sm:$0xff] %v53
  %s56 = scalar_lea.vmem %s0, 24
  %v57 = vld [vmem:[%s56] sm:$0xff]
  %s58 = scalar_lea.vmem %s1, 88
  %59 = vst [vmem:[%s58] sm:$0xff] %v57
  %s60 = scalar_lea.vmem %s0, 152
  %v61 = vld [vmem:[%s60] sm:$0xff]
  %s62 = scalar_lea.vmem %s1, 216
  %63 = vst [vmem:[%s62] sm:$0xff] %v61
  %s64 = scalar_lea.vmem %s0, 96
  %v65 = vld [vmem:[%s64] sm:$0xff]
  %s66 = scalar_lea.vmem %s1, 32
  %67 = vst [vmem:[%s66] sm:$0xff] %v65
  %s68 = scalar_lea.vmem %s0, 224
  %v69 = vld [vmem:[%s68] sm:$0xff]
  %s70 = scalar_lea.vmem %s1, 160
  %71 = vst [vmem:[%s70] sm:$0xff] %v69
  %s72 = scalar_lea.vmem %s0, 32
  %v73 = vld [vmem:[%s72] sm:$0xff]
  %s74 = scalar_lea.vmem %s1, 96
  %75 = vst [vmem:[%s74] sm:$0xff] %v73
  %s76 = scalar_lea.vmem %s0, 160
  %v77 = vld [vmem:[%s76] sm:$0xff]
  %s78 = scalar_lea.vmem %s1, 224
  %79 = vst [vmem:[%s78] sm:$0xff] %v77
  %s80 = scalar_lea.vmem %s0, 104
  %v81 = vld [vmem:[%s80] sm:$0xff]
  %s82 = scalar_lea.vmem %s1, 40
  %83 = vst [vmem:[%s82] sm:$0xff] %v81
  %s84 = scalar_lea.vmem %s0, 232
  %v85 = vld [vmem:[%s84] sm:$0xff]
  %s86 = scalar_lea.vmem %s1, 168
  %87 = vst [vmem:[%s86] sm:$0xff] %v85
  %s88 = scalar_lea.vmem %s0, 40
  %v89 = vld [vmem:[%s88] sm:$0xff]
  %s90 = scalar_lea.vmem %s1, 104
  %91 = vst [vmem:[%s90] sm:$0xff] %v89
  %s92 = scalar_lea.vmem %s0, 168
  %v93 = vld [vmem:[%s92] sm:$0xff]
  %s94 = scalar_lea.vmem %s1, 232
  %95 = vst [vmem:[%s94] sm:$0xff] %v93
  %s96 = scalar_lea.vmem %s0, 112
  %v97 = vld [vmem:[%s96] sm:$0xff]
  %s98 = scalar_lea.vmem %s1, 48
  %99 = vst [vmem:[%s98] sm:$0xff] %v97
  %s100 = scalar_lea.vmem %s0, 240
  %v101 = vld [vmem:[%s100] sm:$0xff]
  %s102 = scalar_lea.vmem %s1, 176
  %103 = vst [vmem:[%s102] sm:$0xff] %v101
  %s104 = scalar_lea.vmem %s0, 48
  %v105 = vld [vmem:[%s104] sm:$0xff]
  %s106 = scalar_lea.vmem %s1, 112
  %107 = vst [vmem:[%s106] sm:$0xff] %v105
  %s108 = scalar_lea.vmem %s0, 176
  %v109 = vld [vmem:[%s108] sm:$0xff]
  %s110 = scalar_lea.vmem %s1, 240
  %111 = vst [vmem:[%s110] sm:$0xff] %v109
  %s112 = scalar_lea.vmem %s0, 120
  %v113 = vld [vmem:[%s112] sm:$0xff]
  %s114 = scalar_lea.vmem %s1, 56
  %115 = vst [vmem:[%s114] sm:$0xff] %v113
  %s116 = scalar_lea.vmem %s0, 248
  %v117 = vld [vmem:[%s116] sm:$0xff]
  %s118 = scalar_lea.vmem %s1, 184
  %119 = vst [vmem:[%s118] sm:$0xff] %v117
  %s120 = scalar_lea.vmem %s0, 56
  %v121 = vld [vmem:[%s120] sm:$0xff]
  %s122 = scalar_lea.vmem %s1, 120
  %123 = vst [vmem:[%s122] sm:$0xff] %v121
  %s124 = scalar_lea.vmem %s0, 184
  %v125 = vld [vmem:[%s124] sm:$0xff]
  %s126 = scalar_lea.vmem %s1, 248
  %127 = vst [vmem:[%s126] sm:$0xff] %v125

// kernel: fno3d_forward.10
$region0: #{fno3d_forward.10}
  #allocation0 [shape = 'u32[]', space=smem, size = 0x4, offset = 0x4, fixed_abs, tag = 'smem constant byte address 0x4 - core index']
  #allocation1 [shape = 'u32[144,128]{1,0:T(1,128)}', space=vmem, size = 0x12000, scoped, tag = 'internal scratch']
  %s0 = inlined_call_operand.vmem [shape: f32[16,768], index: 0, kind: input, shape index: {}]
  %s1 = inlined_call_operand.vmem [shape: f32[16,768], index: 1, kind: input, shape index: {}]
  %s2 = inlined_call_operand.vmem [shape: f32[16,16], index: 2, kind: input, shape index: {}]
  %s3 = inlined_call_operand.vmem [shape: f32[16,1], index: 3, kind: input, shape index: {}]
  %s4 = inlined_call_operand.vmem [shape: f32[16,768], index: 4, kind: output, shape index: {}]
  %s5 = sld [smem:[#allocation0]]
  $region26: #{fno3d_forward.10} parent=0
    _
  %s7 = ssub.s32 1, %s5
  %s8 = scalar_select 0, %s7, %s5
  // Predicated region
  $region2: #{fno3d_forward.10} parent=0 // pred_check
    _
  $region3: #{fno3d_forward.10} parent=0 // pred_check_branch
    %10 = sbr.rel (0) target = $region5
  $region4: #{fno3d_forward.10} parent=0 // pred_region
    _
  $region5: #{fno3d_forward.10} parent=0 // pred_fallthru
    _
  // Predicated region
  $region6: #{fno3d_forward.10} parent=0 // pred_check
    _
  $region7: #{fno3d_forward.10} parent=0 // pred_check_branch
    %12 = sbr.rel (0) target = $region9
  $region8: #{fno3d_forward.10} parent=0 // pred_region
    _
  $region9: #{fno3d_forward.10} parent=0 // pred_fallthru
    _
  // Predicated region
  $region10: #{fno3d_forward.10} parent=0 // pred_check
    _
  $region11: #{fno3d_forward.10} parent=0 // pred_check_branch
    %14 = sbr.rel (0) target = $region13
  $region12: #{fno3d_forward.10} parent=0 // pred_region
    _
  $region13: #{fno3d_forward.10} parent=0 // pred_fallthru
    _
  // Predicated region
  $region14: #{fno3d_forward.10} parent=0 // pred_check
    _
  $region15: #{fno3d_forward.10} parent=0 // pred_check_branch
    %16 = sbr.rel (0) target = $region17
  $region16: #{fno3d_forward.10} parent=0 // pred_region
    _
  $region17: #{fno3d_forward.10} parent=0 // pred_fallthru
    _
  %v17 = vld [vmem:[%s2] sm:$0xff]
  %v18 = vld [vmem:[%s2 + $0x8] sm:$0xff]
  %v19 = vld [vmem:[%s1] sm:$0xff]
  %v20 = vld [vmem:[%s1 + $0x8] sm:$0xff]
  %v21 = vld [vmem:[%s1 + $0x10] sm:$0xff]
  %v22 = vld [vmem:[%s1 + $0x18] sm:$0xff]
  %v23 = vld [vmem:[%s1 + $0x20] sm:$0xff]
  %v24 = vld [vmem:[%s1 + $0x28] sm:$0xff]
  %v25 = vld [vmem:[%s1 + $0x30] sm:$0xff]
  %v26 = vld [vmem:[%s1 + $0x38] sm:$0xff]
  %v27 = vld [vmem:[%s1 + $0x40] sm:$0xff]
  %v28 = vld [vmem:[%s1 + $0x48] sm:$0xff]
  %v29 = vld [vmem:[%s1 + $0x50] sm:$0xff]
  %v30 = vld [vmem:[%s1 + $0x58] sm:$0xff]
  %v31 = vld [vmem:[%s3] sm:$0xff]
  %v32 = vld [vmem:[%s3 + $0x8] sm:$0xff]
  %34 = vset.pattern.permute.xlu0 0
  %35 = vperm.xlu0 %34, %v31
  %v36 = vpop.permute.xlu0 %35
  %39 = vset.pattern.permute.xlu0 0
  %40 = vperm.xlu0 %39, %v32
  %v41 = vpop.permute.xlu0 %40
  %vm43 = vcmask 130048
  %v45 = vsel %vm43, %v17, 0
  %v48 = vsel %vm43, %v18, 0
  %50 = vmatprep.subr.mxu0 0.0
  %51 = vmatpush1.msra.mxu0 0.0
  %52 = vmatprep.subr.mxu0 0.0
  %53 = vmatpush1.msra.mxu0 0.0
  %54 = vmatprep.subr.mxu0 0.0
  %55 = vmatpush1.msra.mxu0 0.0
  %56 = vmatprep.subr.mxu0 0.0
  %57 = vmatpush1.msra.mxu0 0.0
  %58 = vmatprep.subr.mxu0 0.0
  %59 = vmatpush1.msra.mxu0 0.0
  %60 = vmatprep.subr.mxu0 0.0
  %61 = vmatpush1.msra.mxu0 0.0
  %62 = vmatprep.subr.mxu0 0.0
  %63 = vmatpush1.msra.mxu0 0.0
  %64 = vmatprep.subr.mxu0 0.0
  %65 = vmatpush1.msra.mxu0 0.0
  %66 = vmatprep.subr.mxu0 0.0
  %67 = vmatpush1.msra.mxu0 0.0
  %68 = vmatprep.subr.mxu0 0.0
  %69 = vmatpush1.msra.mxu0 0.0
  %70 = vmatprep.subr.mxu0 0.0
  %71 = vmatpush1.msra.mxu0 0.0
  %72 = vmatprep.subr.mxu0 0.0
  %73 = vmatpush1.msra.mxu0 0.0
  %74 = vmatprep.subr.mxu0 0.0
  %75 = vmatpush1.msra.mxu0 0.0
  %76 = vmatprep.subr.mxu0 0.0
  %77 = vmatpush1.msra.mxu0 0.0
  %78 = vmatprep.subr.mxu0 %v26
  %79 = vmatpush1.msra.mxu0 %v25
  %80 = vmatprep.subr.mxu0 %v20
  %81 = vmatpush1.msra.mxu0 %v19
  %82 = vmatprep.subr.mxu0 0.0
  %83 = vmatpush2.msra.mxu0 0.0
  %84 = vmatprep.subr.mxu0 0.0
  %85 = vmatpush2.msra.mxu0 0.0
  %86 = vmatprep.subr.mxu0 0.0
  %87 = vmatpush2.msra.mxu0 0.0
  %88 = vmatprep.subr.mxu0 0.0
  %89 = vmatpush2.msra.mxu0 0.0
  %90 = vmatprep.subr.mxu0 0.0
  %91 = vmatpush2.msra.mxu0 0.0
  %92 = vmatprep.subr.mxu0 0.0
  %93 = vmatpush2.msra.mxu0 0.0
  %94 = vmatprep.subr.mxu0 0.0
  %95 = vmatpush2.msra.mxu0 0.0
  %96 = vmatprep.subr.mxu0 0.0
  %97 = vmatpush2.msra.mxu0 0.0
  %98 = vmatprep.subr.mxu0 0.0
  %99 = vmatpush2.msra.mxu0 0.0
  %100 = vmatprep.subr.mxu0 0.0
  %101 = vmatpush2.msra.mxu0 0.0
  %102 = vmatprep.subr.mxu0 0.0
  %103 = vmatpush2.msra.mxu0 0.0
  %104 = vmatprep.subr.mxu0 0.0
  %105 = vmatpush2.msra.mxu0 0.0
  %106 = vmatprep.subr.mxu0 0.0
  %107 = vmatpush2.msra.mxu0 0.0
  %108 = vmatprep.subr.mxu0 0.0
  %109 = vmatpush2.msra.mxu0 0.0
  %110 = vmatprep.subr.mxu0 0.0
  %111 = vmatpush2.msra.mxu0 0.0
  %112 = vmatprep.subr.mxu0 0.0
  %113 = vmatpush2.msra.mxu0 0.0
  %114 = vmatprep.mubr.f32.mxu0 0.0
  %115 = vmatmul.mubr.f32.gmra.mxu0 %v45
  %v116 = vpop.f32.mrf.mxu0
  %v117 = vadd.f32 %v36, %v116
  %v118 = vpop.f32.mrf.mxu0
  %v119 = vadd.f32 %v36, %v118
  %120 = vmatprep.mubr.f32.mxu0 0.0
  %121 = vmatmul.mubr.f32.gmra.mxu0 %v48
  %v122 = vpop.f32.mrf.mxu0
  %v123 = vadd.f32 %v41, %v122
  %v124 = vpop.f32.mrf.mxu0
  %v125 = vadd.f32 %v41, %v124
  %126 = vdwg.mxu0
  %127 = vmatprep.subr.mxu0 0.0
  %128 = vmatpush1.msra.mxu0 0.0
  %129 = vmatprep.subr.mxu0 0.0
  %130 = vmatpush1.msra.mxu0 0.0
  %131 = vmatprep.subr.mxu0 0.0
  %132 = vmatpush1.msra.mxu0 0.0
  %133 = vmatprep.subr.mxu0 0.0
  %134 = vmatpush1.msra.mxu0 0.0
  %135 = vmatprep.subr.mxu0 0.0
  %136 = vmatpush1.msra.mxu0 0.0
  %137 = vmatprep.subr.mxu0 0.0
  %138 = vmatpush1.msra.mxu0 0.0
  %139 = vmatprep.subr.mxu0 0.0
  %140 = vmatpush1.msra.mxu0 0.0
  %141 = vmatprep.subr.mxu0 0.0
  %142 = vmatpush1.msra.mxu0 0.0
  %143 = vmatprep.subr.mxu0 0.0
  %144 = vmatpush1.msra.mxu0 0.0
  %145 = vmatprep.subr.mxu0 0.0
  %146 = vmatpush1.msra.mxu0 0.0
  %147 = vmatprep.subr.mxu0 0.0
  %148 = vmatpush1.msra.mxu0 0.0
  %149 = vmatprep.subr.mxu0 0.0
  %150 = vmatpush1.msra.mxu0 0.0
  %151 = vmatprep.subr.mxu0 0.0
  %152 = vmatpush1.msra.mxu0 0.0
  %153 = vmatprep.subr.mxu0 0.0
  %154 = vmatpush1.msra.mxu0 0.0
  %155 = vmatprep.subr.mxu0 %v28
  %156 = vmatpush1.msra.mxu0 %v27
  %157 = vmatprep.subr.mxu0 %v22
  %158 = vmatpush1.msra.mxu0 %v21
  %159 = vmatprep.subr.mxu0 0.0
  %160 = vmatpush2.msra.mxu0 0.0
  %161 = vmatprep.subr.mxu0 0.0
  %162 = vmatpush2.msra.mxu0 0.0
  %163 = vmatprep.subr.mxu0 0.0
  %164 = vmatpush2.msra.mxu0 0.0
  %165 = vmatprep.subr.mxu0 0.0
  %166 = vmatpush2.msra.mxu0 0.0
  %167 = vmatprep.subr.mxu0 0.0
  %168 = vmatpush2.msra.mxu0 0.0
  %169 = vmatprep.subr.mxu0 0.0
  %170 = vmatpush2.msra.mxu0 0.0
  %171 = vmatprep.subr.mxu0 0.0
  %172 = vmatpush2.msra.mxu0 0.0
  %173 = vmatprep.subr.mxu0 0.0
  %174 = vmatpush2.msra.mxu0 0.0
  %175 = vmatprep.subr.mxu0 0.0
  %176 = vmatpush2.msra.mxu0 0.0
  %177 = vmatprep.subr.mxu0 0.0
  %178 = vmatpush2.msra.mxu0 0.0
  %179 = vmatprep.subr.mxu0 0.0
  %180 = vmatpush2.msra.mxu0 0.0
  %181 = vmatprep.subr.mxu0 0.0
  %182 = vmatpush2.msra.mxu0 0.0
  %183 = vmatprep.subr.mxu0 0.0
  %184 = vmatpush2.msra.mxu0 0.0
  %185 = vmatprep.subr.mxu0 0.0
  %186 = vmatpush2.msra.mxu0 0.0
  %187 = vmatprep.subr.mxu0 0.0
  %188 = vmatpush2.msra.mxu0 0.0
  %189 = vmatprep.subr.mxu0 0.0
  %190 = vmatpush2.msra.mxu0 0.0
  %191 = vmatprep.mubr.f32.mxu0 0.0
  %192 = vmatmul.mubr.f32.gmra.mxu0 %v45
  %v193 = vpop.f32.mrf.mxu0
  %v194 = vadd.f32 %v36, %v193
  %v195 = vpop.f32.mrf.mxu0
  %v196 = vadd.f32 %v36, %v195
  %197 = vmatprep.mubr.f32.mxu0 0.0
  %198 = vmatmul.mubr.f32.gmra.mxu0 %v48
  %v199 = vpop.f32.mrf.mxu0
  %v200 = vadd.f32 %v41, %v199
  %v201 = vpop.f32.mrf.mxu0
  %v202 = vadd.f32 %v41, %v201
  %203 = vdwg.mxu0
  %204 = vmatprep.subr.mxu0 0.0
  %205 = vmatpush1.msra.mxu0 0.0
  %206 = vmatprep.subr.mxu0 0.0
  %207 = vmatpush1.msra.mxu0 0.0
  %208 = vmatprep.subr.mxu0 0.0
  %209 = vmatpush1.msra.mxu0 0.0
  %210 = vmatprep.subr.mxu0 0.0
  %211 = vmatpush1.msra.mxu0 0.0
  %212 = vmatprep.subr.mxu0 0.0
  %213 = vmatpush1.msra.mxu0 0.0
  %214 = vmatprep.subr.mxu0 0.0
  %215 = vmatpush1.msra.mxu0 0.0
  %216 = vmatprep.subr.mxu0 0.0
  %217 = vmatpush1.msra.mxu0 0.0
  %218 = vmatprep.subr.mxu0 0.0
  %219 = vmatpush1.msra.mxu0 0.0
  %220 = vmatprep.subr.mxu0 0.0
  %221 = vmatpush1.msra.mxu0 0.0
  %222 = vmatprep.subr.mxu0 0.0
  %223 = vmatpush1.msra.mxu0 0.0
  %224 = vmatprep.subr.mxu0 0.0
  %225 = vmatpush1.msra.mxu0 0.0
  %226 = vmatprep.subr.mxu0 0.0
  %227 = vmatpush1.msra.mxu0 0.0
  %228 = vmatprep.subr.mxu0 0.0
  %229 = vmatpush1.msra.mxu0 0.0
  %230 = vmatprep.subr.mxu0 0.0
  %231 = vmatpush1.msra.mxu0 0.0
  %232 = vmatprep.subr.mxu0 %v30
  %233 = vmatpush1.msra.mxu0 %v29
  %234 = vmatprep.subr.mxu0 %v24
  %235 = vmatpush1.msra.mxu0 %v23
  %236 = vmatprep.subr.mxu0 0.0
  %237 = vmatpush2.msra.mxu0 0.0
  %238 = vmatprep.subr.mxu0 0.0
  %239 = vmatpush2.msra.mxu0 0.0
  %240 = vmatprep.subr.mxu0 0.0
  %241 = vmatpush2.msra.mxu0 0.0
  %242 = vmatprep.subr.mxu0 0.0
  %243 = vmatpush2.msra.mxu0 0.0
  %244 = vmatprep.subr.mxu0 0.0
  %245 = vmatpush2.msra.mxu0 0.0
  %246 = vmatprep.subr.mxu0 0.0
  %247 = vmatpush2.msra.mxu0 0.0
  %248 = vmatprep.subr.mxu0 0.0
  %249 = vmatpush2.msra.mxu0 0.0
  %250 = vmatprep.subr.mxu0 0.0
  %251 = vmatpush2.msra.mxu0 0.0
  %252 = vmatprep.subr.mxu0 0.0
  %253 = vmatpush2.msra.mxu0 0.0
  %254 = vmatprep.subr.mxu0 0.0
  %255 = vmatpush2.msra.mxu0 0.0
  %256 = vmatprep.subr.mxu0 0.0
  %257 = vmatpush2.msra.mxu0 0.0
  %258 = vmatprep.subr.mxu0 0.0
  %259 = vmatpush2.msra.mxu0 0.0
  %260 = vmatprep.subr.mxu0 0.0
  %261 = vmatpush2.msra.mxu0 0.0
  %262 = vmatprep.subr.mxu0 0.0
  %263 = vmatpush2.msra.mxu0 0.0
  %264 = vmatprep.subr.mxu0 0.0
  %265 = vmatpush2.msra.mxu0 0.0
  %266 = vmatprep.subr.mxu0 0.0
  %267 = vmatpush2.msra.mxu0 0.0
  %268 = vmatprep.mubr.f32.mxu0 0.0
  %269 = vmatmul.mubr.f32.gmra.mxu0 %v45
  %v270 = vpop.f32.mrf.mxu0
  %v271 = vadd.f32 %v36, %v270
  %v272 = vpop.f32.mrf.mxu0
  %v273 = vadd.f32 %v36, %v272
  %274 = vmatprep.mubr.f32.mxu0 0.0
  %275 = vmatmul.mubr.f32.gmra.mxu0 %v48
  %v276 = vpop.f32.mrf.mxu0
  %v277 = vadd.f32 %v41, %v276
  %v278 = vpop.f32.mrf.mxu0
  %v279 = vadd.f32 %v41, %v278
  %280 = vdwg.mxu0
  %v281 = vld [vmem:[%s0] sm:$0xff]
  %v282 = vld [vmem:[%s0 + $0x8] sm:$0xff]
  %v283 = vld [vmem:[%s0 + $0x10] sm:$0xff]
  %v284 = vld [vmem:[%s0 + $0x18] sm:$0xff]
  %v285 = vld [vmem:[%s0 + $0x20] sm:$0xff]
  %v286 = vld [vmem:[%s0 + $0x28] sm:$0xff]
  %v287 = vld [vmem:[%s0 + $0x30] sm:$0xff]
  %v288 = vld [vmem:[%s0 + $0x38] sm:$0xff]
  %v289 = vld [vmem:[%s0 + $0x40] sm:$0xff]
  %v290 = vld [vmem:[%s0 + $0x48] sm:$0xff]
  %v291 = vld [vmem:[%s0 + $0x50] sm:$0xff]
  %v292 = vld [vmem:[%s0 + $0x58] sm:$0xff]
  %v293 = vadd.f32 %v117, %v281
  %v294 = vadd.f32 %v119, %v282
  %v295 = vadd.f32 %v194, %v283
  %v296 = vadd.f32 %v196, %v284
  %v297 = vadd.f32 %v271, %v285
  %v298 = vadd.f32 %v273, %v286
  %v299 = vadd.f32 %v123, %v287
  %v300 = vadd.f32 %v125, %v288
  %v301 = vadd.f32 %v200, %v289
  %v302 = vadd.f32 %v202, %v290
  %v303 = vadd.f32 %v277, %v291
  %v304 = vadd.f32 %v279, %v292
  %v305 = vmul.f32 %v293, 0.5
  %v306 = vmul.f32 %v294, 0.5
  %v307 = vmul.f32 %v295, 0.5
  %v308 = vmul.f32 %v296, 0.5
  %v309 = vmul.f32 %v297, 0.5
  %v310 = vmul.f32 %v298, 0.5
  %v311 = vmul.f32 %v299, 0.5
  %v312 = vmul.f32 %v300, 0.5
  %v313 = vmul.f32 %v301, 0.5
  %v314 = vmul.f32 %v302, 0.5
  %v315 = vmul.f32 %v303, 0.5
  %v316 = vmul.f32 %v304, 0.5
  %v317 = vmul.f32 %v293, 0.70710677
  %v318 = vmul.f32 %v294, 0.70710677
  %v319 = vmul.f32 %v295, 0.70710677
  %v320 = vmul.f32 %v296, 0.70710677
  %v321 = vmul.f32 %v297, 0.70710677
  %v322 = vmul.f32 %v298, 0.70710677
  %v323 = vmul.f32 %v299, 0.70710677
  %v324 = vmul.f32 %v300, 0.70710677
  %v325 = vmul.f32 %v301, 0.70710677
  %v326 = vmul.f32 %v302, 0.70710677
  %v327 = vmul.f32 %v303, 0.70710677
  %v328 = vmul.f32 %v304, 0.70710677
  %v329 = verf.f32.pop %v317
  %v330 = verf.f32.pop %v318
  %v331 = verf.f32.pop %v319
  %v332 = verf.f32.pop %v320
  %v333 = verf.f32.pop %v321
  %v334 = verf.f32.pop %v322
  %v335 = verf.f32.pop %v323
  %v336 = verf.f32.pop %v324
  %v337 = verf.f32.pop %v325
  %v338 = verf.f32.pop %v326
  %v339 = verf.f32.pop %v327
  %v340 = verf.f32.pop %v328
  %v341 = vadd.f32 %v329, 1.0
  %v342 = vadd.f32 %v330, 1.0
  %v343 = vadd.f32 %v331, 1.0
  %v344 = vadd.f32 %v332, 1.0
  %v345 = vadd.f32 %v333, 1.0
  %v346 = vadd.f32 %v334, 1.0
  %v347 = vadd.f32 %v335, 1.0
  %v348 = vadd.f32 %v336, 1.0
  %v349 = vadd.f32 %v337, 1.0
  %v350 = vadd.f32 %v338, 1.0
  %v351 = vadd.f32 %v339, 1.0
  %v352 = vadd.f32 %v340, 1.0
  %v353 = vmul.f32 %v305, %v341
  %v354 = vmul.f32 %v306, %v342
  %v355 = vmul.f32 %v307, %v343
  %v356 = vmul.f32 %v308, %v344
  %v357 = vmul.f32 %v309, %v345
  %v358 = vmul.f32 %v310, %v346
  %v359 = vmul.f32 %v311, %v347
  %v360 = vmul.f32 %v312, %v348
  %v361 = vmul.f32 %v313, %v349
  %v362 = vmul.f32 %v314, %v350
  %v363 = vmul.f32 %v315, %v351
  %v364 = vmul.f32 %v316, %v352
  %365 = vst [vmem:[%s4] sm:$0xff] %v353
  %366 = vst [vmem:[%s4 + $0x8] sm:$0xff] %v354
  %367 = vst [vmem:[%s4 + $0x10] sm:$0xff] %v355
  %368 = vst [vmem:[%s4 + $0x18] sm:$0xff] %v356
  %369 = vst [vmem:[%s4 + $0x20] sm:$0xff] %v357
  %370 = vst [vmem:[%s4 + $0x28] sm:$0xff] %v358
  %371 = vst [vmem:[%s4 + $0x30] sm:$0xff] %v359
  %372 = vst [vmem:[%s4 + $0x38] sm:$0xff] %v360
  %373 = vst [vmem:[%s4 + $0x40] sm:$0xff] %v361
  %374 = vst [vmem:[%s4 + $0x48] sm:$0xff] %v362
  %375 = vst [vmem:[%s4 + $0x50] sm:$0xff] %v363
  %376 = vst [vmem:[%s4 + $0x58] sm:$0xff] %v364
  // Predicated region
  $region18: #{fno3d_forward.10} parent=0 // pred_check
    _
  $region19: #{fno3d_forward.10} parent=0 // pred_check_branch
    %378 = sbr.rel (0) target = $region21
  $region20: #{fno3d_forward.10} parent=0 // pred_region
    _
  $region21: #{fno3d_forward.10} parent=0 // pred_fallthru
    _
  // Predicated region
  $region22: #{fno3d_forward.10} parent=0 // pred_check
    _
  $region23: #{fno3d_forward.10} parent=0 // pred_check_branch
    %380 = sbr.rel (0) target = $region25
  $region24: #{fno3d_forward.10} parent=0 // pred_region
    _
  $region25: #{fno3d_forward.10} parent=0 // pred_fallthru
    _

// kernel: fno3d_forward.15
$region0: #{fno3d_forward.15}
  #allocation0 [shape = 'u32[]', space=smem, size = 0x4, offset = 0x4, fixed_abs, tag = 'smem constant byte address 0x4 - core index']
  #allocation1 [shape = 'u32[144,128]{1,0:T(1,128)}', space=vmem, size = 0x12000, scoped, tag = 'internal scratch']
  #allocation2 [shape = 'f32[1,1]{1,0:T(1,128)S(1)}', space=vmem, size = 0x200, scoped, tag = 'scoped memory for fno3d_forward.15']
  %s0 = inlined_call_operand.vmem [shape: f32[16,768], index: 0, kind: input, shape index: {}]
  %s1 = inlined_call_operand.vmem [shape: f32[128,16], index: 1, kind: input, shape index: {}]
  %s2 = inlined_call_operand.vmem [shape: f32[128,1], index: 2, kind: input, shape index: {}]
  %s3 = inlined_call_operand.vmem [shape: f32[1,128], index: 3, kind: input, shape index: {}]
  %s4 = inlined_call_operand.<no memory space> [shape: f32[1,1], index: 4, kind: input, shape index: {}]
  %s5 = inlined_call_operand.vmem [shape: f32[1,768], index: 5, kind: output, shape index: {}]
  %s6 = sld [smem:[#allocation0]]
  $region30: #{fno3d_forward.15} parent=0
    _
  %s8 = ssub.s32 1, %s6
  %s9 = scalar_select 0, %s8, %s6
  %v10 = vstv %s4
  %11 = vst [vmem:[#allocation2] sm:$0x1] %v10
  // Predicated region
  $region2: #{fno3d_forward.15} parent=0 // pred_check
    _
  $region3: #{fno3d_forward.15} parent=0 // pred_check_branch
    %13 = sbr.rel (0) target = $region5
  $region4: #{fno3d_forward.15} parent=0 // pred_region
    _
  $region5: #{fno3d_forward.15} parent=0 // pred_fallthru
    _
  // Predicated region
  $region6: #{fno3d_forward.15} parent=0 // pred_check
    _
  $region7: #{fno3d_forward.15} parent=0 // pred_check_branch
    %15 = sbr.rel (0) target = $region9
  $region8: #{fno3d_forward.15} parent=0 // pred_region
    _
  $region9: #{fno3d_forward.15} parent=0 // pred_fallthru
    _
  // Predicated region
  $region10: #{fno3d_forward.15} parent=0 // pred_check
    _
  $region11: #{fno3d_forward.15} parent=0 // pred_check_branch
    %17 = sbr.rel (0) target = $region13
  $region12: #{fno3d_forward.15} parent=0 // pred_region
    _
  $region13: #{fno3d_forward.15} parent=0 // pred_fallthru
    _
  // Predicated region
  $region14: #{fno3d_forward.15} parent=0 // pred_check
    _
  $region15: #{fno3d_forward.15} parent=0 // pred_check_branch
    %19 = sbr.rel (0) target = $region17
  $region16: #{fno3d_forward.15} parent=0 // pred_region
    _
  $region17: #{fno3d_forward.15} parent=0 // pred_fallthru
    _
  // Predicated region
  $region18: #{fno3d_forward.15} parent=0 // pred_check
    _
  $region19: #{fno3d_forward.15} parent=0 // pred_check_branch
    %21 = sbr.rel (0) target = $region21
  $region20: #{fno3d_forward.15} parent=0 // pred_region
    _
  $region21: #{fno3d_forward.15} parent=0 // pred_fallthru
    _
  %v22 = vld [vmem:[%s1] sm:$0xff]
  %v23 = vld [vmem:[%s1 + $0x8] sm:$0xff]
  %v24 = vld [vmem:[%s1 + $0x10] sm:$0xff]
  %v25 = vld [vmem:[%s1 + $0x18] sm:$0xff]
  %v26 = vld [vmem:[%s1 + $0x20] sm:$0xff]
  %v27 = vld [vmem:[%s1 + $0x28] sm:$0xff]
  %v28 = vld [vmem:[%s1 + $0x30] sm:$0xff]
  %v29 = vld [vmem:[%s1 + $0x38] sm:$0xff]
  %v30 = vld [vmem:[%s1 + $0x40] sm:$0xff]
  %v31 = vld [vmem:[%s1 + $0x48] sm:$0xff]
  %v32 = vld [vmem:[%s1 + $0x50] sm:$0xff]
  %v33 = vld [vmem:[%s1 + $0x58] sm:$0xff]
  %v34 = vld [vmem:[%s1 + $0x60] sm:$0xff]
  %v35 = vld [vmem:[%s1 + $0x68] sm:$0xff]
  %v36 = vld [vmem:[%s1 + $0x70] sm:$0xff]
  %v37 = vld [vmem:[%s1 + $0x78] sm:$0xff]
  %v38 = vld [vmem:[%s0] sm:$0xff]
  %v39 = vld [vmem:[%s0 + $0x8] sm:$0xff]
  %v40 = vld [vmem:[%s0 + $0x10] sm:$0xff]
  %v41 = vld [vmem:[%s0 + $0x18] sm:$0xff]
  %v42 = vld [vmem:[%s0 + $0x20] sm:$0xff]
  %v43 = vld [vmem:[%s0 + $0x28] sm:$0xff]
  %v44 = vld [vmem:[%s0 + $0x30] sm:$0xff]
  %v45 = vld [vmem:[%s0 + $0x38] sm:$0xff]
  %v46 = vld [vmem:[%s0 + $0x40] sm:$0xff]
  %v47 = vld [vmem:[%s0 + $0x48] sm:$0xff]
  %v48 = vld [vmem:[%s0 + $0x50] sm:$0xff]
  %v49 = vld [vmem:[%s0 + $0x58] sm:$0xff]
  %v50 = vld [vmem:[%s2] sm:$0xff]
  %v51 = vld [vmem:[%s2 + $0x8] sm:$0xff]
  %v52 = vld [vmem:[%s2 + $0x10] sm:$0xff]
  %v53 = vld [vmem:[%s2 + $0x18] sm:$0xff]
  %v54 = vld [vmem:[%s2 + $0x20] sm:$0xff]
  %v55 = vld [vmem:[%s2 + $0x28] sm:$0xff]
  %v56 = vld [vmem:[%s2 + $0x30] sm:$0xff]
  %v57 = vld [vmem:[%s2 + $0x38] sm:$0xff]
  %v58 = vld [vmem:[%s2 + $0x40] sm:$0xff]
  %v59 = vld [vmem:[%s2 + $0x48] sm:$0xff]
  %v60 = vld [vmem:[%s2 + $0x50] sm:$0xff]
  %v61 = vld [vmem:[%s2 + $0x58] sm:$0xff]
  %v62 = vld [vmem:[%s2 + $0x60] sm:$0xff]
  %v63 = vld [vmem:[%s2 + $0x68] sm:$0xff]
  %v64 = vld [vmem:[%s2 + $0x70] sm:$0xff]
  %v65 = vld [vmem:[%s2 + $0x78] sm:$0xff]
  %67 = vset.pattern.permute.xlu0 0
  %68 = vperm.xlu0 %67, %v50
  %v69 = vpop.permute.xlu0 %68
  %72 = vset.pattern.permute.xlu0 0
  %73 = vperm.xlu0 %72, %v51
  %v74 = vpop.permute.xlu0 %73
  %77 = vset.pattern.permute.xlu0 0
  %78 = vperm.xlu0 %77, %v52
  %v79 = vpop.permute.xlu0 %78
  %82 = vset.pattern.permute.xlu0 0
  %83 = vperm.xlu0 %82, %v53
  %v84 = vpop.permute.xlu0 %83
  %87 = vset.pattern.permute.xlu0 0
  %88 = vperm.xlu0 %87, %v54
  %v89 = vpop.permute.xlu0 %88
  %92 = vset.pattern.permute.xlu0 0
  %93 = vperm.xlu0 %92, %v55
  %v94 = vpop.permute.xlu0 %93
  %97 = vset.pattern.permute.xlu0 0
  %98 = vperm.xlu0 %97, %v56
  %v99 = vpop.permute.xlu0 %98
  %102 = vset.pattern.permute.xlu0 0
  %103 = vperm.xlu0 %102, %v57
  %v104 = vpop.permute.xlu0 %103
  %107 = vset.pattern.permute.xlu0 0
  %108 = vperm.xlu0 %107, %v58
  %v109 = vpop.permute.xlu0 %108
  %112 = vset.pattern.permute.xlu0 0
  %113 = vperm.xlu0 %112, %v59
  %v114 = vpop.permute.xlu0 %113
  %117 = vset.pattern.permute.xlu0 0
  %118 = vperm.xlu0 %117, %v60
  %v119 = vpop.permute.xlu0 %118
  %122 = vset.pattern.permute.xlu0 0
  %123 = vperm.xlu0 %122, %v61
  %v124 = vpop.permute.xlu0 %123
  %127 = vset.pattern.permute.xlu0 0
  %128 = vperm.xlu0 %127, %v62
  %v129 = vpop.permute.xlu0 %128
  %132 = vset.pattern.permute.xlu0 0
  %133 = vperm.xlu0 %132, %v63
  %v134 = vpop.permute.xlu0 %133
  %137 = vset.pattern.permute.xlu0 0
  %138 = vperm.xlu0 %137, %v64
  %v139 = vpop.permute.xlu0 %138
  %142 = vset.pattern.permute.xlu0 0
  %143 = vperm.xlu0 %142, %v65
  %v144 = vpop.permute.xlu0 %143
  %vm146 = vcmask 130048
  %v148 = vsel %vm146, %v22, 0
  %v151 = vsel %vm146, %v23, 0
  %v154 = vsel %vm146, %v24, 0
  %v157 = vsel %vm146, %v25, 0
  %v160 = vsel %vm146, %v26, 0
  %v163 = vsel %vm146, %v27, 0
  %v166 = vsel %vm146, %v28, 0
  %v169 = vsel %vm146, %v29, 0
  %v172 = vsel %vm146, %v30, 0
  %v175 = vsel %vm146, %v31, 0
  %v178 = vsel %vm146, %v32, 0
  %v181 = vsel %vm146, %v33, 0
  %v184 = vsel %vm146, %v34, 0
  %v187 = vsel %vm146, %v35, 0
  %v190 = vsel %vm146, %v36, 0
  %v193 = vsel %vm146, %v37, 0
  %195 = vmatprep.subr.mxu0 0.0
  %196 = vmatpush1.msra.mxu0 0.0
  %197 = vmatprep.subr.mxu0 0.0
  %198 = vmatpush1.msra.mxu0 0.0
  %199 = vmatprep.subr.mxu0 0.0
  %200 = vmatpush1.msra.mxu0 0.0
  %201 = vmatprep.subr.mxu0 0.0
  %202 = vmatpush1.msra.mxu0 0.0
  %203 = vmatprep.subr.mxu0 0.0
  %204 = vmatpush1.msra.mxu0 0.0
  %205 = vmatprep.subr.mxu0 0.0
  %206 = vmatpush1.msra.mxu0 0.0
  %207 = vmatprep.subr.mxu0 0.0
  %208 = vmatpush1.msra.mxu0 0.0
  %209 = vmatprep.subr.mxu0 0.0
  %210 = vmatpush1.msra.mxu0 0.0
  %211 = vmatprep.subr.mxu0 0.0
  %212 = vmatpush1.msra.mxu0 0.0
  %213 = vmatprep.subr.mxu0 0.0
  %214 = vmatpush1.msra.mxu0 0.0
  %215 = vmatprep.subr.mxu0 0.0
  %216 = vmatpush1.msra.mxu0 0.0
  %217 = vmatprep.subr.mxu0 0.0
  %218 = vmatpush1.msra.mxu0 0.0
  %219 = vmatprep.subr.mxu0 0.0
  %220 = vmatpush1.msra.mxu0 0.0
  %221 = vmatprep.subr.mxu0 0.0
  %222 = vmatpush1.msra.mxu0 0.0
  %223 = vmatprep.subr.mxu0 %v45
  %224 = vmatpush1.msra.mxu0 %v44
  %225 = vmatprep.subr.mxu0 %v39
  %226 = vmatpush1.msra.mxu0 %v38
  %227 = vmatprep.subr.mxu0 0.0
  %228 = vmatpush2.msra.mxu0 0.0
  %229 = vmatprep.subr.mxu0 0.0
  %230 = vmatpush2.msra.mxu0 0.0
  %231 = vmatprep.subr.mxu0 0.0
  %232 = vmatpush2.msra.mxu0 0.0
  %233 = vmatprep.subr.mxu0 0.0
  %234 = vmatpush2.msra.mxu0 0.0
  %235 = vmatprep.subr.mxu0 0.0
  %236 = vmatpush2.msra.mxu0 0.0
  %237 = vmatprep.subr.mxu0 0.0
  %238 = vmatpush2.msra.mxu0 0.0
  %239 = vmatprep.subr.mxu0 0.0
  %240 = vmatpush2.msra.mxu0 0.0
  %241 = vmatprep.subr.mxu0 0.0
  %242 = vmatpush2.msra.mxu0 0.0
  %243 = vmatprep.subr.mxu0 0.0
  %244 = vmatpush2.msra.mxu0 0.0
  %245 = vmatprep.subr.mxu0 0.0
  %246 = vmatpush2.msra.mxu0 0.0
  %247 = vmatprep.subr.mxu0 0.0
  %248 = vmatpush2.msra.mxu0 0.0
  %249 = vmatprep.subr.mxu0 0.0
  %250 = vmatpush2.msra.mxu0 0.0
  %251 = vmatprep.subr.mxu0 0.0
  %252 = vmatpush2.msra.mxu0 0.0
  %253 = vmatprep.subr.mxu0 0.0
  %254 = vmatpush2.msra.mxu0 0.0
  %255 = vmatprep.subr.mxu0 0.0
  %256 = vmatpush2.msra.mxu0 0.0
  %257 = vmatprep.subr.mxu0 0.0
  %258 = vmatpush2.msra.mxu0 0.0
  %259 = vmatprep.mubr.f32.mxu0 0.0
  %260 = vmatmul.mubr.f32.gmra.mxu0 %v148
  %v261 = vpop.f32.mrf.mxu0
  %v262 = vadd.f32 %v69, %v261
  %v263 = vpop.f32.mrf.mxu0
  %v264 = vadd.f32 %v69, %v263
  %265 = vmatprep.mubr.f32.mxu0 0.0
  %266 = vmatmul.mubr.f32.gmra.mxu0 %v151
  %v267 = vpop.f32.mrf.mxu0
  %v268 = vadd.f32 %v74, %v267
  %v269 = vpop.f32.mrf.mxu0
  %v270 = vadd.f32 %v74, %v269
  %271 = vmatprep.mubr.f32.mxu0 0.0
  %272 = vmatmul.mubr.f32.gmra.mxu0 %v154
  %v273 = vpop.f32.mrf.mxu0
  %v274 = vadd.f32 %v79, %v273
  %v275 = vpop.f32.mrf.mxu0
  %v276 = vadd.f32 %v79, %v275
  %277 = vmatprep.mubr.f32.mxu0 0.0
  %278 = vmatmul.mubr.f32.gmra.mxu0 %v157
  %v279 = vpop.f32.mrf.mxu0
  %v280 = vadd.f32 %v84, %v279
  %v281 = vpop.f32.mrf.mxu0
  %v282 = vadd.f32 %v84, %v281
  %283 = vmatprep.mubr.f32.mxu0 0.0
  %284 = vmatmul.mubr.f32.gmra.mxu0 %v160
  %v285 = vpop.f32.mrf.mxu0
  %v286 = vadd.f32 %v89, %v285
  %v287 = vpop.f32.mrf.mxu0
  %v288 = vadd.f32 %v89, %v287
  %289 = vmatprep.mubr.f32.mxu0 0.0
  %290 = vmatmul.mubr.f32.gmra.mxu0 %v163
  %v291 = vpop.f32.mrf.mxu0
  %v292 = vadd.f32 %v94, %v291
  %v293 = vpop.f32.mrf.mxu0
  %v294 = vadd.f32 %v94, %v293
  %295 = vmatprep.mubr.f32.mxu0 0.0
  %296 = vmatmul.mubr.f32.gmra.mxu0 %v166
  %v297 = vpop.f32.mrf.mxu0
  %v298 = vadd.f32 %v99, %v297
  %v299 = vpop.f32.mrf.mxu0
  %v300 = vadd.f32 %v99, %v299
  %301 = vmatprep.mubr.f32.mxu0 0.0
  %302 = vmatmul.mubr.f32.gmra.mxu0 %v169
  %v303 = vpop.f32.mrf.mxu0
  %v304 = vadd.f32 %v104, %v303
  %v305 = vpop.f32.mrf.mxu0
  %v306 = vadd.f32 %v104, %v305
  %307 = vmatprep.mubr.f32.mxu0 0.0
  %308 = vmatmul.mubr.f32.gmra.mxu0 %v172
  %v309 = vpop.f32.mrf.mxu0
  %v310 = vadd.f32 %v109, %v309
  %v311 = vpop.f32.mrf.mxu0
  %v312 = vadd.f32 %v109, %v311
  %313 = vmatprep.mubr.f32.mxu0 0.0
  %314 = vmatmul.mubr.f32.gmra.mxu0 %v175
  %v315 = vpop.f32.mrf.mxu0
  %v316 = vadd.f32 %v114, %v315
  %v317 = vpop.f32.mrf.mxu0
  %v318 = vadd.f32 %v114, %v317
  %319 = vmatprep.mubr.f32.mxu0 0.0
  %320 = vmatmul.mubr.f32.gmra.mxu0 %v178
  %v321 = vpop.f32.mrf.mxu0
  %v322 = vadd.f32 %v119, %v321
  %v323 = vpop.f32.mrf.mxu0
  %v324 = vadd.f32 %v119, %v323
  %325 = vmatprep.mubr.f32.mxu0 0.0
  %326 = vmatmul.mubr.f32.gmra.mxu0 %v181
  %v327 = vpop.f32.mrf.mxu0
  %v328 = vadd.f32 %v124, %v327
  %v329 = vpop.f32.mrf.mxu0
  %v330 = vadd.f32 %v124, %v329
  %331 = vmatprep.mubr.f32.mxu0 0.0
  %332 = vmatmul.mubr.f32.gmra.mxu0 %v184
  %v333 = vpop.f32.mrf.mxu0
  %v334 = vadd.f32 %v129, %v333
  %v335 = vpop.f32.mrf.mxu0
  %v336 = vadd.f32 %v129, %v335
  %337 = vmatprep.mubr.f32.mxu0 0.0
  %338 = vmatmul.mubr.f32.gmra.mxu0 %v187
  %v339 = vpop.f32.mrf.mxu0
  %v340 = vadd.f32 %v134, %v339
  %v341 = vpop.f32.mrf.mxu0
  %v342 = vadd.f32 %v134, %v341
  %343 = vmatprep.mubr.f32.mxu0 0.0
  %344 = vmatmul.mubr.f32.gmra.mxu0 %v190
  %v345 = vpop.f32.mrf.mxu0
  %v346 = vadd.f32 %v139, %v345
  %v347 = vpop.f32.mrf.mxu0
  %v348 = vadd.f32 %v139, %v347
  %349 = vmatprep.mubr.f32.mxu0 0.0
  %350 = vmatmul.mubr.f32.gmra.mxu0 %v193
  %v351 = vpop.f32.mrf.mxu0
  %v352 = vadd.f32 %v144, %v351
  %v353 = vpop.f32.mrf.mxu0
  %v354 = vadd.f32 %v144, %v353
  %355 = vdwg.mxu0
  %356 = vmatprep.subr.mxu0 0.0
  %357 = vmatpush1.msra.mxu0 0.0
  %358 = vmatprep.subr.mxu0 0.0
  %359 = vmatpush1.msra.mxu0 0.0
  %360 = vmatprep.subr.mxu0 0.0
  %361 = vmatpush1.msra.mxu0 0.0
  %362 = vmatprep.subr.mxu0 0.0
  %363 = vmatpush1.msra.mxu0 0.0
  %364 = vmatprep.subr.mxu0 0.0
  %365 = vmatpush1.msra.mxu0 0.0
  %366 = vmatprep.subr.mxu0 0.0
  %367 = vmatpush1.msra.mxu0 0.0
  %368 = vmatprep.subr.mxu0 0.0
  %369 = vmatpush1.msra.mxu0 0.0
  %370 = vmatprep.subr.mxu0 0.0
  %371 = vmatpush1.msra.mxu0 0.0
  %372 = vmatprep.subr.mxu0 0.0
  %373 = vmatpush1.msra.mxu0 0.0
  %374 = vmatprep.subr.mxu0 0.0
  %375 = vmatpush1.msra.mxu0 0.0
  %376 = vmatprep.subr.mxu0 0.0
  %377 = vmatpush1.msra.mxu0 0.0
  %378 = vmatprep.subr.mxu0 0.0
  %379 = vmatpush1.msra.mxu0 0.0
  %380 = vmatprep.subr.mxu0 0.0
  %381 = vmatpush1.msra.mxu0 0.0
  %382 = vmatprep.subr.mxu0 0.0
  %383 = vmatpush1.msra.mxu0 0.0
  %384 = vmatprep.subr.mxu0 %v47
  %385 = vmatpush1.msra.mxu0 %v46
  %386 = vmatprep.subr.mxu0 %v41
  %387 = vmatpush1.msra.mxu0 %v40
  %388 = vmatprep.subr.mxu0 0.0
  %389 = vmatpush2.msra.mxu0 0.0
  %390 = vmatprep.subr.mxu0 0.0
  %391 = vmatpush2.msra.mxu0 0.0
  %392 = vmatprep.subr.mxu0 0.0
  %393 = vmatpush2.msra.mxu0 0.0
  %394 = vmatprep.subr.mxu0 0.0
  %395 = vmatpush2.msra.mxu0 0.0
  %396 = vmatprep.subr.mxu0 0.0
  %397 = vmatpush2.msra.mxu0 0.0
  %398 = vmatprep.subr.mxu0 0.0
  %399 = vmatpush2.msra.mxu0 0.0
  %400 = vmatprep.subr.mxu0 0.0
  %401 = vmatpush2.msra.mxu0 0.0
  %402 = vmatprep.subr.mxu0 0.0
  %403 = vmatpush2.msra.mxu0 0.0
  %404 = vmatprep.subr.mxu0 0.0
  %405 = vmatpush2.msra.mxu0 0.0
  %406 = vmatprep.subr.mxu0 0.0
  %407 = vmatpush2.msra.mxu0 0.0
  %408 = vmatprep.subr.mxu0 0.0
  %409 = vmatpush2.msra.mxu0 0.0
  %410 = vmatprep.subr.mxu0 0.0
  %411 = vmatpush2.msra.mxu0 0.0
  %412 = vmatprep.subr.mxu0 0.0
  %413 = vmatpush2.msra.mxu0 0.0
  %414 = vmatprep.subr.mxu0 0.0
  %415 = vmatpush2.msra.mxu0 0.0
  %416 = vmatprep.subr.mxu0 0.0
  %417 = vmatpush2.msra.mxu0 0.0
  %418 = vmatprep.subr.mxu0 0.0
  %419 = vmatpush2.msra.mxu0 0.0
  %420 = vmatprep.mubr.f32.mxu0 0.0
  %421 = vmatmul.mubr.f32.gmra.mxu0 %v148
  %v422 = vpop.f32.mrf.mxu0
  %v423 = vadd.f32 %v69, %v422
  %v424 = vpop.f32.mrf.mxu0
  %v425 = vadd.f32 %v69, %v424
  %426 = vmatprep.mubr.f32.mxu0 0.0
  %427 = vmatmul.mubr.f32.gmra.mxu0 %v151
  %v428 = vpop.f32.mrf.mxu0
  %v429 = vadd.f32 %v74, %v428
  %v430 = vpop.f32.mrf.mxu0
  %v431 = vadd.f32 %v74, %v430
  %432 = vmatprep.mubr.f32.mxu0 0.0
  %433 = vmatmul.mubr.f32.gmra.mxu0 %v154
  %v434 = vpop.f32.mrf.mxu0
  %v435 = vadd.f32 %v79, %v434
  %v436 = vpop.f32.mrf.mxu0
  %v437 = vadd.f32 %v79, %v436
  %438 = vmatprep.mubr.f32.mxu0 0.0
  %439 = vmatmul.mubr.f32.gmra.mxu0 %v157
  %v440 = vpop.f32.mrf.mxu0
  %v441 = vadd.f32 %v84, %v440
  %v442 = vpop.f32.mrf.mxu0
  %v443 = vadd.f32 %v84, %v442
  %444 = vmatprep.mubr.f32.mxu0 0.0
  %445 = vmatmul.mubr.f32.gmra.mxu0 %v160
  %v446 = vpop.f32.mrf.mxu0
  %v447 = vadd.f32 %v89, %v446
  %v448 = vpop.f32.mrf.mxu0
  %v449 = vadd.f32 %v89, %v448
  %450 = vmatprep.mubr.f32.mxu0 0.0
  %451 = vmatmul.mubr.f32.gmra.mxu0 %v163
  %v452 = vpop.f32.mrf.mxu0
  %v453 = vadd.f32 %v94, %v452
  %v454 = vpop.f32.mrf.mxu0
  %v455 = vadd.f32 %v94, %v454
  %456 = vmatprep.mubr.f32.mxu0 0.0
  %457 = vmatmul.mubr.f32.gmra.mxu0 %v166
  %v458 = vpop.f32.mrf.mxu0
  %v459 = vadd.f32 %v99, %v458
  %v460 = vpop.f32.mrf.mxu0
  %v461 = vadd.f32 %v99, %v460
  %462 = vmatprep.mubr.f32.mxu0 0.0
  %463 = vmatmul.mubr.f32.gmra.mxu0 %v169
  %v464 = vpop.f32.mrf.mxu0
  %v465 = vadd.f32 %v104, %v464
  %v466 = vpop.f32.mrf.mxu0
  %v467 = vadd.f32 %v104, %v466
  %468 = vmatprep.mubr.f32.mxu0 0.0
  %469 = vmatmul.mubr.f32.gmra.mxu0 %v172
  %v470 = vpop.f32.mrf.mxu0
  %v471 = vadd.f32 %v109, %v470
  %v472 = vpop.f32.mrf.mxu0
  %v473 = vadd.f32 %v109, %v472
  %474 = vmatprep.mubr.f32.mxu0 0.0
  %475 = vmatmul.mubr.f32.gmra.mxu0 %v175
  %v476 = vpop.f32.mrf.mxu0
  %v477 = vadd.f32 %v114, %v476
  %v478 = vpop.f32.mrf.mxu0
  %v479 = vadd.f32 %v114, %v478
  %480 = vmatprep.mubr.f32.mxu0 0.0
  %481 = vmatmul.mubr.f32.gmra.mxu0 %v178
  %v482 = vpop.f32.mrf.mxu0
  %v483 = vadd.f32 %v119, %v482
  %v484 = vpop.f32.mrf.mxu0
  %v485 = vadd.f32 %v119, %v484
  %486 = vmatprep.mubr.f32.mxu0 0.0
  %487 = vmatmul.mubr.f32.gmra.mxu0 %v181
  %v488 = vpop.f32.mrf.mxu0
  %v489 = vadd.f32 %v124, %v488
  %v490 = vpop.f32.mrf.mxu0
  %v491 = vadd.f32 %v124, %v490
  %492 = vmatprep.mubr.f32.mxu0 0.0
  %493 = vmatmul.mubr.f32.gmra.mxu0 %v184
  %v494 = vpop.f32.mrf.mxu0
  %v495 = vadd.f32 %v129, %v494
  %v496 = vpop.f32.mrf.mxu0
  %v497 = vadd.f32 %v129, %v496
  %498 = vmatprep.mubr.f32.mxu0 0.0
  %499 = vmatmul.mubr.f32.gmra.mxu0 %v187
  %v500 = vpop.f32.mrf.mxu0
  %v501 = vadd.f32 %v134, %v500
  %v502 = vpop.f32.mrf.mxu0
  %v503 = vadd.f32 %v134, %v502
  %504 = vmatprep.mubr.f32.mxu0 0.0
  %505 = vmatmul.mubr.f32.gmra.mxu0 %v190
  %v506 = vpop.f32.mrf.mxu0
  %v507 = vadd.f32 %v139, %v506
  %v508 = vpop.f32.mrf.mxu0
  %v509 = vadd.f32 %v139, %v508
  %510 = vmatprep.mubr.f32.mxu0 0.0
  %511 = vmatmul.mubr.f32.gmra.mxu0 %v193
  %v512 = vpop.f32.mrf.mxu0
  %v513 = vadd.f32 %v144, %v512
  %v514 = vpop.f32.mrf.mxu0
  %v515 = vadd.f32 %v144, %v514
  %516 = vdwg.mxu0
  %517 = vmatprep.subr.mxu0 0.0
  %518 = vmatpush1.msra.mxu0 0.0
  %519 = vmatprep.subr.mxu0 0.0
  %520 = vmatpush1.msra.mxu0 0.0
  %521 = vmatprep.subr.mxu0 0.0
  %522 = vmatpush1.msra.mxu0 0.0
  %523 = vmatprep.subr.mxu0 0.0
  %524 = vmatpush1.msra.mxu0 0.0
  %525 = vmatprep.subr.mxu0 0.0
  %526 = vmatpush1.msra.mxu0 0.0
  %527 = vmatprep.subr.mxu0 0.0
  %528 = vmatpush1.msra.mxu0 0.0
  %529 = vmatprep.subr.mxu0 0.0
  %530 = vmatpush1.msra.mxu0 0.0
  %531 = vmatprep.subr.mxu0 0.0
  %532 = vmatpush1.msra.mxu0 0.0
  %533 = vmatprep.subr.mxu0 0.0
  %534 = vmatpush1.msra.mxu0 0.0
  %535 = vmatprep.subr.mxu0 0.0
  %536 = vmatpush1.msra.mxu0 0.0
  %537 = vmatprep.subr.mxu0 0.0
  %538 = vmatpush1.msra.mxu0 0.0
  %539 = vmatprep.subr.mxu0 0.0
  %540 = vmatpush1.msra.mxu0 0.0
  %541 = vmatprep.subr.mxu0 0.0
  %542 = vmatpush1.msra.mxu0 0.0
  %543 = vmatprep.subr.mxu0 0.0
  %544 = vmatpush1.msra.mxu0 0.0
  %545 = vmatprep.subr.mxu0 %v49
  %546 = vmatpush1.msra.mxu0 %v48
  %547 = vmatprep.subr.mxu0 %v43
  %548 = vmatpush1.msra.mxu0 %v42
  %549 = vmatprep.subr.mxu0 0.0
  %550 = vmatpush2.msra.mxu0 0.0
  %551 = vmatprep.subr.mxu0 0.0
  %552 = vmatpush2.msra.mxu0 0.0
  %553 = vmatprep.subr.mxu0 0.0
  %554 = vmatpush2.msra.mxu0 0.0
  %555 = vmatprep.subr.mxu0 0.0
  %556 = vmatpush2.msra.mxu0 0.0
  %557 = vmatprep.subr.mxu0 0.0
  %558 = vmatpush2.msra.mxu0 0.0
  %559 = vmatprep.subr.mxu0 0.0
  %560 = vmatpush2.msra.mxu0 0.0
  %561 = vmatprep.subr.mxu0 0.0
  %562 = vmatpush2.msra.mxu0 0.0
  %563 = vmatprep.subr.mxu0 0.0
  %564 = vmatpush2.msra.mxu0 0.0
  %565 = vmatprep.subr.mxu0 0.0
  %566 = vmatpush2.msra.mxu0 0.0
  %567 = vmatprep.subr.mxu0 0.0
  %568 = vmatpush2.msra.mxu0 0.0
  %569 = vmatprep.subr.mxu0 0.0
  %570 = vmatpush2.msra.mxu0 0.0
  %571 = vmatprep.subr.mxu0 0.0
  %572 = vmatpush2.msra.mxu0 0.0
  %573 = vmatprep.subr.mxu0 0.0
  %574 = vmatpush2.msra.mxu0 0.0
  %575 = vmatprep.subr.mxu0 0.0
  %576 = vmatpush2.msra.mxu0 0.0
  %577 = vmatprep.subr.mxu0 0.0
  %578 = vmatpush2.msra.mxu0 0.0
  %579 = vmatprep.subr.mxu0 0.0
  %580 = vmatpush2.msra.mxu0 0.0
  %581 = vmatprep.mubr.f32.mxu0 0.0
  %582 = vmatmul.mubr.f32.gmra.mxu0 %v148
  %v583 = vpop.f32.mrf.mxu0
  %v584 = vadd.f32 %v69, %v583
  %v585 = vpop.f32.mrf.mxu0
  %v586 = vadd.f32 %v69, %v585
  %587 = vmatprep.mubr.f32.mxu0 0.0
  %588 = vmatmul.mubr.f32.gmra.mxu0 %v151
  %v589 = vpop.f32.mrf.mxu0
  %v590 = vadd.f32 %v74, %v589
  %v591 = vpop.f32.mrf.mxu0
  %v592 = vadd.f32 %v74, %v591
  %593 = vmatprep.mubr.f32.mxu0 0.0
  %594 = vmatmul.mubr.f32.gmra.mxu0 %v154
  %v595 = vpop.f32.mrf.mxu0
  %v596 = vadd.f32 %v79, %v595
  %v597 = vpop.f32.mrf.mxu0
  %v598 = vadd.f32 %v79, %v597
  %599 = vmatprep.mubr.f32.mxu0 0.0
  %600 = vmatmul.mubr.f32.gmra.mxu0 %v157
  %v601 = vpop.f32.mrf.mxu0
  %v602 = vadd.f32 %v84, %v601
  %v603 = vpop.f32.mrf.mxu0
  %v604 = vadd.f32 %v84, %v603
  %605 = vmatprep.mubr.f32.mxu0 0.0
  %606 = vmatmul.mubr.f32.gmra.mxu0 %v160
  %v607 = vpop.f32.mrf.mxu0
  %v608 = vadd.f32 %v89, %v607
  %v609 = vpop.f32.mrf.mxu0
  %v610 = vadd.f32 %v89, %v609
  %611 = vmatprep.mubr.f32.mxu0 0.0
  %612 = vmatmul.mubr.f32.gmra.mxu0 %v163
  %v613 = vpop.f32.mrf.mxu0
  %v614 = vadd.f32 %v94, %v613
  %v615 = vpop.f32.mrf.mxu0
  %v616 = vadd.f32 %v94, %v615
  %617 = vmatprep.mubr.f32.mxu0 0.0
  %618 = vmatmul.mubr.f32.gmra.mxu0 %v166
  %v619 = vpop.f32.mrf.mxu0
  %v620 = vadd.f32 %v99, %v619
  %v621 = vpop.f32.mrf.mxu0
  %v622 = vadd.f32 %v99, %v621
  %623 = vmatprep.mubr.f32.mxu0 0.0
  %624 = vmatmul.mubr.f32.gmra.mxu0 %v169
  %v625 = vpop.f32.mrf.mxu0
  %v626 = vadd.f32 %v104, %v625
  %v627 = vpop.f32.mrf.mxu0
  %v628 = vadd.f32 %v104, %v627
  %629 = vmatprep.mubr.f32.mxu0 0.0
  %630 = vmatmul.mubr.f32.gmra.mxu0 %v172
  %v631 = vpop.f32.mrf.mxu0
  %v632 = vadd.f32 %v109, %v631
  %v633 = vpop.f32.mrf.mxu0
  %v634 = vadd.f32 %v109, %v633
  %635 = vmatprep.mubr.f32.mxu0 0.0
  %636 = vmatmul.mubr.f32.gmra.mxu0 %v175
  %v637 = vpop.f32.mrf.mxu0
  %v638 = vadd.f32 %v114, %v637
  %v639 = vpop.f32.mrf.mxu0
  %v640 = vadd.f32 %v114, %v639
  %641 = vmatprep.mubr.f32.mxu0 0.0
  %642 = vmatmul.mubr.f32.gmra.mxu0 %v178
  %v643 = vpop.f32.mrf.mxu0
  %v644 = vadd.f32 %v119, %v643
  %v645 = vpop.f32.mrf.mxu0
  %v646 = vadd.f32 %v119, %v645
  %647 = vmatprep.mubr.f32.mxu0 0.0
  %648 = vmatmul.mubr.f32.gmra.mxu0 %v181
  %v649 = vpop.f32.mrf.mxu0
  %v650 = vadd.f32 %v124, %v649
  %v651 = vpop.f32.mrf.mxu0
  %v652 = vadd.f32 %v124, %v651
  %653 = vmatprep.mubr.f32.mxu0 0.0
  %654 = vmatmul.mubr.f32.gmra.mxu0 %v184
  %v655 = vpop.f32.mrf.mxu0
  %v656 = vadd.f32 %v129, %v655
  %v657 = vpop.f32.mrf.mxu0
  %v658 = vadd.f32 %v129, %v657
  %659 = vmatprep.mubr.f32.mxu0 0.0
  %660 = vmatmul.mubr.f32.gmra.mxu0 %v187
  %v661 = vpop.f32.mrf.mxu0
  %v662 = vadd.f32 %v134, %v661
  %v663 = vpop.f32.mrf.mxu0
  %v664 = vadd.f32 %v134, %v663
  %665 = vmatprep.mubr.f32.mxu0 0.0
  %666 = vmatmul.mubr.f32.gmra.mxu0 %v190
  %v667 = vpop.f32.mrf.mxu0
  %v668 = vadd.f32 %v139, %v667
  %v669 = vpop.f32.mrf.mxu0
  %v670 = vadd.f32 %v139, %v669
  %671 = vmatprep.mubr.f32.mxu0 0.0
  %672 = vmatmul.mubr.f32.gmra.mxu0 %v193
  %v673 = vpop.f32.mrf.mxu0
  %v674 = vadd.f32 %v144, %v673
  %v675 = vpop.f32.mrf.mxu0
  %v676 = vadd.f32 %v144, %v675
  %677 = vdwg.mxu0
  %v678 = vmul.f32 %v262, 0.5
  %v679 = vmul.f32 %v264, 0.5
  %v680 = vmul.f32 %v423, 0.5
  %v681 = vmul.f32 %v425, 0.5
  %v682 = vmul.f32 %v584, 0.5
  %v683 = vmul.f32 %v586, 0.5
  %v684 = vmul.f32 %v268, 0.5
  %v685 = vmul.f32 %v270, 0.5
  %v686 = vmul.f32 %v429, 0.5
  %v687 = vmul.f32 %v431, 0.5
  %v688 = vmul.f32 %v590, 0.5
  %v689 = vmul.f32 %v592, 0.5
  %v690 = vmul.f32 %v274, 0.5
  %v691 = vmul.f32 %v276, 0.5
  %v692 = vmul.f32 %v435, 0.5
  %v693 = vmul.f32 %v437, 0.5
  %v694 = vmul.f32 %v596, 0.5
  %v695 = vmul.f32 %v598, 0.5
  %v696 = vmul.f32 %v280, 0.5
  %v697 = vmul.f32 %v282, 0.5
  %v698 = vmul.f32 %v441, 0.5
  %v699 = vmul.f32 %v443, 0.5
  %v700 = vmul.f32 %v602, 0.5
  %v701 = vmul.f32 %v604, 0.5
  %v702 = vmul.f32 %v286, 0.5
  %v703 = vmul.f32 %v288, 0.5
  %v704 = vmul.f32 %v447, 0.5
  %v705 = vmul.f32 %v449, 0.5
  %v706 = vmul.f32 %v608, 0.5
  %v707 = vmul.f32 %v610, 0.5
  %v708 = vmul.f32 %v292, 0.5
  %v709 = vmul.f32 %v294, 0.5
  %v710 = vmul.f32 %v453, 0.5
  %v711 = vmul.f32 %v455, 0.5
  %v712 = vmul.f32 %v614, 0.5
  %v713 = vmul.f32 %v616, 0.5
  %v714 = vmul.f32 %v298, 0.5
  %v715 = vmul.f32 %v300, 0.5
  %v716 = vmul.f32 %v459, 0.5
  %v717 = vmul.f32 %v461, 0.5
  %v718 = vmul.f32 %v620, 0.5
  %v719 = vmul.f32 %v622, 0.5
  %v720 = vmul.f32 %v304, 0.5
  %v721 = vmul.f32 %v306, 0.5
  %v722 = vmul.f32 %v465, 0.5
  %v723 = vmul.f32 %v467, 0.5
  %v724 = vmul.f32 %v626, 0.5
  %v725 = vmul.f32 %v628, 0.5
  %v726 = vmul.f32 %v310, 0.5
  %v727 = vmul.f32 %v312, 0.5
  %v728 = vmul.f32 %v471, 0.5
  %v729 = vmul.f32 %v473, 0.5
  %v730 = vmul.f32 %v632, 0.5
  %v731 = vmul.f32 %v634, 0.5
  %v732 = vmul.f32 %v316, 0.5
  %v733 = vmul.f32 %v318, 0.5
  %v734 = vmul.f32 %v477, 0.5
  %v735 = vmul.f32 %v479, 0.5
  %v736 = vmul.f32 %v638, 0.5
  %v737 = vmul.f32 %v640, 0.5
  %v738 = vmul.f32 %v322, 0.5
  %v739 = vmul.f32 %v324, 0.5
  %v740 = vmul.f32 %v483, 0.5
  %v741 = vmul.f32 %v485, 0.5
  %v742 = vmul.f32 %v644, 0.5
  %v743 = vmul.f32 %v646, 0.5
  %v744 = vmul.f32 %v328, 0.5
  %v745 = vmul.f32 %v330, 0.5
  %v746 = vmul.f32 %v489, 0.5
  %v747 = vmul.f32 %v491, 0.5
  %v748 = vmul.f32 %v650, 0.5
  %v749 = vmul.f32 %v652, 0.5
  %v750 = vmul.f32 %v334, 0.5
  %v751 = vmul.f32 %v336, 0.5
  %v752 = vmul.f32 %v495, 0.5
  %v753 = vmul.f32 %v497, 0.5
  %v754 = vmul.f32 %v656, 0.5
  %v755 = vmul.f32 %v658, 0.5
  %v756 = vmul.f32 %v340, 0.5
  %v757 = vmul.f32 %v342, 0.5
  %v758 = vmul.f32 %v501, 0.5
  %v759 = vmul.f32 %v503, 0.5
  %v760 = vmul.f32 %v662, 0.5
  %v761 = vmul.f32 %v664, 0.5
  %v762 = vmul.f32 %v346, 0.5
  %v763 = vmul.f32 %v348, 0.5
  %v764 = vmul.f32 %v507, 0.5
  %v765 = vmul.f32 %v509, 0.5
  %v766 = vmul.f32 %v668, 0.5
  %v767 = vmul.f32 %v670, 0.5
  %v768 = vmul.f32 %v352, 0.5
  %v769 = vmul.f32 %v354, 0.5
  %v770 = vmul.f32 %v513, 0.5
  %v771 = vmul.f32 %v515, 0.5
  %v772 = vmul.f32 %v674, 0.5
  %v773 = vmul.f32 %v676, 0.5
  %v774 = vmul.f32 %v262, 0.70710677
  %v775 = vmul.f32 %v264, 0.70710677
  %v776 = vmul.f32 %v423, 0.70710677
  %v777 = vmul.f32 %v425, 0.70710677
  %v778 = vmul.f32 %v584, 0.70710677
  %v779 = vmul.f32 %v586, 0.70710677
  %v780 = vmul.f32 %v268, 0.70710677
  %v781 = vmul.f32 %v270, 0.70710677
  %v782 = vmul.f32 %v429, 0.70710677
  %v783 = vmul.f32 %v431, 0.70710677
  %v784 = vmul.f32 %v590, 0.70710677
  %v785 = vmul.f32 %v592, 0.70710677
  %v786 = vmul.f32 %v274, 0.70710677
  %v787 = vmul.f32 %v276, 0.70710677
  %v788 = vmul.f32 %v435, 0.70710677
  %v789 = vmul.f32 %v437, 0.70710677
  %v790 = vmul.f32 %v596, 0.70710677
  %v791 = vmul.f32 %v598, 0.70710677
  %v792 = vmul.f32 %v280, 0.70710677
  %v793 = vmul.f32 %v282, 0.70710677
  %v794 = vmul.f32 %v441, 0.70710677
  %v795 = vmul.f32 %v443, 0.70710677
  %v796 = vmul.f32 %v602, 0.70710677
  %v797 = vmul.f32 %v604, 0.70710677
  %v798 = vmul.f32 %v286, 0.70710677
  %v799 = vmul.f32 %v288, 0.70710677
  %v800 = vmul.f32 %v447, 0.70710677
  %v801 = vmul.f32 %v449, 0.70710677
  %v802 = vmul.f32 %v608, 0.70710677
  %v803 = vmul.f32 %v610, 0.70710677
  %v804 = vmul.f32 %v292, 0.70710677
  %v805 = vmul.f32 %v294, 0.70710677
  %v806 = vmul.f32 %v453, 0.70710677
  %v807 = vmul.f32 %v455, 0.70710677
  %v808 = vmul.f32 %v614, 0.70710677
  %v809 = vmul.f32 %v616, 0.70710677
  %v810 = vmul.f32 %v298, 0.70710677
  %v811 = vmul.f32 %v300, 0.70710677
  %v812 = vmul.f32 %v459, 0.70710677
  %v813 = vmul.f32 %v461, 0.70710677
  %v814 = vmul.f32 %v620, 0.70710677
  %v815 = vmul.f32 %v622, 0.70710677
  %v816 = vmul.f32 %v304, 0.70710677
  %v817 = vmul.f32 %v306, 0.70710677
  %v818 = vmul.f32 %v465, 0.70710677
  %v819 = vmul.f32 %v467, 0.70710677
  %v820 = vmul.f32 %v626, 0.70710677
  %v821 = vmul.f32 %v628, 0.70710677
  %v822 = vmul.f32 %v310, 0.70710677
  %v823 = vmul.f32 %v312, 0.70710677
  %v824 = vmul.f32 %v471, 0.70710677
  %v825 = vmul.f32 %v473, 0.70710677
  %v826 = vmul.f32 %v632, 0.70710677
  %v827 = vmul.f32 %v634, 0.70710677
  %v828 = vmul.f32 %v316, 0.70710677
  %v829 = vmul.f32 %v318, 0.70710677
  %v830 = vmul.f32 %v477, 0.70710677
  %v831 = vmul.f32 %v479, 0.70710677
  %v832 = vmul.f32 %v638, 0.70710677
  %v833 = vmul.f32 %v640, 0.70710677
  %v834 = vmul.f32 %v322, 0.70710677
  %v835 = vmul.f32 %v324, 0.70710677
  %v836 = vmul.f32 %v483, 0.70710677
  %v837 = vmul.f32 %v485, 0.70710677
  %v838 = vmul.f32 %v644, 0.70710677
  %v839 = vmul.f32 %v646, 0.70710677
  %v840 = vmul.f32 %v328, 0.70710677
  %v841 = vmul.f32 %v330, 0.70710677
  %v842 = vmul.f32 %v489, 0.70710677
  %v843 = vmul.f32 %v491, 0.70710677
  %v844 = vmul.f32 %v650, 0.70710677
  %v845 = vmul.f32 %v652, 0.70710677
  %v846 = vmul.f32 %v334, 0.70710677
  %v847 = vmul.f32 %v336, 0.70710677
  %v848 = vmul.f32 %v495, 0.70710677
  %v849 = vmul.f32 %v497, 0.70710677
  %v850 = vmul.f32 %v656, 0.70710677
  %v851 = vmul.f32 %v658, 0.70710677
  %v852 = vmul.f32 %v340, 0.70710677
  %v853 = vmul.f32 %v342, 0.70710677
  %v854 = vmul.f32 %v501, 0.70710677
  %v855 = vmul.f32 %v503, 0.70710677
  %v856 = vmul.f32 %v662, 0.70710677
  %v857 = vmul.f32 %v664, 0.70710677
  %v858 = vmul.f32 %v346, 0.70710677
  %v859 = vmul.f32 %v348, 0.70710677
  %v860 = vmul.f32 %v507, 0.70710677
  %v861 = vmul.f32 %v509, 0.70710677
  %v862 = vmul.f32 %v668, 0.70710677
  %v863 = vmul.f32 %v670, 0.70710677
  %v864 = vmul.f32 %v352, 0.70710677
  %v865 = vmul.f32 %v354, 0.70710677
  %v866 = vmul.f32 %v513, 0.70710677
  %v867 = vmul.f32 %v515, 0.70710677
  %v868 = vmul.f32 %v674, 0.70710677
  %v869 = vmul.f32 %v676, 0.70710677
  %v870 = verf.f32.pop %v774
  %v871 = verf.f32.pop %v775
  %v872 = verf.f32.pop %v776
  %v873 = verf.f32.pop %v777
  %v874 = verf.f32.pop %v778
  %v875 = verf.f32.pop %v779
  %v876 = verf.f32.pop %v780
  %v877 = verf.f32.pop %v781
  %v878 = verf.f32.pop %v782
  %v879 = verf.f32.pop %v783
  %v880 = verf.f32.pop %v784
  %v881 = verf.f32.pop %v785
  %v882 = verf.f32.pop %v786
  %v883 = verf.f32.pop %v787
  %v884 = verf.f32.pop %v788
  %v885 = verf.f32.pop %v789
  %v886 = verf.f32.pop %v790
  %v887 = verf.f32.pop %v791
  %v888 = verf.f32.pop %v792
  %v889 = verf.f32.pop %v793
  %v890 = verf.f32.pop %v794
  %v891 = verf.f32.pop %v795
  %v892 = verf.f32.pop %v796
  %v893 = verf.f32.pop %v797
  %v894 = verf.f32.pop %v798
  %v895 = verf.f32.pop %v799
  %v896 = verf.f32.pop %v800
  %v897 = verf.f32.pop %v801
  %v898 = verf.f32.pop %v802
  %v899 = verf.f32.pop %v803
  %v900 = verf.f32.pop %v804
  %v901 = verf.f32.pop %v805
  %v902 = verf.f32.pop %v806
  %v903 = verf.f32.pop %v807
  %v904 = verf.f32.pop %v808
  %v905 = verf.f32.pop %v809
  %v906 = verf.f32.pop %v810
  %v907 = verf.f32.pop %v811
  %v908 = verf.f32.pop %v812
  %v909 = verf.f32.pop %v813
  %v910 = verf.f32.pop %v814
  %v911 = verf.f32.pop %v815
  %v912 = verf.f32.pop %v816
  %v913 = verf.f32.pop %v817
  %v914 = verf.f32.pop %v818
  %v915 = verf.f32.pop %v819
  %v916 = verf.f32.pop %v820
  %v917 = verf.f32.pop %v821
  %v918 = verf.f32.pop %v822
  %v919 = verf.f32.pop %v823
  %v920 = verf.f32.pop %v824
  %v921 = verf.f32.pop %v825
  %v922 = verf.f32.pop %v826
  %v923 = verf.f32.pop %v827
  %v924 = verf.f32.pop %v828
  %v925 = verf.f32.pop %v829
  %v926 = verf.f32.pop %v830
  %v927 = verf.f32.pop %v831
  %v928 = verf.f32.pop %v832
  %v929 = verf.f32.pop %v833
  %v930 = verf.f32.pop %v834
  %v931 = verf.f32.pop %v835
  %v932 = verf.f32.pop %v836
  %v933 = verf.f32.pop %v837
  %v934 = verf.f32.pop %v838
  %v935 = verf.f32.pop %v839
  %v936 = verf.f32.pop %v840
  %v937 = verf.f32.pop %v841
  %v938 = verf.f32.pop %v842
  %v939 = verf.f32.pop %v843
  %v940 = verf.f32.pop %v844
  %v941 = verf.f32.pop %v845
  %v942 = verf.f32.pop %v846
  %v943 = verf.f32.pop %v847
  %v944 = verf.f32.pop %v848
  %v945 = verf.f32.pop %v849
  %v946 = verf.f32.pop %v850
  %v947 = verf.f32.pop %v851
  %v948 = verf.f32.pop %v852
  %v949 = verf.f32.pop %v853
  %v950 = verf.f32.pop %v854
  %v951 = verf.f32.pop %v855
  %v952 = verf.f32.pop %v856
  %v953 = verf.f32.pop %v857
  %v954 = verf.f32.pop %v858
  %v955 = verf.f32.pop %v859
  %v956 = verf.f32.pop %v860
  %v957 = verf.f32.pop %v861
  %v958 = verf.f32.pop %v862
  %v959 = verf.f32.pop %v863
  %v960 = verf.f32.pop %v864
  %v961 = verf.f32.pop %v865
  %v962 = verf.f32.pop %v866
  %v963 = verf.f32.pop %v867
  %v964 = verf.f32.pop %v868
  %v965 = verf.f32.pop %v869
  %v966 = vadd.f32 %v870, 1.0
  %v967 = vadd.f32 %v871, 1.0
  %v968 = vadd.f32 %v872, 1.0
  %v969 = vadd.f32 %v873, 1.0
  %v970 = vadd.f32 %v874, 1.0
  %v971 = vadd.f32 %v875, 1.0
  %v972 = vadd.f32 %v876, 1.0
  %v973 = vadd.f32 %v877, 1.0
  %v974 = vadd.f32 %v878, 1.0
  %v975 = vadd.f32 %v879, 1.0
  %v976 = vadd.f32 %v880, 1.0
  %v977 = vadd.f32 %v881, 1.0
  %v978 = vadd.f32 %v882, 1.0
  %v979 = vadd.f32 %v883, 1.0
  %v980 = vadd.f32 %v884, 1.0
  %v981 = vadd.f32 %v885, 1.0
  %v982 = vadd.f32 %v886, 1.0
  %v983 = vadd.f32 %v887, 1.0
  %v984 = vadd.f32 %v888, 1.0
  %v985 = vadd.f32 %v889, 1.0
  %v986 = vadd.f32 %v890, 1.0
  %v987 = vadd.f32 %v891, 1.0
  %v988 = vadd.f32 %v892, 1.0
  %v989 = vadd.f32 %v893, 1.0
  %v990 = vadd.f32 %v894, 1.0
  %v991 = vadd.f32 %v895, 1.0
  %v992 = vadd.f32 %v896, 1.0
  %v993 = vadd.f32 %v897, 1.0
  %v994 = vadd.f32 %v898, 1.0
  %v995 = vadd.f32 %v899, 1.0
  %v996 = vadd.f32 %v900, 1.0
  %v997 = vadd.f32 %v901, 1.0
  %v998 = vadd.f32 %v902, 1.0
  %v999 = vadd.f32 %v903, 1.0
  %v1000 = vadd.f32 %v904, 1.0
  %v1001 = vadd.f32 %v905, 1.0
  %v1002 = vadd.f32 %v906, 1.0
  %v1003 = vadd.f32 %v907, 1.0
  %v1004 = vadd.f32 %v908, 1.0
  %v1005 = vadd.f32 %v909, 1.0
  %v1006 = vadd.f32 %v910, 1.0
  %v1007 = vadd.f32 %v911, 1.0
  %v1008 = vadd.f32 %v912, 1.0
  %v1009 = vadd.f32 %v913, 1.0
  %v1010 = vadd.f32 %v914, 1.0
  %v1011 = vadd.f32 %v915, 1.0
  %v1012 = vadd.f32 %v916, 1.0
  %v1013 = vadd.f32 %v917, 1.0
  %v1014 = vadd.f32 %v918, 1.0
  %v1015 = vadd.f32 %v919, 1.0
  %v1016 = vadd.f32 %v920, 1.0
  %v1017 = vadd.f32 %v921, 1.0
  %v1018 = vadd.f32 %v922, 1.0
  %v1019 = vadd.f32 %v923, 1.0
  %v1020 = vadd.f32 %v924, 1.0
  %v1021 = vadd.f32 %v925, 1.0
  %v1022 = vadd.f32 %v926, 1.0
  %v1023 = vadd.f32 %v927, 1.0
  %v1024 = vadd.f32 %v928, 1.0
  %v1025 = vadd.f32 %v929, 1.0
  %v1026 = vadd.f32 %v930, 1.0
  %v1027 = vadd.f32 %v931, 1.0
  %v1028 = vadd.f32 %v932, 1.0
  %v1029 = vadd.f32 %v933, 1.0
  %v1030 = vadd.f32 %v934, 1.0
  %v1031 = vadd.f32 %v935, 1.0
  %v1032 = vadd.f32 %v936, 1.0
  %v1033 = vadd.f32 %v937, 1.0
  %v1034 = vadd.f32 %v938, 1.0
  %v1035 = vadd.f32 %v939, 1.0
  %v1036 = vadd.f32 %v940, 1.0
  %v1037 = vadd.f32 %v941, 1.0
  %v1038 = vadd.f32 %v942, 1.0
  %v1039 = vadd.f32 %v943, 1.0
  %v1040 = vadd.f32 %v944, 1.0
  %v1041 = vadd.f32 %v945, 1.0
  %v1042 = vadd.f32 %v946, 1.0
  %v1043 = vadd.f32 %v947, 1.0
  %v1044 = vadd.f32 %v948, 1.0
  %v1045 = vadd.f32 %v949, 1.0
  %v1046 = vadd.f32 %v950, 1.0
  %v1047 = vadd.f32 %v951, 1.0
  %v1048 = vadd.f32 %v952, 1.0
  %v1049 = vadd.f32 %v953, 1.0
  %v1050 = vadd.f32 %v954, 1.0
  %v1051 = vadd.f32 %v955, 1.0
  %v1052 = vadd.f32 %v956, 1.0
  %v1053 = vadd.f32 %v957, 1.0
  %v1054 = vadd.f32 %v958, 1.0
  %v1055 = vadd.f32 %v959, 1.0
  %v1056 = vadd.f32 %v960, 1.0
  %v1057 = vadd.f32 %v961, 1.0
  %v1058 = vadd.f32 %v962, 1.0
  %v1059 = vadd.f32 %v963, 1.0
  %v1060 = vadd.f32 %v964, 1.0
  %v1061 = vadd.f32 %v965, 1.0
  %v1062 = vmul.f32 %v678, %v966
  %v1063 = vmul.f32 %v679, %v967
  %v1064 = vmul.f32 %v680, %v968
  %v1065 = vmul.f32 %v681, %v969
  %v1066 = vmul.f32 %v682, %v970
  %v1067 = vmul.f32 %v683, %v971
  %v1068 = vmul.f32 %v684, %v972
  %v1069 = vmul.f32 %v685, %v973
  %v1070 = vmul.f32 %v686, %v974
  %v1071 = vmul.f32 %v687, %v975
  %v1072 = vmul.f32 %v688, %v976
  %v1073 = vmul.f32 %v689, %v977
  %v1074 = vmul.f32 %v690, %v978
  %v1075 = vmul.f32 %v691, %v979
  %v1076 = vmul.f32 %v692, %v980
  %v1077 = vmul.f32 %v693, %v981
  %v1078 = vmul.f32 %v694, %v982
  %v1079 = vmul.f32 %v695, %v983
  %v1080 = vmul.f32 %v696, %v984
  %v1081 = vmul.f32 %v697, %v985
  %v1082 = vmul.f32 %v698, %v986
  %v1083 = vmul.f32 %v699, %v987
  %v1084 = vmul.f32 %v700, %v988
  %v1085 = vmul.f32 %v701, %v989
  %v1086 = vmul.f32 %v702, %v990
  %v1087 = vmul.f32 %v703, %v991
  %v1088 = vmul.f32 %v704, %v992
  %v1089 = vmul.f32 %v705, %v993
  %v1090 = vmul.f32 %v706, %v994
  %v1091 = vmul.f32 %v707, %v995
  %v1092 = vmul.f32 %v708, %v996
  %v1093 = vmul.f32 %v709, %v997
  %v1094 = vmul.f32 %v710, %v998
  %v1095 = vmul.f32 %v711, %v999
  %v1096 = vmul.f32 %v712, %v1000
  %v1097 = vmul.f32 %v713, %v1001
  %v1098 = vmul.f32 %v714, %v1002
  %v1099 = vmul.f32 %v715, %v1003
  %v1100 = vmul.f32 %v716, %v1004
  %v1101 = vmul.f32 %v717, %v1005
  %v1102 = vmul.f32 %v718, %v1006
  %v1103 = vmul.f32 %v719, %v1007
  %v1104 = vmul.f32 %v720, %v1008
  %v1105 = vmul.f32 %v721, %v1009
  %v1106 = vmul.f32 %v722, %v1010
  %v1107 = vmul.f32 %v723, %v1011
  %v1108 = vmul.f32 %v724, %v1012
  %v1109 = vmul.f32 %v725, %v1013
  %v1110 = vmul.f32 %v726, %v1014
  %v1111 = vmul.f32 %v727, %v1015
  %v1112 = vmul.f32 %v728, %v1016
  %v1113 = vmul.f32 %v729, %v1017
  %v1114 = vmul.f32 %v730, %v1018
  %v1115 = vmul.f32 %v731, %v1019
  %v1116 = vmul.f32 %v732, %v1020
  %v1117 = vmul.f32 %v733, %v1021
  %v1118 = vmul.f32 %v734, %v1022
  %v1119 = vmul.f32 %v735, %v1023
  %v1120 = vmul.f32 %v736, %v1024
  %v1121 = vmul.f32 %v737, %v1025
  %v1122 = vmul.f32 %v738, %v1026
  %v1123 = vmul.f32 %v739, %v1027
  %v1124 = vmul.f32 %v740, %v1028
  %v1125 = vmul.f32 %v741, %v1029
  %v1126 = vmul.f32 %v742, %v1030
  %v1127 = vmul.f32 %v743, %v1031
  %v1128 = vmul.f32 %v744, %v1032
  %v1129 = vmul.f32 %v745, %v1033
  %v1130 = vmul.f32 %v746, %v1034
  %v1131 = vmul.f32 %v747, %v1035
  %v1132 = vmul.f32 %v748, %v1036
  %v1133 = vmul.f32 %v749, %v1037
  %v1134 = vmul.f32 %v750, %v1038
  %v1135 = vmul.f32 %v751, %v1039
  %v1136 = vmul.f32 %v752, %v1040
  %v1137 = vmul.f32 %v753, %v1041
  %v1138 = vmul.f32 %v754, %v1042
  %v1139 = vmul.f32 %v755, %v1043
  %v1140 = vmul.f32 %v756, %v1044
  %v1141 = vmul.f32 %v757, %v1045
  %v1142 = vmul.f32 %v758, %v1046
  %v1143 = vmul.f32 %v759, %v1047
  %v1144 = vmul.f32 %v760, %v1048
  %v1145 = vmul.f32 %v761, %v1049
  %v1146 = vmul.f32 %v762, %v1050
  %v1147 = vmul.f32 %v763, %v1051
  %v1148 = vmul.f32 %v764, %v1052
  %v1149 = vmul.f32 %v765, %v1053
  %v1150 = vmul.f32 %v766, %v1054
  %v1151 = vmul.f32 %v767, %v1055
  %v1152 = vmul.f32 %v768, %v1056
  %v1153 = vmul.f32 %v769, %v1057
  %v1154 = vmul.f32 %v770, %v1058
  %v1155 = vmul.f32 %v771, %v1059
  %v1156 = vmul.f32 %v772, %v1060
  %v1157 = vmul.f32 %v773, %v1061
  %v1158 = vld [vmem:[%s3] sm:$0x1]
  %v1159 = vld [vmem:[#allocation2] sm:$0x1]
  %1161 = vset.pattern.permute.xlu0 0
  %1162 = vperm.xlu0 %1161, %v1159
  %v1163 = vpop.permute.xlu0 %1162
  %v1165 = vlaneseq
  %v1166 = vshrl.u32 %v1165, 7
  %v1167 = vsub.s32 0, %v1166
  %v1168 = vrot.slane %v1163, %v1167
  %1169 = vmatprep.subr.mxu0 %v1153
  %1170 = vmatpush1.msra.mxu0 %v1152
  %1171 = vmatprep.subr.mxu0 %v1147
  %1172 = vmatpush1.msra.mxu0 %v1146
  %1173 = vmatprep.subr.mxu0 %v1141
  %1174 = vmatpush1.msra.mxu0 %v1140
  %1175 = vmatprep.subr.mxu0 %v1135
  %1176 = vmatpush1.msra.mxu0 %v1134
  %1177 = vmatprep.subr.mxu0 %v1129
  %1178 = vmatpush1.msra.mxu0 %v1128
  %1179 = vmatprep.subr.mxu0 %v1123
  %1180 = vmatpush1.msra.mxu0 %v1122
  %1181 = vmatprep.subr.mxu0 %v1117
  %1182 = vmatpush1.msra.mxu0 %v1116
  %1183 = vmatprep.subr.mxu0 %v1111
  %1184 = vmatpush1.msra.mxu0 %v1110
  %1185 = vmatprep.subr.mxu0 %v1105
  %1186 = vmatpush1.msra.mxu0 %v1104
  %1187 = vmatprep.subr.mxu0 %v1099
  %1188 = vmatpush1.msra.mxu0 %v1098
  %1189 = vmatprep.subr.mxu0 %v1093
  %1190 = vmatpush1.msra.mxu0 %v1092
  %1191 = vmatprep.subr.mxu0 %v1087
  %1192 = vmatpush1.msra.mxu0 %v1086
  %1193 = vmatprep.subr.mxu0 %v1081
  %1194 = vmatpush1.msra.mxu0 %v1080
  %1195 = vmatprep.subr.mxu0 %v1075
  %1196 = vmatpush1.msra.mxu0 %v1074
  %1197 = vmatprep.subr.mxu0 %v1069
  %1198 = vmatpush1.msra.mxu0 %v1068
  %1199 = vmatprep.subr.mxu0 %v1063
  %1200 = vmatpush1.msra.mxu0 %v1062
  %1201 = vmatprep.subr.mxu0 0.0
  %1202 = vmatpush2.msra.mxu0 0.0
  %1203 = vmatprep.subr.mxu0 0.0
  %1204 = vmatpush2.msra.mxu0 0.0
  %1205 = vmatprep.subr.mxu0 0.0
  %1206 = vmatpush2.msra.mxu0 0.0
  %1207 = vmatprep.subr.mxu0 0.0
  %1208 = vmatpush2.msra.mxu0 0.0
  %1209 = vmatprep.subr.mxu0 0.0
  %1210 = vmatpush2.msra.mxu0 0.0
  %1211 = vmatprep.subr.mxu0 0.0
  %1212 = vmatpush2.msra.mxu0 0.0
  %1213 = vmatprep.subr.mxu0 0.0
  %1214 = vmatpush2.msra.mxu0 0.0
  %1215 = vmatprep.subr.mxu0 0.0
  %1216 = vmatpush2.msra.mxu0 0.0
  %1217 = vmatprep.subr.mxu0 0.0
  %1218 = vmatpush2.msra.mxu0 0.0
  %1219 = vmatprep.subr.mxu0 0.0
  %1220 = vmatpush2.msra.mxu0 0.0
  %1221 = vmatprep.subr.mxu0 0.0
  %1222 = vmatpush2.msra.mxu0 0.0
  %1223 = vmatprep.subr.mxu0 0.0
  %1224 = vmatpush2.msra.mxu0 0.0
  %1225 = vmatprep.subr.mxu0 0.0
  %1226 = vmatpush2.msra.mxu0 0.0
  %1227 = vmatprep.subr.mxu0 0.0
  %1228 = vmatpush2.msra.mxu0 0.0
  %1229 = vmatprep.subr.mxu0 0.0
  %1230 = vmatpush2.msra.mxu0 0.0
  %1231 = vmatprep.subr.mxu0 0.0
  %1232 = vmatpush2.msra.mxu0 0.0
  %1233 = vmatprep.mubr.f32.mxu0 0.0
  %1234 = vmatmul.mubr.f32.gmra.mxu0 %v1158
  %v1235 = vpop.f32.mrf.mxu0
  %v1236 = vadd.f32 %v1168, %v1235
  %v1237 = vpop.f32.mrf.mxu0
  %v1238 = vadd.f32 %v1168, %v1237
  %1239 = vdwg.mxu0
  %1240 = vmatprep.subr.mxu0 %v1155
  %1241 = vmatpush1.msra.mxu0 %v1154
  %1242 = vmatprep.subr.mxu0 %v1149
  %1243 = vmatpush1.msra.mxu0 %v1148
  %1244 = vmatprep.subr.mxu0 %v1143
  %1245 = vmatpush1.msra.mxu0 %v1142
  %1246 = vmatprep.subr.mxu0 %v1137
  %1247 = vmatpush1.msra.mxu0 %v1136
  %1248 = vmatprep.subr.mxu0 %v1131
  %1249 = vmatpush1.msra.mxu0 %v1130
  %1250 = vmatprep.subr.mxu0 %v1125
  %1251 = vmatpush1.msra.mxu0 %v1124
  %1252 = vmatprep.subr.mxu0 %v1119
  %1253 = vmatpush1.msra.mxu0 %v1118
  %1254 = vmatprep.subr.mxu0 %v1113
  %1255 = vmatpush1.msra.mxu0 %v1112
  %1256 = vmatprep.subr.mxu0 %v1107
  %1257 = vmatpush1.msra.mxu0 %v1106
  %1258 = vmatprep.subr.mxu0 %v1101
  %1259 = vmatpush1.msra.mxu0 %v1100
  %1260 = vmatprep.subr.mxu0 %v1095
  %1261 = vmatpush1.msra.mxu0 %v1094
  %1262 = vmatprep.subr.mxu0 %v1089
  %1263 = vmatpush1.msra.mxu0 %v1088
  %1264 = vmatprep.subr.mxu0 %v1083
  %1265 = vmatpush1.msra.mxu0 %v1082
  %1266 = vmatprep.subr.mxu0 %v1077
  %1267 = vmatpush1.msra.mxu0 %v1076
  %1268 = vmatprep.subr.mxu0 %v1071
  %1269 = vmatpush1.msra.mxu0 %v1070
  %1270 = vmatprep.subr.mxu0 %v1065
  %1271 = vmatpush1.msra.mxu0 %v1064
  %1272 = vmatprep.subr.mxu0 0.0
  %1273 = vmatpush2.msra.mxu0 0.0
  %1274 = vmatprep.subr.mxu0 0.0
  %1275 = vmatpush2.msra.mxu0 0.0
  %1276 = vmatprep.subr.mxu0 0.0
  %1277 = vmatpush2.msra.mxu0 0.0
  %1278 = vmatprep.subr.mxu0 0.0
  %1279 = vmatpush2.msra.mxu0 0.0
  %1280 = vmatprep.subr.mxu0 0.0
  %1281 = vmatpush2.msra.mxu0 0.0
  %1282 = vmatprep.subr.mxu0 0.0
  %1283 = vmatpush2.msra.mxu0 0.0
  %1284 = vmatprep.subr.mxu0 0.0
  %1285 = vmatpush2.msra.mxu0 0.0
  %1286 = vmatprep.subr.mxu0 0.0
  %1287 = vmatpush2.msra.mxu0 0.0
  %1288 = vmatprep.subr.mxu0 0.0
  %1289 = vmatpush2.msra.mxu0 0.0
  %1290 = vmatprep.subr.mxu0 0.0
  %1291 = vmatpush2.msra.mxu0 0.0
  %1292 = vmatprep.subr.mxu0 0.0
  %1293 = vmatpush2.msra.mxu0 0.0
  %1294 = vmatprep.subr.mxu0 0.0
  %1295 = vmatpush2.msra.mxu0 0.0
  %1296 = vmatprep.subr.mxu0 0.0
  %1297 = vmatpush2.msra.mxu0 0.0
  %1298 = vmatprep.subr.mxu0 0.0
  %1299 = vmatpush2.msra.mxu0 0.0
  %1300 = vmatprep.subr.mxu0 0.0
  %1301 = vmatpush2.msra.mxu0 0.0
  %1302 = vmatprep.subr.mxu0 0.0
  %1303 = vmatpush2.msra.mxu0 0.0
  %1304 = vmatprep.mubr.f32.mxu0 0.0
  %1305 = vmatmul.mubr.f32.gmra.mxu0 %v1158
  %v1306 = vpop.f32.mrf.mxu0
  %v1307 = vadd.f32 %v1168, %v1306
  %v1308 = vpop.f32.mrf.mxu0
  %v1309 = vadd.f32 %v1168, %v1308
  %1310 = vdwg.mxu0
  %1311 = vmatprep.subr.mxu0 %v1157
  %1312 = vmatpush1.msra.mxu0 %v1156
  %1313 = vmatprep.subr.mxu0 %v1151
  %1314 = vmatpush1.msra.mxu0 %v1150
  %1315 = vmatprep.subr.mxu0 %v1145
  %1316 = vmatpush1.msra.mxu0 %v1144
  %1317 = vmatprep.subr.mxu0 %v1139
  %1318 = vmatpush1.msra.mxu0 %v1138
  %1319 = vmatprep.subr.mxu0 %v1133
  %1320 = vmatpush1.msra.mxu0 %v1132
  %1321 = vmatprep.subr.mxu0 %v1127
  %1322 = vmatpush1.msra.mxu0 %v1126
  %1323 = vmatprep.subr.mxu0 %v1121
  %1324 = vmatpush1.msra.mxu0 %v1120
  %1325 = vmatprep.subr.mxu0 %v1115
  %1326 = vmatpush1.msra.mxu0 %v1114
  %1327 = vmatprep.subr.mxu0 %v1109
  %1328 = vmatpush1.msra.mxu0 %v1108
  %1329 = vmatprep.subr.mxu0 %v1103
  %1330 = vmatpush1.msra.mxu0 %v1102
  %1331 = vmatprep.subr.mxu0 %v1097
  %1332 = vmatpush1.msra.mxu0 %v1096
  %1333 = vmatprep.subr.mxu0 %v1091
  %1334 = vmatpush1.msra.mxu0 %v1090
  %1335 = vmatprep.subr.mxu0 %v1085
  %1336 = vmatpush1.msra.mxu0 %v1084
  %1337 = vmatprep.subr.mxu0 %v1079
  %1338 = vmatpush1.msra.mxu0 %v1078
  %1339 = vmatprep.subr.mxu0 %v1073
  %1340 = vmatpush1.msra.mxu0 %v1072
  %1341 = vmatprep.subr.mxu0 %v1067
  %1342 = vmatpush1.msra.mxu0 %v1066
  %1343 = vmatprep.subr.mxu0 0.0
  %1344 = vmatpush2.msra.mxu0 0.0
  %1345 = vmatprep.subr.mxu0 0.0
  %1346 = vmatpush2.msra.mxu0 0.0
  %1347 = vmatprep.subr.mxu0 0.0
  %1348 = vmatpush2.msra.mxu0 0.0
  %1349 = vmatprep.subr.mxu0 0.0
  %1350 = vmatpush2.msra.mxu0 0.0
  %1351 = vmatprep.subr.mxu0 0.0
  %1352 = vmatpush2.msra.mxu0 0.0
  %1353 = vmatprep.subr.mxu0 0.0
  %1354 = vmatpush2.msra.mxu0 0.0
  %1355 = vmatprep.subr.mxu0 0.0
  %1356 = vmatpush2.msra.mxu0 0.0
  %1357 = vmatprep.subr.mxu0 0.0
  %1358 = vmatpush2.msra.mxu0 0.0
  %1359 = vmatprep.subr.mxu0 0.0
  %1360 = vmatpush2.msra.mxu0 0.0
  %1361 = vmatprep.subr.mxu0 0.0
  %1362 = vmatpush2.msra.mxu0 0.0
  %1363 = vmatprep.subr.mxu0 0.0
  %1364 = vmatpush2.msra.mxu0 0.0
  %1365 = vmatprep.subr.mxu0 0.0
  %1366 = vmatpush2.msra.mxu0 0.0
  %1367 = vmatprep.subr.mxu0 0.0
  %1368 = vmatpush2.msra.mxu0 0.0
  %1369 = vmatprep.subr.mxu0 0.0
  %1370 = vmatpush2.msra.mxu0 0.0
  %1371 = vmatprep.subr.mxu0 0.0
  %1372 = vmatpush2.msra.mxu0 0.0
  %1373 = vmatprep.subr.mxu0 0.0
  %1374 = vmatpush2.msra.mxu0 0.0
  %1375 = vmatprep.mubr.f32.mxu0 0.0
  %1376 = vmatmul.mubr.f32.gmra.mxu0 %v1158
  %v1377 = vpop.f32.mrf.mxu0
  %v1378 = vadd.f32 %v1168, %v1377
  %v1379 = vpop.f32.mrf.mxu0
  %v1380 = vadd.f32 %v1168, %v1379
  %1381 = vdwg.mxu0
  %v1388 = vcombine.low %v1236, %v1238
  %v1389 = vcombine.low %v1307, %v1309
  %v1390 = vcombine.low %v1378, %v1380
  %v1392 = vunpack.c.l.s4 1966171168
  %v1393 = vunpack.c.0.s8 %v1392
  %v1394 = vlaneseq
  %v1395 = vshrl.u32 %v1394, 7
  %v1396 = vsub.s32 %v1393, %v1395
  %v1397 = vrot.slane %v1388, %v1396
  %v1399 = vunpack.c.l.s4 1966171168
  %v1400 = vunpack.c.0.s8 %v1399
  %v1401 = vlaneseq
  %v1402 = vshrl.u32 %v1401, 7
  %v1403 = vsub.s32 %v1400, %v1402
  %v1404 = vrot.slane %v1389, %v1403
  %v1406 = vunpack.c.l.s4 1966171168
  %v1407 = vunpack.c.0.s8 %v1406
  %v1408 = vlaneseq
  %v1409 = vshrl.u32 %v1408, 7
  %v1410 = vsub.s32 %v1407, %v1409
  %v1411 = vrot.slane %v1390, %v1410
  %v1412 = vcombine.low %v1397, %v1404
  %v1414 = vunpack.c.l.s4 1966171168
  %v1415 = vunpack.c.0.s8 %v1414
  %v1416 = vlaneseq
  %v1417 = vshrl.u32 %v1416, 7
  %v1418 = vsub.s32 %v1415, %v1417
  %v1419 = vrot.slane %v1412, %v1418
  %v1421 = vunpack.c.l.s4 1966171168
  %v1422 = vunpack.c.0.s8 %v1421
  %v1423 = vlaneseq
  %v1424 = vshrl.u32 %v1423, 7
  %v1425 = vsub.s32 %v1422, %v1424
  %v1426 = vrot.slane %v1411, %v1425
  %v1427 = vcombine.low %v1419, %v1426
  %v1429 = vlaneseq
  %vm1430 = vcmp.ge.s32.totalorder %v1429, 0
  %vm1431 = vcmp.lt.s32.totalorder %v1429, 768
  %vm1432 = vmand %vm1430, %vm1431
  %1433 = vst.msk [vmem:[%s5] sm:$0x3f] %vm1432, %v1427
  // Predicated region
  $region22: #{fno3d_forward.15} parent=0 // pred_check
    _
  $region23: #{fno3d_forward.15} parent=0 // pred_check_branch
    %1435 = sbr.rel (0) target = $region25
  $region24: #{fno3d_forward.15} parent=0 // pred_region
    _
  $region25: #{fno3d_forward.15} parent=0 // pred_fallthru
    _
  // Predicated region
  $region26: #{fno3d_forward.15} parent=0 // pred_check
    _
  $region27: #{fno3d_forward.15} parent=0 // pred_check_branch
    %1437 = sbr.rel (0) target = $region29
  $region28: #{fno3d_forward.15} parent=0 // pred_region
    _
  $region29: #{fno3d_forward.15} parent=0 // pred_fallthru
    _

</llo_original>
